<compile_context>
chip_gen: v7x
topology: tpu7x:2x2x1
jax: 0.10.0
libtpu: 0.0.40
codegen_flags: <defaults>
</compile_context>

<pallas_src>
import math
import jax
import jax.numpy as jnp
from jax.experimental import pallas as pl
from jax.experimental.pallas import tpu as pltpu


LANE = 128


def _round_up(x, m):
    return (x + m - 1) // m * m


def _vmem_limit_bytes():
    """Generation-aware VMEM budget (leave headroom for Mosaic internals)."""
    cap = 128 * 1024 * 1024
    try:
        info = pltpu.get_tpu_info()
        for attr in ("vmem_capacity_bytes", "vmem_bytes", "vmem_size_bytes"):
            v = getattr(info, attr, None)
            if v:
                cap = int(v)
                break
    except Exception:
        pass
    # v7x (64 MiB/TC) -> 48 MiB, v5e/v6e (128 MiB) -> 96 MiB.
    return max(32 * 1024 * 1024, min(cap * 3 // 4, 100 * 1024 * 1024))


# ---------------------------------------------------------------------------
# Kernel 1: tiled (X @ W) + bias   (bf16 operands, f32 accumulate)
# ---------------------------------------------------------------------------
def pallas_matmul_bias(x_bf16, w_bf16, b_f32, out_dtype):
    """x: (M, K) bf16, w: (K, N) bf16 (K, N mult of 128), b: (1, N) f32."""
    M, K = x_bf16.shape
    _, N = w_bf16.shape
    budget = _vmem_limit_bytes()
    tn = 256 if (N % 256 == 0) else 128
    out_bytes = jnp.dtype(out_dtype).itemsize

    tm = 128
    for cand in (1024, 512, 256, 128):
        need = 2 * (cand * K * 2 + K * tn * 2 + cand * tn * out_bytes) + (4 << 20)
        if need <= budget:
            tm = cand
            break
    tm = min(tm, _round_up(M, 8))
    Mp = _round_up(M, tm)
    if Mp != M:
        x_bf16 = jnp.pad(x_bf16, ((0, Mp - M), (0, 0)))

    def kernel(x_ref, w_ref, b_ref, o_ref):
        acc = jnp.dot(x_ref[...], w_ref[...], preferred_element_type=jnp.float32)
        o_ref[...] = (acc + b_ref[...]).astype(o_ref.dtype)

    out = pl.pallas_call(
        kernel,
        out_shape=jax.ShapeDtypeStruct((Mp, N), out_dtype),
        grid=(Mp // tm, N // tn),
        in_specs=[
            pl.BlockSpec((tm, K), lambda i, j: (i, 0)),
            pl.BlockSpec((K, tn), lambda i, j: (0, j)),
            pl.BlockSpec((1, tn), lambda i, j: (0, j)),
        ],
        out_specs=pl.BlockSpec((tm, tn), lambda i, j: (i, j)),
        compiler_params=pltpu.CompilerParams(
            dimension_semantics=("parallel", "parallel"),
            vmem_limit_bytes=budget),
        cost_estimate=pl.CostEstimate(
            flops=2 * Mp * K * N,
            transcendentals=0,
            bytes_accessed=(2 * Mp * K + 2 * K * N * (Mp // tm)
                            + out_bytes * Mp * N + 4 * N)),
    )(x_bf16, w_bf16, b_f32)
    return out[:M]


# ---------------------------------------------------------------------------
# Kernel 2: fused residual bottleneck block (1x1 -> ReLU -> 3x3 -> ReLU -> 1x1 + x)
# Activation layout: "padded-flat" (B, Hp2p*Wp2p, C_pad) bf16, Wp2p = W+2 rounded
# up to a multiple of 8, Hp2p = H+2 rounded up to a multiple of R.  Border rows
# are exact zeros (the 3x3 zero padding) and are re-zeroed via jnp.where.
# Grid = (batch, row-chunks); each chunk carries a one-row halo via clamped
# BlockSpec index maps.
# ---------------------------------------------------------------------------
def res_block_fused(xf, mask, weights, H, W, Wp2p, Hp2p, R, C_pad, Cm_pad):
    B, NpT, _ = xf.shape
    assert NpT == Hp2p * Wp2p and Hp2p % R == 0
    T = Hp2p // R
    RW = R * Wp2p                  # flat rows per chunk
    RA = (R + 2) * Wp2p            # flat rows incl. one-row halo above/below
    G = 8                          # small sublane-aligned guard for the +-1 taps
    SROWS = G + RA + G
    S0 = G + Wp2p                  # scratch row where the chunk's own rows start
    offs = [(ky - 1) * Wp2p + (kx - 1) for ky in range(3) for kx in range(3)]
    last_blk = Hp2p - 1
    w1, b1, w2, b2, w3, b3 = weights
    budget = _vmem_limit_bytes()

    def kernel(xc_ref, xu_ref, xd_ref, mc_ref, mu_ref, md_ref,
               w1_ref, b1_ref, w2_ref, b2_ref, w3_ref, b3_ref,
               o_ref, h1g_ref):
        # keep the (tiny) guards finite; masked selects make them harmless anyway
        h1g_ref[0:G, :] = jnp.zeros((G, Cm_pad), jnp.bfloat16)
        h1g_ref[G + RA:SROWS, :] = jnp.zeros((G, Cm_pad), jnp.bfloat16)

        x_cur = xc_ref[...].reshape(RW, C_pad)                       # bf16
        x_all = jnp.concatenate(
            [xu_ref[...].reshape(Wp2p, C_pad), x_cur,
             xd_ref[...].reshape(Wp2p, C_pad)], axis=0)              # (RA, C_pad)
        m_cur = mc_ref[...] > 0.0                                    # (RW, 1)
        m_all = jnp.concatenate(
            [mu_ref[...], mc_ref[...], md_ref[...]], axis=0) > 0.0   # (RA, 1)

        # conv1x1 + bias + ReLU; border rows forced to exact zero (3x3 zero pad)
        h1 = jnp.dot(x_all, w1_ref[...], preferred_element_type=jnp.float32)
        h1 = jnp.where(m_all, jnp.maximum(h1 + b1_ref[...], 0.0), 0.0)
        h1g_ref[G:G + RA, :] = h1.astype(jnp.bfloat16)

        # conv3x3: one 9*Cm_pad-deep stacked matmul over 9 shifted bf16 views
        patch = jnp.concatenate(
            [h1g_ref[S0 + d:S0 + d + RW, :] for d in offs], axis=-1)
        acc = jnp.dot(patch, w2_ref[...], preferred_element_type=jnp.float32)
        h2 = jnp.where(m_cur, jnp.maximum(acc + b2_ref[...], 0.0),
                       0.0).astype(jnp.bfloat16)

        # conv1x1 + bias + residual (f32 accumulate); re-mask borders to zero
        y = jnp.dot(h2, w3_ref[...], preferred_element_type=jnp.float32)
        y = y + b3_ref[...] + x_cur.astype(jnp.float32)
        o_ref[...] = jnp.where(m_cur, y, 0.0).astype(o_ref.dtype).reshape(
            1, RW, C_pad)

    flops = 2 * B * Hp2p * Wp2p * Cm_pad * (2 * C_pad + 9 * Cm_pad)
    bytes_est = (2 * (2 * B * NpT * C_pad)                       # bf16 in + out
                 + 2 * B * T * (2 * Wp2p * C_pad)                # halos
                 + 2 * (2 * C_pad * Cm_pad + 9 * Cm_pad * Cm_pad))
    return pl.pallas_call(
        kernel,
        out_shape=jax.ShapeDtypeStruct((B, NpT, C_pad), jnp.bfloat16),
        grid=(B, T),
        in_specs=[
            pl.BlockSpec((1, RW, C_pad), lambda b, t: (b, t, 0)),
            pl.BlockSpec((1, Wp2p, C_pad),
                         lambda b, t: (b, jnp.maximum(t * R - 1, 0), 0)),
            pl.BlockSpec((1, Wp2p, C_pad),
                         lambda b, t: (b, jnp.minimum(t * R + R, last_blk), 0)),
            pl.BlockSpec((RW, 1), lambda b, t: (t, 0)),
            pl.BlockSpec((Wp2p, 1),
                         lambda b, t: (jnp.maximum(t * R - 1, 0), 0)),
            pl.BlockSpec((Wp2p, 1),
                         lambda b, t: (jnp.minimum(t * R + R, last_blk), 0)),
            pl.BlockSpec((C_pad, Cm_pad), lambda b, t: (0, 0)),
            pl.BlockSpec((1, Cm_pad), lambda b, t: (0, 0)),
            pl.BlockSpec((9 * Cm_pad, Cm_pad), lambda b, t: (0, 0)),
            pl.BlockSpec((1, Cm_pad), lambda b, t: (0, 0)),
            pl.BlockSpec((Cm_pad, C_pad), lambda b, t: (0, 0)),
            pl.BlockSpec((1, C_pad), lambda b, t: (0, 0)),
        ],
        out_specs=pl.BlockSpec((1, RW, C_pad), lambda b, t: (b, t, 0)),
        scratch_shapes=[pltpu.VMEM((SROWS, Cm_pad), jnp.bfloat16)],
        compiler_params=pltpu.CompilerParams(
            dimension_semantics=("parallel", "parallel"),
            vmem_limit_bytes=budget),
        cost_estimate=pl.CostEstimate(flops=flops, transcendentals=0,
                                      bytes_accessed=bytes_est),
    )(xf, xf, xf, mask, mask, mask, w1, b1, w2, b2, w3, b3)


# ---------------------------------------------------------------------------
# Layout / glue helpers
# ---------------------------------------------------------------------------
def to_padded_flat(x_nhwc, Hp2p, Wp2p):
    B, H, W, C = x_nhwc.shape
    xp = jnp.pad(x_nhwc, ((0, 0), (1, Hp2p - H - 1), (1, Wp2p - W - 1), (0, 0)))
    return xp.reshape(B, Hp2p * Wp2p, C)


def from_padded_flat(xf, H, W, C, Hp2p, Wp2p):
    B = xf.shape[0]
    return xf.reshape(B, Hp2p, Wp2p, -1)[:, 1:H + 1, 1:W + 1, :C]


def make_mask(H, W, Hp2p, Wp2p):
    m = jnp.pad(jnp.ones((H, W), jnp.float32),
                ((1, Hp2p - H - 1), (1, Wp2p - W - 1)))
    return m.reshape(Hp2p * Wp2p, 1)


def im2col(x, ksize, stride, pad, k_pad):
    """(B,H,W,C) -> (B*Ho*Wo, K*K*C) tap-major / channel-minor (no transpose)."""
    B, H, W, C = x.shape
    Ho = (H + 2 * pad - ksize) // stride + 1
    Wo = (W + 2 * pad - ksize) // stride + 1
    xp = jnp.pad(x, ((0, 0), (pad, pad), (pad, pad), (0, 0)))
    cols = []
    for ky in range(ksize):
        for kx in range(ksize):
            cols.append(xp[:, ky:ky + stride * Ho:stride,
                           kx:kx + stride * Wo:stride, :])
    stacked = jnp.stack(cols, axis=3)                    # (B, Ho, Wo, K*K, C)
    mat = stacked.reshape(B * Ho * Wo, ksize * ksize * C)
    if k_pad > mat.shape[1]:
        mat = jnp.pad(mat, ((0, 0), (0, k_pad - mat.shape[1])))
    return mat, (B, Ho, Wo)


def conv2d_pallas(x_nhwc, w_oihw, bias, stride, pad, out_dtype):
    """PyTorch-semantics Conv2d via im2col + tiled Pallas matmul.
    Output channels are lane-padded to a multiple of 128 (extra channels = 0)."""
    B, H, W, Cx = x_nhwc.shape
    Co, Ci, K, _ = w_oihw.shape
    if Cx > Ci:
        w_oihw = jnp.pad(w_oihw, ((0, 0), (0, Cx - Ci), (0, 0), (0, 0)))
    Ktot = K * K * Cx
    K_pad = _round_up(Ktot, LANE)
    N_pad = _round_up(Co, LANE)
    # tap-major / channel-minor row order matches the (untransposed) im2col
    wmat = jnp.transpose(w_oihw, (2, 3, 1, 0)).reshape(Ktot, Co)
    wmat = jnp.pad(wmat, ((0, K_pad - Ktot), (0, N_pad - Co))).astype(jnp.bfloat16)
    if bias is None:
        bvec = jnp.zeros((1, N_pad), jnp.float32)
    else:
        bvec = jnp.pad(bias.astype(jnp.float32), (0, N_pad - Co)).reshape(1, N_pad)
    cols, (B, Ho, Wo) = im2col(x_nhwc.astype(jnp.bfloat16), K, stride, pad, K_pad)
    out = pallas_matmul_bias(cols, wmat, bvec, out_dtype)
    return out.reshape(B, Ho, Wo, N_pad)


def prep_res_block(prm, C, Cm, C_pad, Cm_pad):
    w1 = jnp.transpose(prm["w1"].reshape(Cm, C))                     # (C, Cm)
    w1 = jnp.pad(w1, ((0, C_pad - C), (0, Cm_pad - Cm))).astype(jnp.bfloat16)
    b1 = jnp.pad(prm["b1"], (0, Cm_pad - Cm)).reshape(1, Cm_pad).astype(jnp.float32)

    w2 = jnp.transpose(prm["w2"], (2, 3, 1, 0)).reshape(9, Cm, Cm)   # (tap, Cin, Cout)
    w2 = jnp.pad(w2, ((0, 0), (0, Cm_pad - Cm), (0, Cm_pad - Cm)))
    w2 = w2.reshape(9 * Cm_pad, Cm_pad).astype(jnp.bfloat16)
    b2 = jnp.pad(prm["b2"], (0, Cm_pad - Cm)).reshape(1, Cm_pad).astype(jnp.float32)

    w3 = jnp.transpose(prm["w3"].reshape(C, Cm))                     # (Cm, C)
    w3 = jnp.pad(w3, ((0, Cm_pad - Cm), (0, C_pad - C))).astype(jnp.bfloat16)
    b3 = jnp.pad(prm["b3"], (0, C_pad - C)).reshape(1, C_pad).astype(jnp.float32)
    return (w1, b1, w2, b2, w3, b3)


def run_res_stage(x_nhwc, block_params, C, Cm, C_pad, Cm_pad):
    B, H, W, _ = x_nhwc.shape
    Wp2p = _round_up(W + 2, 8)                  # sublane-aligned padded width
    R = max(8, -(-128 // Wp2p))                 # image rows per chunk
    Hp2p = _round_up(H + 2, R)
    mask = make_mask(H, W, Hp2p, Wp2p)
    xf = to_padded_flat(x_nhwc.astype(jnp.bfloat16), Hp2p, Wp2p)
    for prm in block_params:
        xf = res_block_fused(xf, mask, prep_res_block(prm, C, Cm, C_pad, Cm_pad),
                             H, W, Wp2p, Hp2p, R, C_pad, Cm_pad)
    return from_padded_flat(xf, H, W, C, Hp2p, Wp2p)


# ---------------------------------------------------------------------------
# Parameter initialization (deterministic, mimics the module's __init__)
# ---------------------------------------------------------------------------
def xavier_normal(key, shape, gain):
    Co, Ci, K, _ = shape
    fan_in = Ci * K * K
    fan_out = Co * K * K
    std = gain * math.sqrt(2.0 / (fan_in + fan_out))
    return std * jax.random.normal(key, shape, dtype=jnp.float32)


def default_conv_init(key, shape):
    Co, Ci, K, _ = shape
    fan_in = Ci * K * K
    std = math.sqrt(1.0 / fan_in)
    kw, kb = jax.random.split(key)
    w = std * jax.random.normal(kw, shape, dtype=jnp.float32)
    b = std * jax.random.normal(kb, (Co,), dtype=jnp.float32)
    return w, b


def init_res_block(key, in_ch):
    mid = in_ch // 2
    k1, k2, k3 = jax.random.split(key, 3)
    w1, b1 = default_conv_init(k1, (mid, in_ch, 1, 1))
    w2, b2 = default_conv_init(k2, (mid, mid, 3, 3))
    w3, b3 = default_conv_init(k3, (in_ch, mid, 1, 1))
    return dict(w1=w1, b1=b1, w2=w2, b2=b2, w3=w3, b3=b3)


def init_analysis_net(key, out_channel_N):
    keys = jax.random.split(key, 9)
    p = {}
    p["conv1_w"] = xavier_normal(
        keys[0], (out_channel_N, 3, 9, 9), math.sqrt(2 * (3 + out_channel_N) / 6))
    p["conv1_b"] = jnp.full((out_channel_N,), 0.01, dtype=jnp.float32)
    p["res1_1"] = init_res_block(keys[1], out_channel_N)
    p["res1_2"] = init_res_block(keys[2], out_channel_N)
    p["res1_3"] = init_res_block(keys[3], out_channel_N)
    p["conv2_w"] = xavier_normal(
        keys[4], (out_channel_N, out_channel_N, 5, 5), math.sqrt(2))
    p["conv2_b"] = jnp.full((out_channel_N,), 0.01, dtype=jnp.float32)
    p["res2_1"] = init_res_block(keys[5], out_channel_N)
    p["res2_2"] = init_res_block(keys[6], out_channel_N)
    p["res2_3"] = init_res_block(keys[7], out_channel_N)
    p["conv3_w"] = xavier_normal(
        keys[8], (out_channel_N, out_channel_N, 5, 5), math.sqrt(2))
    return p


# ---------------------------------------------------------------------------
# Forward pass (== Analysis_net_17.forward)
# ---------------------------------------------------------------------------
def analysis_net_17_forward(x_nchw, p, out_channel_N):
    C = out_channel_N
    Cm = C // 2
    C_pad = _round_up(C, LANE)
    Cm_pad = _round_up(Cm, LANE)

    x = jnp.transpose(x_nchw, (0, 2, 3, 1)).astype(jnp.float32)      # NCHW -> NHWC

    # conv1: 9x9 stride 4 pad 4; bf16 lane-padded activation from here on
    x = conv2d_pallas(x, p["conv1_w"], p["conv1_b"], 4, 4, jnp.bfloat16)
    x = run_res_stage(x, [p["res1_1"], p["res1_2"], p["res1_3"]],
                      C, Cm, C_pad, Cm_pad)

    # conv2: 5x5 stride 2 pad 2
    x = conv2d_pallas(x, p["conv2_w"], p["conv2_b"], 2, 2, jnp.bfloat16)
    x = run_res_stage(x, [p["res2_1"], p["res2_2"], p["res2_3"]],
                      C, Cm, C_pad, Cm_pad)

    # conv3: 5x5 stride 2 pad 2, bias=False, f32 final output
    x = conv2d_pallas(x, p["conv3_w"], None, 2, 2, jnp.float32)
    x = x[..., :C]                                                   # drop padded channels
    return jnp.transpose(x, (0, 3, 1, 2))                            # NHWC -> NCHW


# ---------------------------------------------------------------------------
# Pure-JAX reference (f32, lax.conv) for a loose numeric sanity check
# ---------------------------------------------------------------------------
def reference_forward(x_nchw, p):
    def conv(x, w, b, stride, pad):
        y = jax.lax.conv_general_dilated(
            x, w, window_strides=(stride, stride),
            padding=((pad, pad), (pad, pad)),
            dimension_numbers=("NCHW", "OIHW", "NCHW"))
        if b is not None:
            y = y + b.reshape(1, -1, 1, 1)
        return y

    def block(x, prm):
        h = jax.nn.relu(conv(x, prm["w1"], prm["b1"], 1, 0))
        h = jax.nn.relu(conv(h, prm["w2"], prm["b2"], 1, 1))
        return conv(h, prm["w3"], prm["b3"], 1, 0) + x

    x = conv(x_nchw, p["conv1_w"], p["conv1_b"], 4, 4)
    for n in ("res1_1", "res1_2", "res1_3"):
        x = block(x, p[n])
    x = conv(x, p["conv2_w"], p["conv2_b"], 2, 2)
    for n in ("res2_1", "res2_2", "res2_3"):
        x = block(x, p[n])
    return conv(x, p["conv3_w"], None, 2, 2)


if __name__ == "__main__":
    key = jax.random.PRNGKey(0)
    k_inp, k_par = jax.random.split(key)

    out_channel_N = 32          # small stand-in for 192 (must be even)
    B, H, W = 2, 16, 16
    x = jax.random.normal(k_inp, (B, 3, H, W), dtype=jnp.float32)   # NCHW

    params = init_analysis_net(k_par, out_channel_N)

    fwd = jax.jit(lambda xx, pp: analysis_net_17_forward(xx, pp, out_channel_N))
    y = jax.block_until_ready(fwd(x, params))

    # conv1 s4 -> 4x4, conv2 s2 -> 2x2, conv3 s2 -> 1x1
    assert y.shape == (B, out_channel_N, 1, 1), y.shape
    assert bool(jnp.all(jnp.isfinite(y)))

    # loose numeric check vs f32 XLA reference (bf16 activations/operands in kernels)
    y_ref = jax.block_until_ready(reference_forward(x, params))
    max_ref = float(jnp.max(jnp.abs(y_ref)))
    max_diff = float(jnp.max(jnp.abs(y - y_ref)))
    assert max_diff <= 0.1 * max_ref + 0.1, (max_diff, max_ref)

    print("KERNEL_OK")
</pallas_src>

<mosaic_0001>
module attributes {stable_mosaic.version = 11 : i64} {
  func.func @kernel(%arg0: i32, %arg1: i32, %arg2: memref<32x256xbf16, #tpu.memory_space<vmem>>, %arg3: memref<256x128xbf16, #tpu.memory_space<vmem>>, %arg4: memref<1x128xf32, #tpu.memory_space<vmem>>, %arg5: memref<32x128xbf16, #tpu.memory_space<vmem>>) attributes {dimension_semantics = [#tpu.dimension_semantics<parallel>, #tpu.dimension_semantics<parallel>], iteration_bounds = array<i64: 1, 1>, scalar_prefetch = 0 : i64, scratch_operands = 0 : i64, tpu.core_type = #tpu.core_type<tc>, window_params = [{transform_indices = @transform_0, window_bounds = array<i64: 32, 256>}, {transform_indices = @transform_1, window_bounds = array<i64: 256, 128>}, {transform_indices = @transform_2, window_bounds = array<i64: 1, 128>}, {transform_indices = @transform_3, window_bounds = array<i64: 32, 128>}]} {
    %c0 = arith.constant 0 : index
    %c0_0 = arith.constant 0 : index
    %0 = vector.load %arg2[%c0, %c0_0] : memref<32x256xbf16, #tpu.memory_space<vmem>>, vector<32x256xbf16>
    %c0_1 = arith.constant 0 : index
    %c0_2 = arith.constant 0 : index
    %1 = vector.load %arg3[%c0_1, %c0_2] : memref<256x128xbf16, #tpu.memory_space<vmem>>, vector<256x128xbf16>
    %cst = arith.constant dense<0.000000e+00> : vector<32x128xf32>
    %2 = tpu.matmul %0, %1, %cst {dimension_numbers = #tpu.dot_dimension_numbers<[1], [0], [0], [1], [0, 0, 1, 1], [], []>} : vector<32x256xbf16>, vector<256x128xbf16>, vector<32x128xf32> -> vector<32x128xf32>
    %c0_3 = arith.constant 0 : index
    %c0_4 = arith.constant 0 : index
    %3 = vector.load %arg4[%c0_3, %c0_4] : memref<1x128xf32, #tpu.memory_space<vmem>>, vector<1x128xf32>
    %4 = vector.broadcast %3 : vector<1x128xf32> to vector<32x128xf32>
    %5 = arith.addf %2, %4 : vector<32x128xf32>
    %6 = arith.truncf %5 : vector<32x128xf32> to vector<32x128xbf16>
    %c0_5 = arith.constant 0 : index
    %c0_6 = arith.constant 0 : index
    %7 = vector.load %arg5[%c0_5, %c0_6] : memref<32x128xbf16, #tpu.memory_space<vmem>>, vector<32x128xbf16>
    tpu.vector_store %arg5[%c0_5, %c0_6], %6 {strides = array<i32>} : memref<32x128xbf16, #tpu.memory_space<vmem>>, vector<32x128xbf16>,
    return
  }
  func.func @transform_0(%arg0: i32, %arg1: i32) -> (i32, i32) {
    %c0_i32 = arith.constant 0 : i32
    %c0_i32_0 = arith.constant 0 : i32
    return %arg0, %c0_i32 : i32, i32
  }
  func.func @transform_1(%arg0: i32, %arg1: i32) -> (i32, i32) {
    %c0_i32 = arith.constant 0 : i32
    %c0_i32_0 = arith.constant 0 : i32
    return %c0_i32, %arg1 : i32, i32
  }
  func.func @transform_2(%arg0: i32, %arg1: i32) -> (i32, i32) {
    %c0_i32 = arith.constant 0 : i32
    %c0_i32_0 = arith.constant 0 : i32
    return %c0_i32, %arg1 : i32, i32
  }
  func.func @transform_3(%arg0: i32, %arg1: i32) -> (i32, i32) {
    %c0_i32 = arith.constant 0 : i32
    return %arg0, %arg1 : i32, i32
  }
}

module attributes {stable_mosaic.version = 11 : i64} {
  func.func @kernel(%arg0: i32, %arg1: i32, %arg2: memref<1x128x128xbf16, #tpu.memory_space<vmem>>, %arg3: memref<1x8x128xbf16, #tpu.memory_space<vmem>>, %arg4: memref<1x8x128xbf16, #tpu.memory_space<vmem>>, %arg5: memref<128x1xf32, #tpu.memory_space<vmem>>, %arg6: memref<8x1xf32, #tpu.memory_space<vmem>>, %arg7: memref<8x1xf32, #tpu.memory_space<vmem>>, %arg8: memref<128x128xbf16, #tpu.memory_space<vmem>>, %arg9: memref<1x128xf32, #tpu.memory_space<vmem>>, %arg10: memref<1152x128xbf16, #tpu.memory_space<vmem>>, %arg11: memref<1x128xf32, #tpu.memory_space<vmem>>, %arg12: memref<128x128xbf16, #tpu.memory_space<vmem>>, %arg13: memref<1x128xf32, #tpu.memory_space<vmem>>, %arg14: memref<1x128x128xbf16, #tpu.memory_space<vmem>>, %arg15: memref<160x128xbf16, #tpu.memory_space<vmem>>) attributes {dimension_semantics = [#tpu.dimension_semantics<parallel>, #tpu.dimension_semantics<parallel>], iteration_bounds = array<i64: 2, 1>, scalar_prefetch = 0 : i64, scratch_operands = 1 : i64, tpu.core_type = #tpu.core_type<tc>, window_params = [{transform_indices = @transform_0, window_bounds = array<i64: 1, 128, 128>}, {transform_indices = @transform_1, window_bounds = array<i64: 1, 8, 128>}, {transform_indices = @transform_2, window_bounds = array<i64: 1, 8, 128>}, {transform_indices = @transform_3, window_bounds = array<i64: 128, 1>}, {transform_indices = @transform_4, window_bounds = array<i64: 8, 1>}, {transform_indices = @transform_5, window_bounds = array<i64: 8, 1>}, {pipeline_mode = #tpu.pipeline_mode<synchronous>, transform_indices = @transform_6, window_bounds = array<i64: 128, 128>}, {pipeline_mode = #tpu.pipeline_mode<synchronous>, transform_indices = @transform_7, window_bounds = array<i64: 1, 128>}, {pipeline_mode = #tpu.pipeline_mode<synchronous>, transform_indices = @transform_8, window_bounds = array<i64: 1152, 128>}, {pipeline_mode = #tpu.pipeline_mode<synchronous>, transform_indices = @transform_9, window_bounds = array<i64: 1, 128>}, {pipeline_mode = #tpu.pipeline_mode<synchronous>, transform_indices = @transform_10, window_bounds = array<i64: 128, 128>}, {pipeline_mode = #tpu.pipeline_mode<synchronous>, transform_indices = @transform_11, window_bounds = array<i64: 1, 128>}, {transform_indices = @transform_12, window_bounds = array<i64: 1, 128, 128>}]} {
    %cst = arith.constant 0.000000e+00 : bf16
    %0 = vector.broadcast %cst : bf16 to vector<8x128xbf16>
    %c0 = arith.constant 0 : index
    %c0_0 = arith.constant 0 : index
    %1 = vector.load %arg15[%c0, %c0_0] : memref<160x128xbf16, #tpu.memory_space<vmem>>, vector<8x128xbf16>
    tpu.vector_store %arg15[%c0, %c0_0], %0 {strides = array<i32>} : memref<160x128xbf16, #tpu.memory_space<vmem>>, vector<8x128xbf16>,
    %cst_1 = arith.constant 0.000000e+00 : bf16
    %2 = vector.broadcast %cst_1 : bf16 to vector<8x128xbf16>
    %c152 = arith.constant 152 : index
    %c0_2 = arith.constant 0 : index
    %3 = vector.load %arg15[%c152, %c0_2] : memref<160x128xbf16, #tpu.memory_space<vmem>>, vector<8x128xbf16>
    tpu.vector_store %arg15[%c152, %c0_2], %2 {strides = array<i32>} : memref<160x128xbf16, #tpu.memory_space<vmem>>, vector<8x128xbf16>,
    %c0_3 = arith.constant 0 : index
    %c0_4 = arith.constant 0 : index
    %c0_5 = arith.constant 0 : index
    %4 = vector.load %arg2[%c0_3, %c0_4, %c0_5] : memref<1x128x128xbf16, #tpu.memory_space<vmem>>, vector<1x128x128xbf16>
    %5 = vector.shape_cast %4 : vector<1x128x128xbf16> to vector<128x128xbf16>
    %c0_6 = arith.constant 0 : index
    %c0_7 = arith.constant 0 : index
    %c0_8 = arith.constant 0 : index
    %6 = vector.load %arg3[%c0_6, %c0_7, %c0_8] : memref<1x8x128xbf16, #tpu.memory_space<vmem>>, vector<1x8x128xbf16>
    %7 = vector.shape_cast %6 : vector<1x8x128xbf16> to vector<8x128xbf16>
    %c0_9 = arith.constant 0 : index
    %c0_10 = arith.constant 0 : index
    %c0_11 = arith.constant 0 : index
    %8 = vector.load %arg4[%c0_9, %c0_10, %c0_11] : memref<1x8x128xbf16, #tpu.memory_space<vmem>>, vector<1x8x128xbf16>
    %9 = vector.shape_cast %8 : vector<1x8x128xbf16> to vector<8x128xbf16>
    %10 = tpu.concatenate %7, %5, %9 in 0 : vector<8x128xbf16>, vector<128x128xbf16>, vector<8x128xbf16> -> vector<144x128xbf16>
    %c0_12 = arith.constant 0 : index
    %c0_13 = arith.constant 0 : index
    %11 = vector.load %arg5[%c0_12, %c0_13] : memref<128x1xf32, #tpu.memory_space<vmem>>, vector<128x1xf32>
    %cst_14 = arith.constant 0.000000e+00 : f32
    %12 = vector.broadcast %cst_14 : f32 to vector<128x1xf32>
    %13 = arith.cmpf ogt, %11, %12 : vector<128x1xf32>
    %c0_15 = arith.constant 0 : index
    %c0_16 = arith.constant 0 : index
    %14 = vector.load %arg6[%c0_15, %c0_16] : memref<8x1xf32, #tpu.memory_space<vmem>>, vector<8x1xf32>
    %c0_17 = arith.constant 0 : index
    %c0_18 = arith.constant 0 : index
    %15 = vector.load %arg5[%c0_17, %c0_18] : memref<128x1xf32, #tpu.memory_space<vmem>>, vector<128x1xf32>
    %c0_19 = arith.constant 0 : index
    %c0_20 = arith.constant 0 : index
    %16 = vector.load %arg7[%c0_19, %c0_20] : memref<8x1xf32, #tpu.memory_space<vmem>>, vector<8x1xf32>
    %17 = tpu.concatenate %14, %15, %16 in 0 : vector<8x1xf32>, vector<128x1xf32>, vector<8x1xf32> -> vector<144x1xf32>
    %cst_21 = arith.constant 0.000000e+00 : f32
    %18 = vector.broadcast %cst_21 : f32 to vector<144x1xf32>
    %19 = arith.cmpf ogt, %17, %18 : vector<144x1xf32>
    %c0_22 = arith.constant 0 : index
    %c0_23 = arith.constant 0 : index
    %20 = vector.load %arg8[%c0_22, %c0_23] : memref<128x128xbf16, #tpu.memory_space<vmem>>, vector<128x128xbf16>
    %cst_24 = arith.constant dense<0.000000e+00> : vector<144x128xf32>
    %21 = tpu.matmul %10, %20, %cst_24 {dimension_numbers = #tpu.dot_dimension_numbers<[1], [0], [0], [1], [0, 0, 1, 1], [], []>} : vector<144x128xbf16>, vector<128x128xbf16>, vector<144x128xf32> -> vector<144x128xf32>
    %c0_25 = arith.constant 0 : index
    %c0_26 = arith.constant 0 : index
    %22 = vector.load %arg9[%c0_25, %c0_26] : memref<1x128xf32, #tpu.memory_space<vmem>>, vector<1x128xf32>
    %23 = vector.broadcast %22 : vector<1x128xf32> to vector<144x128xf32>
    %24 = arith.addf %21, %23 : vector<144x128xf32>
    %cst_27 = arith.constant 0.000000e+00 : f32
    %25 = vector.broadcast %cst_27 : f32 to vector<144x128xf32>
    %26 = arith.maximumf %24, %25 : vector<144x128xf32>
    %cst_28 = arith.constant 0.000000e+00 : f32
    %27 = vector.shape_cast %19 : vector<144x1xi1> to vector<144x1xi1>
    %28 = vector.broadcast %27 : vector<144x1xi1> to vector<144x128xi1>
    %29 = vector.broadcast %cst_28 : f32 to vector<144x128xf32>
    %30 = arith.select %28, %26, %29 : vector<144x128xi1>, vector<144x128xf32>
    %31 = arith.truncf %30 : vector<144x128xf32> to vector<144x128xbf16>
    %c8 = arith.constant 8 : index
    %c0_29 = arith.constant 0 : index
    %32 = vector.load %arg15[%c8, %c0_29] : memref<160x128xbf16, #tpu.memory_space<vmem>>, vector<144x128xbf16>
    tpu.vector_store %arg15[%c8, %c0_29], %31 {strides = array<i32>} : memref<160x128xbf16, #tpu.memory_space<vmem>>, vector<144x128xbf16>,
    %c7 = arith.constant 7 : index
    %c0_30 = arith.constant 0 : index
    %33 = vector.load %arg15[%c7, %c0_30] : memref<160x128xbf16, #tpu.memory_space<vmem>>, vector<128x128xbf16>
    %c8_31 = arith.constant 8 : index
    %c0_32 = arith.constant 0 : index
    %34 = vector.load %arg15[%c8_31, %c0_32] : memref<160x128xbf16, #tpu.memory_space<vmem>>, vector<128x128xbf16>
    %c9 = arith.constant 9 : index
    %c0_33 = arith.constant 0 : index
    %35 = vector.load %arg15[%c9, %c0_33] : memref<160x128xbf16, #tpu.memory_space<vmem>>, vector<128x128xbf16>
    %c15 = arith.constant 15 : index
    %c0_34 = arith.constant 0 : index
    %36 = vector.load %arg15[%c15, %c0_34] : memref<160x128xbf16, #tpu.memory_space<vmem>>, vector<128x128xbf16>
    %c16 = arith.constant 16 : index
    %c0_35 = arith.constant 0 : index
    %37 = vector.load %arg15[%c16, %c0_35] : memref<160x128xbf16, #tpu.memory_space<vmem>>, vector<128x128xbf16>
    %c17 = arith.constant 17 : index
    %c0_36 = arith.constant 0 : index
    %38 = vector.load %arg15[%c17, %c0_36] : memref<160x128xbf16, #tpu.memory_space<vmem>>, vector<128x128xbf16>
    %c23 = arith.constant 23 : index
    %c0_37 = arith.constant 0 : index
    %39 = vector.load %arg15[%c23, %c0_37] : memref<160x128xbf16, #tpu.memory_space<vmem>>, vector<128x128xbf16>
    %c24 = arith.constant 24 : index
    %c0_38 = arith.constant 0 : index
    %40 = vector.load %arg15[%c24, %c0_38] : memref<160x128xbf16, #tpu.memory_space<vmem>>, vector<128x128xbf16>
    %c25 = arith.constant 25 : index
    %c0_39 = arith.constant 0 : index
    %41 = vector.load %arg15[%c25, %c0_39] : memref<160x128xbf16, #tpu.memory_space<vmem>>, vector<128x128xbf16>
    %42 = tpu.concatenate %33, %34, %35, %36, %37, %38, %39, %40, %41 in 1 : vector<128x128xbf16>, vector<128x128xbf16>, vector<128x128xbf16>, vector<128x128xbf16>, vector<128x128xbf16>, vector<128x128xbf16>, vector<128x128xbf16>, vector<128x128xbf16>, vector<128x128xbf16> -> vector<128x1152xbf16>
    %c0_40 = arith.constant 0 : index
    %c0_41 = arith.constant 0 : index
    %43 = vector.load %arg10[%c0_40, %c0_41] : memref<1152x128xbf16, #tpu.memory_space<vmem>>, vector<1152x128xbf16>
    %cst_42 = arith.constant dense<0.000000e+00> : vector<128x128xf32>
    %44 = tpu.matmul %42, %43, %cst_42 {dimension_numbers = #tpu.dot_dimension_numbers<[1], [0], [0], [1], [0, 0, 1, 1], [], []>} : vector<128x1152xbf16>, vector<1152x128xbf16>, vector<128x128xf32> -> vector<128x128xf32>
    %c0_43 = arith.constant 0 : index
    %c0_44 = arith.constant 0 : index
    %45 = vector.load %arg11[%c0_43, %c0_44] : memref<1x128xf32, #tpu.memory_space<vmem>>, vector<1x128xf32>
    %46 = vector.broadcast %45 : vector<1x128xf32> to vector<128x128xf32>
    %47 = arith.addf %44, %46 : vector<128x128xf32>
    %cst_45 = arith.constant 0.000000e+00 : f32
    %48 = vector.broadcast %cst_45 : f32 to vector<128x128xf32>
    %49 = arith.maximumf %47, %48 : vector<128x128xf32>
    %cst_46 = arith.constant 0.000000e+00 : f32
    %50 = vector.shape_cast %13 : vector<128x1xi1> to vector<128x1xi1>
    %51 = vector.broadcast %50 : vector<128x1xi1> to vector<128x128xi1>
    %52 = vector.broadcast %cst_46 : f32 to vector<128x128xf32>
    %53 = arith.select %51, %49, %52 : vector<128x128xi1>, vector<128x128xf32>
    %54 = arith.truncf %53 : vector<128x128xf32> to vector<128x128xbf16>
    %c0_47 = arith.constant 0 : index
    %c0_48 = arith.constant 0 : index
    %55 = vector.load %arg12[%c0_47, %c0_48] : memref<128x128xbf16, #tpu.memory_space<vmem>>, vector<128x128xbf16>
    %cst_49 = arith.constant dense<0.000000e+00> : vector<128x128xf32>
    %56 = tpu.matmul %54, %55, %cst_49 {dimension_numbers = #tpu.dot_dimension_numbers<[1], [0], [0], [1], [0, 0, 1, 1], [], []>} : vector<128x128xbf16>, vector<128x128xbf16>, vector<128x128xf32> -> vector<128x128xf32>
    %c0_50 = arith.constant 0 : index
    %c0_51 = arith.constant 0 : index
    %57 = vector.load %arg13[%c0_50, %c0_51] : memref<1x128xf32, #tpu.memory_space<vmem>>, vector<1x128xf32>
    %58 = vector.broadcast %57 : vector<1x128xf32> to vector<128x128xf32>
    %59 = arith.addf %56, %58 : vector<128x128xf32>
    %60 = arith.extf %5 : vector<128x128xbf16> to vector<128x128xf32>
    %61 = arith.addf %59, %60 : vector<128x128xf32>
    %cst_52 = arith.constant 0.000000e+00 : f32
    %62 = vector.shape_cast %13 : vector<128x1xi1> to vector<128x1xi1>
    %63 = vector.broadcast %62 : vector<128x1xi1> to vector<128x128xi1>
    %64 = vector.broadcast %cst_52 : f32 to vector<128x128xf32>
    %65 = arith.select %63, %61, %64 : vector<128x128xi1>, vector<128x128xf32>
    %66 = arith.truncf %65 : vector<128x128xf32> to vector<128x128xbf16>
    %67 = vector.shape_cast %66 : vector<128x128xbf16> to vector<1x128x128xbf16>
    %c0_53 = arith.constant 0 : index
    %c0_54 = arith.constant 0 : index
    %c0_55 = arith.constant 0 : index
    %68 = vector.load %arg14[%c0_53, %c0_54, %c0_55] : memref<1x128x128xbf16, #tpu.memory_space<vmem>>, vector<1x128x128xbf16>
    tpu.vector_store %arg14[%c0_53, %c0_54, %c0_55], %67 {strides = array<i32>} : memref<1x128x128xbf16, #tpu.memory_space<vmem>>, vector<1x128x128xbf16>,
    return
  }
  func.func @transform_0(%arg0: i32, %arg1: i32) -> (i32, i32, i32) {
    %c0_i32 = arith.constant 0 : i32
    %c0_i32_0 = arith.constant 0 : i32
    return %arg0, %arg1, %c0_i32 : i32, i32, i32
  }
  func.func @transform_1(%arg0: i32, %arg1: i32) -> (i32, i32, i32) {
    %c16_i32 = arith.constant 16 : i32
    %0 = arith.muli %arg1, %c16_i32 : i32
    %c1_i32 = arith.constant 1 : i32
    %1 = arith.subi %0, %c1_i32 : i32
    %c0_i32 = arith.constant 0 : i32
    %2 = arith.maxsi %1, %c0_i32 : i32
    %c0_i32_0 = arith.constant 0 : i32
    %c0_i32_1 = arith.constant 0 : i32
    return %arg0, %2, %c0_i32_0 : i32, i32, i32
  }
  func.func @transform_2(%arg0: i32, %arg1: i32) -> (i32, i32, i32) {
    %c16_i32 = arith.constant 16 : i32
    %0 = arith.muli %arg1, %c16_i32 : i32
    %c16_i32_0 = arith.constant 16 : i32
    %1 = arith.addi %0, %c16_i32_0 : i32
    %c15_i32 = arith.constant 15 : i32
    %2 = arith.minsi %1, %c15_i32 : i32
    %c0_i32 = arith.constant 0 : i32
    %c0_i32_1 = arith.constant 0 : i32
    return %arg0, %2, %c0_i32 : i32, i32, i32
  }
  func.func @transform_3(%arg0: i32, %arg1: i32) -> (i32, i32) {
    %c0_i32 = arith.constant 0 : i32
    %c0_i32_0 = arith.constant 0 : i32
    return %arg1, %c0_i32 : i32, i32
  }
  func.func @transform_4(%arg0: i32, %arg1: i32) -> (i32, i32) {
    %c16_i32 = arith.constant 16 : i32
    %0 = arith.muli %arg1, %c16_i32 : i32
    %c1_i32 = arith.constant 1 : i32
    %1 = arith.subi %0, %c1_i32 : i32
    %c0_i32 = arith.constant 0 : i32
    %2 = arith.maxsi %1, %c0_i32 : i32
    %c0_i32_0 = arith.constant 0 : i32
    %c0_i32_1 = arith.constant 0 : i32
    return %2, %c0_i32_0 : i32, i32
  }
  func.func @transform_5(%arg0: i32, %arg1: i32) -> (i32, i32) {
    %c16_i32 = arith.constant 16 : i32
    %0 = arith.muli %arg1, %c16_i32 : i32
    %c16_i32_0 = arith.constant 16 : i32
    %1 = arith.addi %0, %c16_i32_0 : i32
    %c15_i32 = arith.constant 15 : i32
    %2 = arith.minsi %1, %c15_i32 : i32
    %c0_i32 = arith.constant 0 : i32
    %c0_i32_1 = arith.constant 0 : i32
    return %2, %c0_i32 : i32, i32
  }
  func.func @transform_6(%arg0: i32, %arg1: i32) -> (i32, i32) {
    %c0_i32 = arith.constant 0 : i32
    %c0_i32_0 = arith.constant 0 : i32
    %c0_i32_1 = arith.constant 0 : i32
    return %c0_i32, %c0_i32_0 : i32, i32
  }
  func.func @transform_7(%arg0: i32, %arg1: i32) -> (i32, i32) {
    %c0_i32 = arith.constant 0 : i32
    %c0_i32_0 = arith.constant 0 : i32
    %c0_i32_1 = arith.constant 0 : i32
    return %c0_i32, %c0_i32_0 : i32, i32
  }
  func.func @transform_8(%arg0: i32, %arg1: i32) -> (i32, i32) {
    %c0_i32 = arith.constant 0 : i32
    %c0_i32_0 = arith.constant 0 : i32
    %c0_i32_1 = arith.constant 0 : i32
    return %c0_i32, %c0_i32_0 : i32, i32
  }
  func.func @transform_9(%arg0: i32, %arg1: i32) -> (i32, i32) {
    %c0_i32 = arith.constant 0 : i32
    %c0_i32_0 = arith.constant 0 : i32
    %c0_i32_1 = arith.constant 0 : i32
    return %c0_i32, %c0_i32_0 : i32, i32
  }
  func.func @transform_10(%arg0: i32, %arg1: i32) -> (i32, i32) {
    %c0_i32 = arith.constant 0 : i32
    %c0_i32_0 = arith.constant 0 : i32
    %c0_i32_1 = arith.constant 0 : i32
    return %c0_i32, %c0_i32_0 : i32, i32
  }
  func.func @transform_11(%arg0: i32, %arg1: i32) -> (i32, i32) {
    %c0_i32 = arith.constant 0 : i32
    %c0_i32_0 = arith.constant 0 : i32
    %c0_i32_1 = arith.constant 0 : i32
    return %c0_i32, %c0_i32_0 : i32, i32
  }
  func.func @transform_12(%arg0: i32, %arg1: i32) -> (i32, i32, i32) {
    %c0_i32 = arith.constant 0 : i32
    %c0_i32_0 = arith.constant 0 : i32
    return %arg0, %arg1, %c0_i32 : i32, i32, i32
  }
}

module attributes {stable_mosaic.version = 11 : i64} {
  func.func @kernel(%arg0: i32, %arg1: i32, %arg2: memref<8x896xbf16, #tpu.memory_space<vmem>>, %arg3: memref<896x128xbf16, #tpu.memory_space<vmem>>, %arg4: memref<1x128xf32, #tpu.memory_space<vmem>>, %arg5: memref<8x128xbf16, #tpu.memory_space<vmem>>) attributes {dimension_semantics = [#tpu.dimension_semantics<parallel>, #tpu.dimension_semantics<parallel>], iteration_bounds = array<i64: 1, 1>, scalar_prefetch = 0 : i64, scratch_operands = 0 : i64, tpu.core_type = #tpu.core_type<tc>, window_params = [{transform_indices = @transform_0, window_bounds = array<i64: 8, 896>}, {transform_indices = @transform_1, window_bounds = array<i64: 896, 128>}, {transform_indices = @transform_2, window_bounds = array<i64: 1, 128>}, {transform_indices = @transform_3, window_bounds = array<i64: 8, 128>}]} {
    %c0 = arith.constant 0 : index
    %c0_0 = arith.constant 0 : index
    %0 = vector.load %arg2[%c0, %c0_0] : memref<8x896xbf16, #tpu.memory_space<vmem>>, vector<8x896xbf16>
    %c0_1 = arith.constant 0 : index
    %c0_2 = arith.constant 0 : index
    %1 = vector.load %arg3[%c0_1, %c0_2] : memref<896x128xbf16, #tpu.memory_space<vmem>>, vector<896x128xbf16>
    %cst = arith.constant dense<0.000000e+00> : vector<8x128xf32>
    %2 = tpu.matmul %0, %1, %cst {dimension_numbers = #tpu.dot_dimension_numbers<[1], [0], [0], [1], [0, 0, 1, 1], [], []>} : vector<8x896xbf16>, vector<896x128xbf16>, vector<8x128xf32> -> vector<8x128xf32>
    %c0_3 = arith.constant 0 : index
    %c0_4 = arith.constant 0 : index
    %3 = vector.load %arg4[%c0_3, %c0_4] : memref<1x128xf32, #tpu.memory_space<vmem>>, vector<1x128xf32>
    %4 = vector.broadcast %3 : vector<1x128xf32> to vector<8x128xf32>
    %5 = arith.addf %2, %4 : vector<8x128xf32>
    %6 = arith.truncf %5 : vector<8x128xf32> to vector<8x128xbf16>
    %c0_5 = arith.constant 0 : index
    %c0_6 = arith.constant 0 : index
    %7 = vector.load %arg5[%c0_5, %c0_6] : memref<8x128xbf16, #tpu.memory_space<vmem>>, vector<8x128xbf16>
    tpu.vector_store %arg5[%c0_5, %c0_6], %6 {strides = array<i32>} : memref<8x128xbf16, #tpu.memory_space<vmem>>, vector<8x128xbf16>,
    return
  }
  func.func @transform_0(%arg0: i32, %arg1: i32) -> (i32, i32) {
    %c0_i32 = arith.constant 0 : i32
    %c0_i32_0 = arith.constant 0 : i32
    return %arg0, %c0_i32 : i32, i32
  }
  func.func @transform_1(%arg0: i32, %arg1: i32) -> (i32, i32) {
    %c0_i32 = arith.constant 0 : i32
    %c0_i32_0 = arith.constant 0 : i32
    return %c0_i32, %arg1 : i32, i32
  }
  func.func @transform_2(%arg0: i32, %arg1: i32) -> (i32, i32) {
    %c0_i32 = arith.constant 0 : i32
    %c0_i32_0 = arith.constant 0 : i32
    return %c0_i32, %arg1 : i32, i32
  }
  func.func @transform_3(%arg0: i32, %arg1: i32) -> (i32, i32) {
    %c0_i32 = arith.constant 0 : i32
    return %arg0, %arg1 : i32, i32
  }
}

module attributes {stable_mosaic.version = 11 : i64} {
  func.func @kernel(%arg0: i32, %arg1: i32, %arg2: memref<8x896xbf16, #tpu.memory_space<vmem>>, %arg3: memref<896x128xbf16, #tpu.memory_space<vmem>>, %arg4: memref<1x128xf32, #tpu.memory_space<vmem>>, %arg5: memref<8x128xf32, #tpu.memory_space<vmem>>) attributes {dimension_semantics = [#tpu.dimension_semantics<parallel>, #tpu.dimension_semantics<parallel>], iteration_bounds = array<i64: 1, 1>, scalar_prefetch = 0 : i64, scratch_operands = 0 : i64, tpu.core_type = #tpu.core_type<tc>, window_params = [{transform_indices = @transform_0, window_bounds = array<i64: 8, 896>}, {transform_indices = @transform_1, window_bounds = array<i64: 896, 128>}, {transform_indices = @transform_2, window_bounds = array<i64: 1, 128>}, {transform_indices = @transform_3, window_bounds = array<i64: 8, 128>}]} {
    %c0 = arith.constant 0 : index
    %c0_0 = arith.constant 0 : index
    %0 = vector.load %arg2[%c0, %c0_0] : memref<8x896xbf16, #tpu.memory_space<vmem>>, vector<8x896xbf16>
    %c0_1 = arith.constant 0 : index
    %c0_2 = arith.constant 0 : index
    %1 = vector.load %arg3[%c0_1, %c0_2] : memref<896x128xbf16, #tpu.memory_space<vmem>>, vector<896x128xbf16>
    %cst = arith.constant dense<0.000000e+00> : vector<8x128xf32>
    %2 = tpu.matmul %0, %1, %cst {dimension_numbers = #tpu.dot_dimension_numbers<[1], [0], [0], [1], [0, 0, 1, 1], [], []>} : vector<8x896xbf16>, vector<896x128xbf16>, vector<8x128xf32> -> vector<8x128xf32>
    %c0_3 = arith.constant 0 : index
    %c0_4 = arith.constant 0 : index
    %3 = vector.load %arg4[%c0_3, %c0_4] : memref<1x128xf32, #tpu.memory_space<vmem>>, vector<1x128xf32>
    %4 = vector.broadcast %3 : vector<1x128xf32> to vector<8x128xf32>
    %5 = arith.addf %2, %4 : vector<8x128xf32>
    %c0_5 = arith.constant 0 : index
    %c0_6 = arith.constant 0 : index
    %6 = vector.load %arg5[%c0_5, %c0_6] : memref<8x128xf32, #tpu.memory_space<vmem>>, vector<8x128xf32>
    tpu.vector_store %arg5[%c0_5, %c0_6], %5 {strides = array<i32>} : memref<8x128xf32, #tpu.memory_space<vmem>>, vector<8x128xf32>,
    return
  }
  func.func @transform_0(%arg0: i32, %arg1: i32) -> (i32, i32) {
    %c0_i32 = arith.constant 0 : i32
    %c0_i32_0 = arith.constant 0 : i32
    return %arg0, %c0_i32 : i32, i32
  }
  func.func @transform_1(%arg0: i32, %arg1: i32) -> (i32, i32) {
    %c0_i32 = arith.constant 0 : i32
    %c0_i32_0 = arith.constant 0 : i32
    return %c0_i32, %arg1 : i32, i32
  }
  func.func @transform_2(%arg0: i32, %arg1: i32) -> (i32, i32) {
    %c0_i32 = arith.constant 0 : i32
    %c0_i32_0 = arith.constant 0 : i32
    return %c0_i32, %arg1 : i32, i32
  }
  func.func @transform_3(%arg0: i32, %arg1: i32) -> (i32, i32) {
    %c0_i32 = arith.constant 0 : i32
    return %arg0, %arg1 : i32, i32
  }
}

</mosaic_0001>

<llo_original>
// kernel: _lambda_.9
$region0: #{_lambda_.9}
  #allocation0 [shape = 'u32[]', space=smem, size = 0x4, offset = 0x4, fixed_abs, tag = 'smem constant byte address 0x4 - core index']
  #allocation1 [shape = 'u32[144,128]{1,0:T(1,128)}', space=vmem, size = 0x12000, scoped, tag = 'internal scratch']
  %s0 = inlined_call_operand.hbm [shape: bf16[32,256], index: 0, kind: input, shape index: {}]
  %s1 = inlined_call_operand.hbm [shape: bf16[256,128], index: 1, kind: input, shape index: {}]
  %s2 = inlined_call_operand.hbm [shape: f32[1,128], index: 2, kind: input, shape index: {}]
  %s3 = inlined_call_operand.hbm [shape: bf16[32,128], index: 3, kind: output, shape index: {}]
  %s4 = sld [smem:[#allocation0]]
  $region34: #{_lambda_.9} parent=0
    _
  %s6 = ssub.s32 1, %s4
  %s7 = scalar_select 0, %s6, %s4
  $region1: #{_lambda_.9} parent=0
    #allocation2 [shape = 'u8[16384]{0}', space=vmem, size = 0x4000, scoped, tag = 'input window, operand 0, single buffered']
    #allocation3 [shape = 's32[1]{0}', space=sflag, size = 0x4, scoped, tag = 'scoped memory for _lambda_.9']
    #allocation4 [shape = 's32[1]{0}', space=sflag, size = 0x4, scoped, tag = 'scoped memory for _lambda_.9']
    #allocation5 [shape = 'u8[65536]{0}', space=vmem, size = 0x10000, scoped, tag = 'input window, operand 1, single buffered']
    #allocation6 [shape = 's32[1]{0}', space=sflag, size = 0x4, scoped, tag = 'scoped memory for _lambda_.9']
    #allocation7 [shape = 'u8[512]{0}', space=vmem, size = 0x400, scoped, tag = 'input window, operand 2, single buffered']
    #allocation8 [shape = 'u8[8192]{0}', space=vmem, size = 0x2000, scoped, tag = 'output window, operand 0, single buffered']
    %8 = vsyncpa [#allocation3], 0
    %9 = vsyncpa [#allocation6], 0
    %10 = vsyncpa [#allocation4], 0
    // Predicated region
    $region2: #{_lambda_.9} parent=1 // pred_check
      _
    $region3: #{_lambda_.9} parent=1 // pred_check_branch
      %12 = sbr.rel (0) target = $region5
    $region4: #{_lambda_.9} parent=1 // pred_region
      %s14 = ssub.s32 512, 512
      %15 = vsyncadd [#allocation3], %s14
      %s16 = sshll.u32 [#allocation2], 4
      %s17 = int_to_ptr.vmem [resolvable:$true] %s16
      %22 = dma.hbm_to_vmem [thread:$0]  %s0, 512, %s17, [#allocation3], 128, 128, 8
    $region5: #{_lambda_.9} parent=1 // pred_fallthru
      _
    // Predicated region
    $region6: #{_lambda_.9} parent=1 // pred_check
      _
    $region7: #{_lambda_.9} parent=1 // pred_check_branch
      %24 = sbr.rel (0) target = $region9
    $region8: #{_lambda_.9} parent=1 // pred_region
      %s26 = ssub.s32 2048, 2048
      %27 = vsyncadd [#allocation6], %s26
      %s28 = sshll.u32 [#allocation5], 4
      %s29 = int_to_ptr.vmem [resolvable:$true] %s28
      %34 = dma.hbm_to_vmem [thread:$0]  %s1, 2048, %s29, [#allocation6], 64, 64, 4
    $region9: #{_lambda_.9} parent=1 // pred_fallthru
      _
    // Predicated region
    $region10: #{_lambda_.9} parent=1 // pred_check
      _
    $region11: #{_lambda_.9} parent=1 // pred_check_branch
      %36 = sbr.rel (0) target = $region13
    $region12: #{_lambda_.9} parent=1 // pred_region
      %s38 = ssub.s32 16, 16
      %39 = vsyncadd [#allocation6], %s38
      %s41 = sshll.u32 [#allocation7], 4
      %s42 = int_to_ptr.vmem [resolvable:$true] %s41
      %44 = dma.hbm_to_vmem [thread:$0]  %s2, 16, %s42, [#allocation6]
    $region13: #{_lambda_.9} parent=1 // pred_fallthru
      _
    // Predicated region
    $region14: #{_lambda_.9} parent=1 // pred_check
      _
    $region15: #{_lambda_.9} parent=1 // pred_check_branch
      %46 = sbr.rel (0) target = $region17
    $region16: #{_lambda_.9} parent=1 // pred_region
      %47 = dma.done [#allocation3], 512
    $region17: #{_lambda_.9} parent=1 // pred_fallthru
      _
    // Predicated region
    $region18: #{_lambda_.9} parent=1 // pred_check
      _
    $region19: #{_lambda_.9} parent=1 // pred_check_branch
      %49 = sbr.rel (0) target = $region21
    $region20: #{_lambda_.9} parent=1 // pred_region
      %50 = dma.done [#allocation6], 2048
    $region21: #{_lambda_.9} parent=1 // pred_fallthru
      _
    // Predicated region
    $region22: #{_lambda_.9} parent=1 // pred_check
      _
    $region23: #{_lambda_.9} parent=1 // pred_check_branch
      %52 = sbr.rel (0) target = $region25
    $region24: #{_lambda_.9} parent=1 // pred_region
      %53 = dma.done [#allocation6], 16
    $region25: #{_lambda_.9} parent=1 // pred_fallthru
      _
    %v55 = vld [vmem:[#allocation2] sm:$0xff]
    %v56 = vld [vmem:[#allocation2 + $0x8] sm:$0xff]
    %v57 = vld [vmem:[#allocation2 + $0x10] sm:$0xff]
    %v58 = vld [vmem:[#allocation2 + $0x18] sm:$0xff]
    %v59 = vld [vmem:[#allocation5] sm:$0xf]
    %v60 = vld [vmem:[#allocation5 + $0x4] sm:$0xf]
    %v61 = vld [vmem:[#allocation5 + $0x8] sm:$0xf]
    %v62 = vld [vmem:[#allocation5 + $0xc] sm:$0xf]
    %v63 = vld [vmem:[#allocation5 + $0x10] sm:$0xf]
    %v64 = vld [vmem:[#allocation5 + $0x14] sm:$0xf]
    %v65 = vld [vmem:[#allocation5 + $0x18] sm:$0xf]
    %v66 = vld [vmem:[#allocation5 + $0x1c] sm:$0xf]
    %v67 = vld [vmem:[#allocation5 + $0x20] sm:$0xf]
    %v68 = vld [vmem:[#allocation5 + $0x24] sm:$0xf]
    %v69 = vld [vmem:[#allocation5 + $0x28] sm:$0xf]
    %v70 = vld [vmem:[#allocation5 + $0x2c] sm:$0xf]
    %v71 = vld [vmem:[#allocation5 + $0x30] sm:$0xf]
    %v72 = vld [vmem:[#allocation5 + $0x34] sm:$0xf]
    %v73 = vld [vmem:[#allocation5 + $0x38] sm:$0xf]
    %v74 = vld [vmem:[#allocation5 + $0x3c] sm:$0xf]
    %v75 = vld [vmem:[#allocation5 + $0x40] sm:$0xf]
    %v76 = vld [vmem:[#allocation5 + $0x44] sm:$0xf]
    %v77 = vld [vmem:[#allocation5 + $0x48] sm:$0xf]
    %v78 = vld [vmem:[#allocation5 + $0x4c] sm:$0xf]
    %v79 = vld [vmem:[#allocation5 + $0x50] sm:$0xf]
    %v80 = vld [vmem:[#allocation5 + $0x54] sm:$0xf]
    %v81 = vld [vmem:[#allocation5 + $0x58] sm:$0xf]
    %v82 = vld [vmem:[#allocation5 + $0x5c] sm:$0xf]
    %v83 = vld [vmem:[#allocation5 + $0x60] sm:$0xf]
    %v84 = vld [vmem:[#allocation5 + $0x64] sm:$0xf]
    %v85 = vld [vmem:[#allocation5 + $0x68] sm:$0xf]
    %v86 = vld [vmem:[#allocation5 + $0x6c] sm:$0xf]
    %v87 = vld [vmem:[#allocation5 + $0x70] sm:$0xf]
    %v88 = vld [vmem:[#allocation5 + $0x74] sm:$0xf]
    %v89 = vld [vmem:[#allocation5 + $0x78] sm:$0xf]
    %v90 = vld [vmem:[#allocation5 + $0x7c] sm:$0xf]
    %v91 = vld [vmem:[#allocation7] sm:$0x1]
    %v93 = vlaneseq
    %v94 = vshrl.u32 %v93, 7
    %v95 = vsub.s32 0, %v94
    %v96 = vrot.slane %v91, %v95
    %v102 = vunpack.c.l.b16 %v55
    %v103 = vunpack.c.h.b16 %v55
    %v104 = vunpack.c.l.b16 %v56
    %v105 = vunpack.c.h.b16 %v56
    %v106 = vunpack.c.l.b16 %v57
    %v107 = vunpack.c.h.b16 %v57
    %v108 = vunpack.c.l.b16 %v58
    %v109 = vunpack.c.h.b16 %v58
    %v110 = vpack.c.b16 %v104, %v102
    %v111 = vpack.c.b16 %v105, %v103
    %v112 = vpack.c.b16 %v108, %v106
    %v113 = vpack.c.b16 %v109, %v107
    %v150 = vunpack.c.l.b16 %v59
    %v151 = vunpack.c.l.b16 %v60
    %v152 = vunpack.c.l.b16 %v61
    %v153 = vunpack.c.l.b16 %v62
    %v154 = vunpack.c.l.b16 %v63
    %v155 = vunpack.c.l.b16 %v64
    %v156 = vunpack.c.l.b16 %v65
    %v157 = vunpack.c.l.b16 %v66
    %v158 = vunpack.c.l.b16 %v67
    %v159 = vunpack.c.l.b16 %v68
    %v160 = vunpack.c.l.b16 %v69
    %v161 = vunpack.c.l.b16 %v70
    %v162 = vunpack.c.l.b16 %v71
    %v163 = vunpack.c.l.b16 %v72
    %v164 = vunpack.c.l.b16 %v73
    %v165 = vunpack.c.l.b16 %v74
    %v166 = vunpack.c.l.b16 %v75
    %v167 = vunpack.c.l.b16 %v76
    %v168 = vunpack.c.l.b16 %v77
    %v169 = vunpack.c.l.b16 %v78
    %v170 = vunpack.c.l.b16 %v79
    %v171 = vunpack.c.l.b16 %v80
    %v172 = vunpack.c.l.b16 %v81
    %v173 = vunpack.c.l.b16 %v82
    %v174 = vunpack.c.l.b16 %v83
    %v175 = vunpack.c.l.b16 %v84
    %v176 = vunpack.c.l.b16 %v85
    %v177 = vunpack.c.l.b16 %v86
    %v178 = vunpack.c.l.b16 %v87
    %v179 = vunpack.c.l.b16 %v88
    %v180 = vunpack.c.l.b16 %v89
    %v181 = vunpack.c.l.b16 %v90
    %v182 = vpack.c.b16 %v151, %v150
    %v183 = vpack.c.b16 %v153, %v152
    %v184 = vpack.c.b16 %v155, %v154
    %v185 = vpack.c.b16 %v157, %v156
    %v186 = vpack.c.b16 %v159, %v158
    %v187 = vpack.c.b16 %v161, %v160
    %v188 = vpack.c.b16 %v163, %v162
    %v189 = vpack.c.b16 %v165, %v164
    %v190 = vpack.c.b16 %v167, %v166
    %v191 = vpack.c.b16 %v169, %v168
    %v192 = vpack.c.b16 %v171, %v170
    %v193 = vpack.c.b16 %v173, %v172
    %v194 = vpack.c.b16 %v175, %v174
    %v195 = vpack.c.b16 %v177, %v176
    %v196 = vpack.c.b16 %v179, %v178
    %v197 = vpack.c.b16 %v181, %v180
    %214 = vmatprep.subr.bf16.mxu0 0
    %215 = vmatpush1.bf16.msra.mxu0 %v182
    %216 = vmatprep.subr.bf16.mxu0 0
    %217 = vmatpush1.bf16.msra.mxu0 %v183
    %218 = vmatprep.subr.bf16.mxu0 0
    %219 = vmatpush1.bf16.msra.mxu0 %v184
    %220 = vmatprep.subr.bf16.mxu0 0
    %221 = vmatpush1.bf16.msra.mxu0 %v185
    %222 = vmatprep.subr.bf16.mxu0 0
    %223 = vmatpush1.bf16.msra.mxu0 %v186
    %224 = vmatprep.subr.bf16.mxu0 0
    %225 = vmatpush1.bf16.msra.mxu0 %v187
    %226 = vmatprep.subr.bf16.mxu0 0
    %227 = vmatpush1.bf16.msra.mxu0 %v188
    %228 = vmatprep.subr.bf16.mxu0 0
    %229 = vmatpush1.bf16.msra.mxu0 %v189
    %230 = vmatprep.subr.bf16.mxu0 0
    %231 = vmatpush1.bf16.msra.mxu0 %v190
    %232 = vmatprep.subr.bf16.mxu0 0
    %233 = vmatpush1.bf16.msra.mxu0 %v191
    %234 = vmatprep.subr.bf16.mxu0 0
    %235 = vmatpush1.bf16.msra.mxu0 %v192
    %236 = vmatprep.subr.bf16.mxu0 0
    %237 = vmatpush1.bf16.msra.mxu0 %v193
    %238 = vmatprep.subr.bf16.mxu0 0
    %239 = vmatpush1.bf16.msra.mxu0 %v194
    %240 = vmatprep.subr.bf16.mxu0 0
    %241 = vmatpush1.bf16.msra.mxu0 %v195
    %242 = vmatprep.subr.bf16.mxu0 0
    %243 = vmatpush1.bf16.msra.mxu0 %v196
    %244 = vmatprep.subr.bf16.mxu0 0
    %245 = vmatpush1.bf16.msra.mxu0 %v197
    %246 = vmatprep.mubr.bf16.mxu0 %v111
    %247 = vmatmul.mubr.bf16.gmra.mrb[0].mxu0 %v110
    %v248 = vpop.f32.mrb[0].mxu0
    %v249 = vadd.f32 %v96, %v248
    %v250 = vpop.f32.mrb[0].mxu0
    %v251 = vpop.f32.mrb[0].mxu0
    %v252 = vadd.f32 %v96, %v251
    %v253 = vpop.f32.mrb[0].mxu0
    %254 = vmatprep.mubr.bf16.mxu0 %v113
    %255 = vmatmul.mubr.bf16.gmra.mrb[0].mxu0 %v112
    %v256 = vpop.f32.mrb[0].mxu0
    %v257 = vadd.f32 %v96, %v256
    %v258 = vpop.f32.mrb[0].mxu0
    %v259 = vpop.f32.mrb[0].mxu0
    %v260 = vadd.f32 %v96, %v259
    %v261 = vpop.f32.mrb[0].mxu0
    %262 = vdwg.mxu0
    %v263 = vpack.c.bf16 %v252, %v249
    %v264 = vpack.c.bf16 %v260, %v257
    %v267 = vunpack.c.l.b16 %v263
    %v268 = vunpack.c.h.b16 %v263
    %v269 = vunpack.c.l.b16 %v264
    %v270 = vunpack.c.h.b16 %v264
    %v271 = vpack.c.b16 %v267, %v267
    %v272 = vpack.c.b16 %v268, %v268
    %v273 = vpack.c.b16 %v269, %v269
    %v274 = vpack.c.b16 %v270, %v270
    %279 = vst [vmem:[#allocation8] sm:$0xf] %v271
    %280 = vst [vmem:[#allocation8 + $0x4] sm:$0xf] %v272
    %281 = vst [vmem:[#allocation8 + $0x8] sm:$0xf] %v273
    %282 = vst [vmem:[#allocation8 + $0xc] sm:$0xf] %v274
    // Predicated region
    $region26: #{_lambda_.9} parent=1 // pred_check
      _
    $region27: #{_lambda_.9} parent=1 // pred_check_branch
      %284 = sbr.rel (0) target = $region29
    $region28: #{_lambda_.9} parent=1 // pred_region
      %s286 = ssub.s32 256, 256
      %287 = vsyncadd [#allocation4], %s286
      %s288 = sshll.u32 [#allocation8], 4
      %s289 = int_to_ptr.vmem [resolvable:$true] %s288
      %294 = dma.vmem_to_hbm [thread:$0]  %s289, 256, %s3, [#allocation4], 64, 64, 4
    $region29: #{_lambda_.9} parent=1 // pred_fallthru
      _
    // Predicated region
    $region30: #{_lambda_.9} parent=1 // pred_check
      _
    $region31: #{_lambda_.9} parent=1 // pred_check_branch
      %296 = sbr.rel (0) target = $region33
    $region32: #{_lambda_.9} parent=1 // pred_region
      %297 = dma.done [#allocation4], 256
    $region33: #{_lambda_.9} parent=1 // pred_fallthru
      _
    %298 = vsyncpa [#allocation3], 1
    %299 = vsyncpa [#allocation6], 1
    %300 = vsyncpa [#allocation4], 1

// kernel: _lambda_.10
$region0: #{_lambda_.10}
  #allocation0 [shape = 'u32[]', space=smem, size = 0x4, offset = 0x4, fixed_abs, tag = 'smem constant byte address 0x4 - core index']
  #allocation1 [shape = 'u32[144,128]{1,0:T(1,128)}', space=vmem, size = 0x12000, scoped, tag = 'internal scratch']
  #allocation2 [shape = 'bf16[160,128]{1,0:T(16,128)(2,1)}', space=vmem, size = 0xa000, scoped, tag = 'scratch operand']
  %s0 = inlined_call_operand.hbm [shape: bf16[2,128,128], index: 0, kind: input, shape index: {}, may-alias: {0,1,2}]
  %s1 = inlined_call_operand.hbm [shape: bf16[2,128,128], index: 1, kind: input, shape index: {}, may-alias: {0,1,2}]
  %s2 = inlined_call_operand.hbm [shape: bf16[2,128,128], index: 2, kind: input, shape index: {}, may-alias: {0,1,2}]
  %s3 = inlined_call_operand.hbm [shape: f32[128,1], index: 3, kind: input, shape index: {}, may-alias: {3,4,5}]
  %s4 = inlined_call_operand.hbm [shape: f32[128,1], index: 4, kind: input, shape index: {}, may-alias: {3,4,5}]
  %s5 = inlined_call_operand.hbm [shape: f32[128,1], index: 5, kind: input, shape index: {}, may-alias: {3,4,5}]
  %s6 = inlined_call_operand.hbm [shape: bf16[128,128], index: 6, kind: input, shape index: {}]
  %s7 = inlined_call_operand.hbm [shape: f32[1,128], index: 7, kind: input, shape index: {}]
  %s8 = inlined_call_operand.hbm [shape: bf16[1152,128], index: 8, kind: input, shape index: {}]
  %s9 = inlined_call_operand.hbm [shape: f32[1,128], index: 9, kind: input, shape index: {}]
  %s10 = inlined_call_operand.hbm [shape: bf16[128,128], index: 10, kind: input, shape index: {}]
  %s11 = inlined_call_operand.hbm [shape: f32[1,128], index: 11, kind: input, shape index: {}]
  %s12 = inlined_call_operand.hbm [shape: bf16[2,128,128], index: 12, kind: output, shape index: {}]
  %s13 = sld [smem:[#allocation0]]
  $region129: #{_lambda_.10} parent=0
    _
  %s15 = ssub.s32 1, %s13
  %s16 = scalar_select 0, %s15, %s13
  $region1: #{_lambda_.10} parent=0
    #allocation3 [shape = 'u8[65536]{0}', space=vmem, size = 0x10000, scoped, tag = 'input window, operand 0']
    #allocation4 [shape = 's32[2]{0}', space=sflag, size = 0x8, scoped, tag = 'scoped memory for _lambda_.10']
    #allocation5 [shape = 's32[2]{0}', space=sflag, size = 0x8, scoped, tag = 'scoped memory for _lambda_.10']
    #allocation6 [shape = 'u8[4096]{0}', space=vmem, size = 0x1000, scoped, tag = 'input window, operand 1']
    #allocation7 [shape = 's32[2]{0}', space=sflag, size = 0x8, scoped, tag = 'scoped memory for _lambda_.10']
    #allocation8 [shape = 'u8[4096]{0}', space=vmem, size = 0x1000, scoped, tag = 'input window, operand 2']
    #allocation9 [shape = 'u8[65536]{0}', space=vmem, size = 0x10000, scoped, tag = 'input window, operand 3, single buffered']
    #allocation10 [shape = 's32[1]{0}', space=sflag, size = 0x4, scoped, tag = 'scoped memory for _lambda_.10']
    #allocation11 [shape = 'u8[4096]{0}', space=vmem, size = 0x1000, scoped, tag = 'input window, operand 4, single buffered']
    #allocation12 [shape = 'u8[4096]{0}', space=vmem, size = 0x1000, scoped, tag = 'input window, operand 5, single buffered']
    #allocation13 [shape = 's32[1]{0}', space=sflag, size = 0x4, scoped, tag = 'scoped memory for _lambda_.10']
    #allocation14 [shape = 'u8[32768]{0}', space=vmem, size = 0x8000, scoped, tag = 'input window, operand 6, single buffered']
    #allocation15 [shape = 'u8[512]{0}', space=vmem, size = 0x400, scoped, tag = 'input window, operand 7, single buffered']
    #allocation16 [shape = 's32[1]{0}', space=sflag, size = 0x4, scoped, tag = 'scoped memory for _lambda_.10']
    #allocation17 [shape = 'u8[294912]{0}', space=vmem, size = 0x48000, scoped, tag = 'input window, operand 8, single buffered']
    #allocation18 [shape = 'u8[512]{0}', space=vmem, size = 0x400, scoped, tag = 'input window, operand 9, single buffered']
    #allocation19 [shape = 's32[1]{0}', space=sflag, size = 0x4, scoped, tag = 'scoped memory for _lambda_.10']
    #allocation20 [shape = 'u8[32768]{0}', space=vmem, size = 0x8000, scoped, tag = 'input window, operand 10, single buffered']
    #allocation21 [shape = 'u8[512]{0}', space=vmem, size = 0x400, scoped, tag = 'input window, operand 11, single buffered']
    #allocation22 [shape = 's32[1]{0}', space=sflag, size = 0x4, scoped, tag = 'scoped memory for _lambda_.10']
    #allocation23 [shape = 'u8[65536]{0}', space=vmem, size = 0x10000, scoped, tag = 'output window, operand 0']
    %17 = vsyncpa [#allocation4], 0
    %s18 = scalar_lea.sflag [#allocation4], 1
    %19 = vsyncpa %s18, 0
    %20 = vsyncpa [#allocation7], 0
    %s21 = scalar_lea.sflag [#allocation7], 1
    %22 = vsyncpa %s21, 0
    %23 = vsyncpa [#allocation10], 0
    %24 = vsyncpa [#allocation13], 0
    %25 = vsyncpa [#allocation16], 0
    %26 = vsyncpa [#allocation19], 0
    %27 = vsyncpa [#allocation22], 0
    %28 = vsyncpa [#allocation5], 0
    %s29 = scalar_lea.sflag [#allocation5], 1
    %30 = vsyncpa %s29, 0
    loop: start=0, step=1, limit=4
    $region2: #{_lambda_.10} parent=1 // loop_pre_header
      _
    $region3: #{_lambda_.10} parent=1 // loop_header
      %s32 = sphi 0, %s36
      %p33 = scmp.ge.s32.totalorder %s32, 4
      %s39 = sphi 0, %s51
      %s40 = sphi 0, %s47
      %s41 = sphi 0, %s39
      %s42 = sphi 0, %s40
      %s43 = sphi 0, %s41
      %s44 = sphi 0, %s42
      %s56 = sphi 0, %s58
      %s59 = sphi 0, %s56
      %s60 = sphi 0, %s59
      %s76 = sphi 0, %s60
      %s92 = sphi 0, %s94
      %s95 = sphi 0, %s92
      %s96 = sphi 0, %s95
      %s112 = sphi 0, %s96
      %s128 = sphi 0, %s130
      %s131 = sphi 0, %s128
      %s132 = sphi 0, %s131
      %s148 = sphi 0, %s132
      %s154 = sphi 0, %s156
      %s157 = sphi 0, %s154
      %s158 = sphi 0, %s157
      %s174 = sphi 0, %s158
      %s188 = sphi 0, %s190
      %s191 = sphi 0, %s188
      %s192 = sphi 0, %s191
      %s208 = sphi 0, %s192
      %s222 = sphi 0, %s224
      %s225 = sphi 0, %s222
      %s226 = sphi 0, %s225
      %s242 = sphi 0, %s226
      %s246 = sphi 0, %s246
      %s248 = sphi 0, %s246
      %s249 = sphi 0, %s248
      %s263 = sphi 0, %s249
      %s267 = sphi 0, %s267
      %s269 = sphi 0, %s267
      %s270 = sphi 0, %s269
      %s284 = sphi 0, %s270
      %s288 = sphi 0, %s288
      %s290 = sphi 0, %s288
      %s291 = sphi 0, %s290
      %s305 = sphi 0, %s291
      %s309 = sphi 0, %s309
      %s311 = sphi 0, %s309
      %s312 = sphi 0, %s311
      %s326 = sphi 0, %s312
      %s330 = sphi 0, %s330
      %s332 = sphi 0, %s330
      %s333 = sphi 0, %s332
      %s347 = sphi 0, %s333
      %s351 = sphi 0, %s351
      %s353 = sphi 0, %s351
      %s354 = sphi 0, %s353
      %s368 = sphi 0, %s354
      %s376 = sphi 0, %s378
      %s379 = sphi 0, %s376
      %s380 = sphi 0, %s379
      %s396 = sphi 0, %s380
    $region4: #{_lambda_.10} parent=1 // loop_header_branch
      %35 = sbr.rel (%p33) target = $region8
    $region5: #{_lambda_.10} parent=1 // loop_body
      %s37 = ssub.s32 %s32, 1
      %s38 = ssub.s32 %s32, 2
      %s45 = sadd.s32 1, %s40
      %p46 = scmp.ge.s32.totalorder %s45, 1
      %s47 = scalar_select %p46, 0, %s45
      %s48 = sadd.s32 1, %s39
      %s49 = scalar_select %p46, %s48, %s39
      %p50 = scmp.ge.s32.totalorder %s49, 2
      %s51 = scalar_select %p50, 0, %s49
      %s52 = ssub.s32 %s39, %s51
      %s53 = ssub.s32 %s40, %s47
      %s54 = sor.u32 %s52, %s53
      %p55 = scmp.eq.s32.totalorder %s54, 0
      %s57 = sadd.s32 %s56, 1
      %s58 = scalar_select %p55, %s56, %s57
      %p61 = pneg %p55
      %p62 = scmp.eq.s32.totalorder %s32, 1
      %p63 = por %p61, %p62
      %p64 = scmp.ne.s32.totalorder %s56, %s59
      %p65 = scmp.eq.s32.totalorder %s32, 0
      %p66 = por %p64, %p65
      %p67 = scmp.ne.s32.totalorder %s56, %s59
      %p68 = scmp.eq.s32.totalorder %s37, 1
      %p69 = por %p67, %p68
      %p70 = scmp.ne.s32.totalorder %s59, %s60
      %p71 = scmp.eq.s32.totalorder %s37, 0
      %p72 = por %p70, %p71
      %p73 = scmp.ne.s32.totalorder %s59, %s60
      %p74 = scmp.eq.s32.totalorder %s38, 1
      %p75 = por %p73, %p74
      %p77 = scmp.ne.s32.totalorder %s60, %s76
      %p78 = scmp.eq.s32.totalorder %s38, 0
      %p79 = por %p77, %p78
      %s80 = smul.u32 %s40, 16
      %s81 = ssub.s32 %s80, 1
      %p82 = scmp.gt.s32.totalorder %s81, 0
      %s83 = scalar_select %p82, %s81, 0
      %s84 = smul.u32 %s47, 16
      %s85 = ssub.s32 %s84, 1
      %p86 = scmp.gt.s32.totalorder %s85, 0
      %s87 = scalar_select %p86, %s85, 0
      %s88 = ssub.s32 %s39, %s51
      %s89 = ssub.s32 %s83, %s87
      %s90 = sor.u32 %s88, %s89
      %p91 = scmp.eq.s32.totalorder %s90, 0
      %s93 = sadd.s32 %s92, 1
      %s94 = scalar_select %p91, %s92, %s93
      %p97 = pneg %p91
      %p98 = scmp.eq.s32.totalorder %s32, 1
      %p99 = por %p97, %p98
      %p100 = scmp.ne.s32.totalorder %s92, %s95
      %p101 = scmp.eq.s32.totalorder %s32, 0
      %p102 = por %p100, %p101
      %p103 = scmp.ne.s32.totalorder %s92, %s95
      %p104 = scmp.eq.s32.totalorder %s37, 1
      %p105 = por %p103, %p104
      %p106 = scmp.ne.s32.totalorder %s95, %s96
      %p107 = scmp.eq.s32.totalorder %s37, 0
      %p108 = por %p106, %p107
      %p109 = scmp.ne.s32.totalorder %s95, %s96
      %p110 = scmp.eq.s32.totalorder %s38, 1
      %p111 = por %p109, %p110
      %p113 = scmp.ne.s32.totalorder %s96, %s112
      %p114 = scmp.eq.s32.totalorder %s38, 0
      %p115 = por %p113, %p114
      %s116 = smul.u32 %s40, 16
      %s117 = sadd.s32 %s116, 16
      %p118 = scmp.lt.s32.totalorder %s117, 15
      %s119 = scalar_select %p118, %s117, 15
      %s120 = smul.u32 %s47, 16
      %s121 = sadd.s32 %s120, 16
      %p122 = scmp.lt.s32.totalorder %s121, 15
      %s123 = scalar_select %p122, %s121, 15
      %s124 = ssub.s32 %s39, %s51
      %s125 = ssub.s32 %s119, %s123
      %s126 = sor.u32 %s124, %s125
      %p127 = scmp.eq.s32.totalorder %s126, 0
      %s129 = sadd.s32 %s128, 1
      %s130 = scalar_select %p127, %s128, %s129
      %p133 = pneg %p127
      %p134 = scmp.eq.s32.totalorder %s32, 1
      %p135 = por %p133, %p134
      %p136 = scmp.ne.s32.totalorder %s128, %s131
      %p137 = scmp.eq.s32.totalorder %s32, 0
      %p138 = por %p136, %p137
      %p139 = scmp.ne.s32.totalorder %s128, %s131
      %p140 = scmp.eq.s32.totalorder %s37, 1
      %p141 = por %p139, %p140
      %p142 = scmp.ne.s32.totalorder %s131, %s132
      %p143 = scmp.eq.s32.totalorder %s37, 0
      %p144 = por %p142, %p143
      %p145 = scmp.ne.s32.totalorder %s131, %s132
      %p146 = scmp.eq.s32.totalorder %s38, 1
      %p147 = por %p145, %p146
      %p149 = scmp.ne.s32.totalorder %s132, %s148
      %p150 = scmp.eq.s32.totalorder %s38, 0
      %p151 = por %p149, %p150
      %s152 = ssub.s32 %s40, %s47
      %p153 = scmp.eq.s32.totalorder %s152, 0
      %s155 = sadd.s32 %s154, 1
      %s156 = scalar_select %p153, %s154, %s155
      %p159 = pneg %p153
      %p160 = scmp.eq.s32.totalorder %s32, 1
      %p161 = por %p159, %p160
      %p162 = scmp.ne.s32.totalorder %s154, %s157
      %p163 = scmp.eq.s32.totalorder %s32, 0
      %p164 = por %p162, %p163
      %p165 = scmp.ne.s32.totalorder %s154, %s157
      %p166 = scmp.eq.s32.totalorder %s37, 1
      %p167 = por %p165, %p166
      %p168 = scmp.ne.s32.totalorder %s157, %s158
      %p169 = scmp.eq.s32.totalorder %s37, 0
      %p170 = por %p168, %p169
      %p171 = scmp.ne.s32.totalorder %s157, %s158
      %p172 = scmp.eq.s32.totalorder %s38, 1
      %p173 = por %p171, %p172
      %p175 = scmp.ne.s32.totalorder %s158, %s174
      %p176 = scmp.eq.s32.totalorder %s38, 0
      %p177 = por %p175, %p176
      %s178 = smul.u32 %s40, 16
      %s179 = ssub.s32 %s178, 1
      %p180 = scmp.gt.s32.totalorder %s179, 0
      %s181 = scalar_select %p180, %s179, 0
      %s182 = smul.u32 %s47, 16
      %s183 = ssub.s32 %s182, 1
      %p184 = scmp.gt.s32.totalorder %s183, 0
      %s185 = scalar_select %p184, %s183, 0
      %s186 = ssub.s32 %s181, %s185
      %p187 = scmp.eq.s32.totalorder %s186, 0
      %s189 = sadd.s32 %s188, 1
      %s190 = scalar_select %p187, %s188, %s189
      %p193 = pneg %p187
      %p194 = scmp.eq.s32.totalorder %s32, 1
      %p195 = por %p193, %p194
      %p196 = scmp.ne.s32.totalorder %s188, %s191
      %p197 = scmp.eq.s32.totalorder %s32, 0
      %p198 = por %p196, %p197
      %p199 = scmp.ne.s32.totalorder %s188, %s191
      %p200 = scmp.eq.s32.totalorder %s37, 1
      %p201 = por %p199, %p200
      %p202 = scmp.ne.s32.totalorder %s191, %s192
      %p203 = scmp.eq.s32.totalorder %s37, 0
      %p204 = por %p202, %p203
      %p205 = scmp.ne.s32.totalorder %s191, %s192
      %p206 = scmp.eq.s32.totalorder %s38, 1
      %p207 = por %p205, %p206
      %p209 = scmp.ne.s32.totalorder %s192, %s208
      %p210 = scmp.eq.s32.totalorder %s38, 0
      %p211 = por %p209, %p210
      %s212 = smul.u32 %s40, 16
      %s213 = sadd.s32 %s212, 16
      %p214 = scmp.lt.s32.totalorder %s213, 15
      %s215 = scalar_select %p214, %s213, 15
      %s216 = smul.u32 %s47, 16
      %s217 = sadd.s32 %s216, 16
      %p218 = scmp.lt.s32.totalorder %s217, 15
      %s219 = scalar_select %p218, %s217, 15
      %s220 = ssub.s32 %s215, %s219
      %p221 = scmp.eq.s32.totalorder %s220, 0
      %s223 = sadd.s32 %s222, 1
      %s224 = scalar_select %p221, %s222, %s223
      %p227 = pneg %p221
      %p228 = scmp.eq.s32.totalorder %s32, 1
      %p229 = por %p227, %p228
      %p230 = scmp.ne.s32.totalorder %s222, %s225
      %p231 = scmp.eq.s32.totalorder %s32, 0
      %p232 = por %p230, %p231
      %p233 = scmp.ne.s32.totalorder %s222, %s225
      %p234 = scmp.eq.s32.totalorder %s37, 1
      %p235 = por %p233, %p234
      %p236 = scmp.ne.s32.totalorder %s225, %s226
      %p237 = scmp.eq.s32.totalorder %s37, 0
      %p238 = por %p236, %p237
      %p239 = scmp.ne.s32.totalorder %s225, %s226
      %p240 = scmp.eq.s32.totalorder %s38, 1
      %p241 = por %p239, %p240
      %p243 = scmp.ne.s32.totalorder %s226, %s242
      %p244 = scmp.eq.s32.totalorder %s38, 0
      %p245 = por %p243, %p244
      %s247 = sadd.s32 %s246, 1
      %p250 = scmp.eq.s32.totalorder %s32, 1
      %p251 = scmp.ne.s32.totalorder %s246, %s248
      %p252 = scmp.eq.s32.totalorder %s32, 0
      %p253 = por %p251, %p252
      %p254 = scmp.ne.s32.totalorder %s246, %s248
      %p255 = scmp.eq.s32.totalorder %s37, 1
      %p256 = por %p254, %p255
      %p257 = scmp.ne.s32.totalorder %s248, %s249
      %p258 = scmp.eq.s32.totalorder %s37, 0
      %p259 = por %p257, %p258
      %p260 = scmp.ne.s32.totalorder %s248, %s249
      %p261 = scmp.eq.s32.totalorder %s38, 1
      %p262 = por %p260, %p261
      %p264 = scmp.ne.s32.totalorder %s249, %s263
      %p265 = scmp.eq.s32.totalorder %s38, 0
      %p266 = por %p264, %p265
      %s268 = sadd.s32 %s267, 1
      %p271 = scmp.eq.s32.totalorder %s32, 1
      %p272 = scmp.ne.s32.totalorder %s267, %s269
      %p273 = scmp.eq.s32.totalorder %s32, 0
      %p274 = por %p272, %p273
      %p275 = scmp.ne.s32.totalorder %s267, %s269
      %p276 = scmp.eq.s32.totalorder %s37, 1
      %p277 = por %p275, %p276
      %p278 = scmp.ne.s32.totalorder %s269, %s270
      %p279 = scmp.eq.s32.totalorder %s37, 0
      %p280 = por %p278, %p279
      %p281 = scmp.ne.s32.totalorder %s269, %s270
      %p282 = scmp.eq.s32.totalorder %s38, 1
      %p283 = por %p281, %p282
      %p285 = scmp.ne.s32.totalorder %s270, %s284
      %p286 = scmp.eq.s32.totalorder %s38, 0
      %p287 = por %p285, %p286
      %s289 = sadd.s32 %s288, 1
      %p292 = scmp.eq.s32.totalorder %s32, 1
      %p293 = scmp.ne.s32.totalorder %s288, %s290
      %p294 = scmp.eq.s32.totalorder %s32, 0
      %p295 = por %p293, %p294
      %p296 = scmp.ne.s32.totalorder %s288, %s290
      %p297 = scmp.eq.s32.totalorder %s37, 1
      %p298 = por %p296, %p297
      %p299 = scmp.ne.s32.totalorder %s290, %s291
      %p300 = scmp.eq.s32.totalorder %s37, 0
      %p301 = por %p299, %p300
      %p302 = scmp.ne.s32.totalorder %s290, %s291
      %p303 = scmp.eq.s32.totalorder %s38, 1
      %p304 = por %p302, %p303
      %p306 = scmp.ne.s32.totalorder %s291, %s305
      %p307 = scmp.eq.s32.totalorder %s38, 0
      %p308 = por %p306, %p307
      %s310 = sadd.s32 %s309, 1
      %p313 = scmp.eq.s32.totalorder %s32, 1
      %p314 = scmp.ne.s32.totalorder %s309, %s311
      %p315 = scmp.eq.s32.totalorder %s32, 0
      %p316 = por %p314, %p315
      %p317 = scmp.ne.s32.totalorder %s309, %s311
      %p318 = scmp.eq.s32.totalorder %s37, 1
      %p319 = por %p317, %p318
      %p320 = scmp.ne.s32.totalorder %s311, %s312
      %p321 = scmp.eq.s32.totalorder %s37, 0
      %p322 = por %p320, %p321
      %p323 = scmp.ne.s32.totalorder %s311, %s312
      %p324 = scmp.eq.s32.totalorder %s38, 1
      %p325 = por %p323, %p324
      %p327 = scmp.ne.s32.totalorder %s312, %s326
      %p328 = scmp.eq.s32.totalorder %s38, 0
      %p329 = por %p327, %p328
      %s331 = sadd.s32 %s330, 1
      %p334 = scmp.eq.s32.totalorder %s32, 1
      %p335 = scmp.ne.s32.totalorder %s330, %s332
      %p336 = scmp.eq.s32.totalorder %s32, 0
      %p337 = por %p335, %p336
      %p338 = scmp.ne.s32.totalorder %s330, %s332
      %p339 = scmp.eq.s32.totalorder %s37, 1
      %p340 = por %p338, %p339
      %p341 = scmp.ne.s32.totalorder %s332, %s333
      %p342 = scmp.eq.s32.totalorder %s37, 0
      %p343 = por %p341, %p342
      %p344 = scmp.ne.s32.totalorder %s332, %s333
      %p345 = scmp.eq.s32.totalorder %s38, 1
      %p346 = por %p344, %p345
      %p348 = scmp.ne.s32.totalorder %s333, %s347
      %p349 = scmp.eq.s32.totalorder %s38, 0
      %p350 = por %p348, %p349
      %s352 = sadd.s32 %s351, 1
      %p355 = scmp.eq.s32.totalorder %s32, 1
      %p356 = scmp.ne.s32.totalorder %s351, %s353
      %p357 = scmp.eq.s32.totalorder %s32, 0
      %p358 = por %p356, %p357
      %p359 = scmp.ne.s32.totalorder %s351, %s353
      %p360 = scmp.eq.s32.totalorder %s37, 1
      %p361 = por %p359, %p360
      %p362 = scmp.ne.s32.totalorder %s353, %s354
      %p363 = scmp.eq.s32.totalorder %s37, 0
      %p364 = por %p362, %p363
      %p365 = scmp.ne.s32.totalorder %s353, %s354
      %p366 = scmp.eq.s32.totalorder %s38, 1
      %p367 = por %p365, %p366
      %p369 = scmp.ne.s32.totalorder %s354, %s368
      %p370 = scmp.eq.s32.totalorder %s38, 0
      %p371 = por %p369, %p370
      %s372 = ssub.s32 %s39, %s51
      %s373 = ssub.s32 %s40, %s47
      %s374 = sor.u32 %s372, %s373
      %p375 = scmp.eq.s32.totalorder %s374, 0
      %s377 = sadd.s32 %s376, 1
      %s378 = scalar_select %p375, %s376, %s377
      %p381 = pneg %p375
      %p382 = scmp.eq.s32.totalorder %s32, 1
      %p383 = por %p381, %p382
      %p384 = scmp.ne.s32.totalorder %s376, %s379
      %p385 = scmp.eq.s32.totalorder %s32, 0
      %p386 = por %p384, %p385
      %p387 = scmp.ne.s32.totalorder %s376, %s379
      %p388 = scmp.eq.s32.totalorder %s37, 1
      %p389 = por %p387, %p388
      %p390 = scmp.ne.s32.totalorder %s379, %s380
      %p391 = scmp.eq.s32.totalorder %s37, 0
      %p392 = por %p390, %p391
      %p393 = scmp.ne.s32.totalorder %s379, %s380
      %p394 = scmp.eq.s32.totalorder %s38, 1
      %p395 = por %p393, %p394
      %p397 = scmp.ne.s32.totalorder %s380, %s396
      %p398 = scmp.eq.s32.totalorder %s38, 0
      %p399 = por %p397, %p398
      %p400 = scmp.le.s32.totalorder 1, %s32
      %p401 = scmp.lt.s32.totalorder %s32, 3
      %p402 = pnand %p400, %p401
      %p403 = pneg %p402
      // Predicated region
      $region9: #{_lambda_.10} parent=5 // pred_check
        _
      $region10: #{_lambda_.10} parent=5 // pred_check_branch
        %405 = sbr.rel (%p402) target = $region12
      $region11: #{_lambda_.10} parent=5 // pred_region
        %s406 = ssub.s32 %s32, 1
        // Predicated region
        $region13: #{_lambda_.10} parent=11 // pred_check
          %p407 = pneg %p170
        $region14: #{_lambda_.10} parent=11 // pred_check_branch
          %409 = sbr.rel (%p407) target = $region16
        $region15: #{_lambda_.10} parent=11 // pred_region
          %s410 = smul.u32 16, %s42
          %s412 = ssub.s32 2048, 2048
          %413 = vsyncadd [#allocation10], %s412
          %s414 = smul.addr %s410, 128
          %s415 = scalar_lea.hbm %s3, %s414
          %s416 = sshll.u32 [#allocation9], 4
          %s417 = int_to_ptr.vmem [resolvable:$true] %s416
          %422 = dma.hbm_to_vmem [thread:$0]  %s415, 2048, %s417, [#allocation10], 128, 128, 8
        $region16: #{_lambda_.10} parent=11 // pred_fallthru
          _
        // Predicated region
        $region17: #{_lambda_.10} parent=11 // pred_check
          %p423 = pneg %p204
        $region18: #{_lambda_.10} parent=11 // pred_check_branch
          %425 = sbr.rel (%p423) target = $region20
        $region19: #{_lambda_.10} parent=11 // pred_region
          %s426 = smul.u32 %s42, 16
          %s427 = ssub.s32 %s426, 1
          %p428 = scmp.gt.s32.totalorder %s427, 0
          %s429 = scalar_select %p428, %s427, 0
          %s431 = ssub.s32 128, 128
          %432 = vsyncadd [#allocation10], %s431
          %s433 = smul.addr %s429, 128
          %s434 = scalar_lea.hbm %s4, %s433
          %s436 = sshll.u32 [#allocation11], 4
          %s437 = int_to_ptr.vmem [resolvable:$true] %s436
          %439 = dma.hbm_to_vmem [thread:$0]  %s434, 128, %s437, [#allocation10]
        $region20: #{_lambda_.10} parent=11 // pred_fallthru
          _
        // Predicated region
        $region21: #{_lambda_.10} parent=11 // pred_check
          %p440 = pneg %p238
        $region22: #{_lambda_.10} parent=11 // pred_check_branch
          %442 = sbr.rel (%p440) target = $region24
        $region23: #{_lambda_.10} parent=11 // pred_region
          %s443 = smul.u32 %s42, 16
          %s444 = sadd.s32 %s443, 16
          %p445 = scmp.lt.s32.totalorder %s444, 15
          %s446 = scalar_select %p445, %s444, 15
          %s448 = ssub.s32 128, 128
          %449 = vsyncadd [#allocation13], %s448
          %s450 = smul.addr %s446, 128
          %s451 = scalar_lea.hbm %s5, %s450
          %s453 = sshll.u32 [#allocation12], 4
          %s454 = int_to_ptr.vmem [resolvable:$true] %s453
          %456 = dma.hbm_to_vmem [thread:$0]  %s451, 128, %s454, [#allocation13]
        $region24: #{_lambda_.10} parent=11 // pred_fallthru
          _
        // Predicated region
        $region25: #{_lambda_.10} parent=11 // pred_check
          %p457 = pneg %p259
        $region26: #{_lambda_.10} parent=11 // pred_check_branch
          %459 = sbr.rel (%p457) target = $region28
        $region27: #{_lambda_.10} parent=11 // pred_region
          %s461 = ssub.s32 1024, 1024
          %462 = vsyncadd [#allocation13], %s461
          %s463 = sshll.u32 [#allocation14], 4
          %s464 = int_to_ptr.vmem [resolvable:$true] %s463
          %469 = dma.hbm_to_vmem [thread:$0]  %s6, 1024, %s464, [#allocation13], 64, 64, 4
        $region28: #{_lambda_.10} parent=11 // pred_fallthru
          _
        // Predicated region
        $region29: #{_lambda_.10} parent=11 // pred_check
          %p470 = pneg %p280
        $region30: #{_lambda_.10} parent=11 // pred_check_branch
          %472 = sbr.rel (%p470) target = $region32
        $region31: #{_lambda_.10} parent=11 // pred_region
          %s474 = ssub.s32 16, 16
          %475 = vsyncadd [#allocation16], %s474
          %s477 = sshll.u32 [#allocation15], 4
          %s478 = int_to_ptr.vmem [resolvable:$true] %s477
          %480 = dma.hbm_to_vmem [thread:$0]  %s7, 16, %s478, [#allocation16]
        $region32: #{_lambda_.10} parent=11 // pred_fallthru
          _
        // Predicated region
        $region33: #{_lambda_.10} parent=11 // pred_check
          %p481 = pneg %p301
        $region34: #{_lambda_.10} parent=11 // pred_check_branch
          %483 = sbr.rel (%p481) target = $region36
        $region35: #{_lambda_.10} parent=11 // pred_region
          %s485 = ssub.s32 9216, 9216
          %486 = vsyncadd [#allocation16], %s485
          %s487 = sshll.u32 [#allocation17], 4
          %s488 = int_to_ptr.vmem [resolvable:$true] %s487
          %493 = dma.hbm_to_vmem [thread:$0]  %s8, 9216, %s488, [#allocation16], 64, 64, 4
        $region36: #{_lambda_.10} parent=11 // pred_fallthru
          _
        // Predicated region
        $region37: #{_lambda_.10} parent=11 // pred_check
          %p494 = pneg %p322
        $region38: #{_lambda_.10} parent=11 // pred_check_branch
          %496 = sbr.rel (%p494) target = $region40
        $region39: #{_lambda_.10} parent=11 // pred_region
          %s498 = ssub.s32 16, 16
          %499 = vsyncadd [#allocation19], %s498
          %s501 = sshll.u32 [#allocation18], 4
          %s502 = int_to_ptr.vmem [resolvable:$true] %s501
          %504 = dma.hbm_to_vmem [thread:$0]  %s9, 16, %s502, [#allocation19]
        $region40: #{_lambda_.10} parent=11 // pred_fallthru
          _
        // Predicated region
        $region41: #{_lambda_.10} parent=11 // pred_check
          %p505 = pneg %p343
        $region42: #{_lambda_.10} parent=11 // pred_check_branch
          %507 = sbr.rel (%p505) target = $region44
        $region43: #{_lambda_.10} parent=11 // pred_region
          %s509 = ssub.s32 1024, 1024
          %510 = vsyncadd [#allocation19], %s509
          %s511 = sshll.u32 [#allocation20], 4
          %s512 = int_to_ptr.vmem [resolvable:$true] %s511
          %517 = dma.hbm_to_vmem [thread:$0]  %s10, 1024, %s512, [#allocation19], 64, 64, 4
        $region44: #{_lambda_.10} parent=11 // pred_fallthru
          _
        // Predicated region
        $region45: #{_lambda_.10} parent=11 // pred_check
          %p518 = pneg %p364
        $region46: #{_lambda_.10} parent=11 // pred_check_branch
          %520 = sbr.rel (%p518) target = $region48
        $region47: #{_lambda_.10} parent=11 // pred_region
          %s522 = ssub.s32 16, 16
          %523 = vsyncadd [#allocation22], %s522
          %s525 = sshll.u32 [#allocation21], 4
          %s526 = int_to_ptr.vmem [resolvable:$true] %s525
          %528 = dma.hbm_to_vmem [thread:$0]  %s11, 16, %s526, [#allocation22]
        $region48: #{_lambda_.10} parent=11 // pred_fallthru
          _
      $region12: #{_lambda_.10} parent=5 // pred_fallthru
        _
      %p529 = scmp.lt.s32.totalorder %s32, 2
      // Predicated region
      $region49: #{_lambda_.10} parent=5 // pred_check
        %p530 = pneg %p529
      $region50: #{_lambda_.10} parent=5 // pred_check_branch
        %532 = sbr.rel (%p530) target = $region52
      $region51: #{_lambda_.10} parent=5 // pred_region
        // Predicated region
        $region53: #{_lambda_.10} parent=51 // pred_check
          %p533 = pneg %p66
        $region54: #{_lambda_.10} parent=51 // pred_check_branch
          %535 = sbr.rel (%p533) target = $region56
        $region55: #{_lambda_.10} parent=51 // pred_region
          %s536 = sand.u32 %s56, 1
          %s537 = scalar_lea.sflag [#allocation4], %s536
          %s538 = sand.u32 %s56, 1
          %s539 = smul.addr %s538, 64
          %s540 = scalar_lea.vmem [#allocation3], %s539
          %s541 = smul.u32 16, %s40
          %s543 = ssub.s32 1024, 1024
          %544 = vsyncadd %s537, %s543
          %s545 = smul.addr %s39, 16
          %s546 = sadd.s32 %s541, %s545
          %s547 = smul.addr %s546, 64
          %s548 = scalar_lea.hbm %s0, %s547
          %s549 = sshll.u32 %s540, 4
          %s550 = int_to_ptr.vmem [resolvable:$true] %s549
          %555 = dma.hbm_to_vmem [thread:$0]  %s548, 1024, %s550, %s537, 64, 64, 4
        $region56: #{_lambda_.10} parent=51 // pred_fallthru
          _
        // Predicated region
        $region57: #{_lambda_.10} parent=51 // pred_check
          %p556 = pneg %p102
        $region58: #{_lambda_.10} parent=51 // pred_check_branch
          %558 = sbr.rel (%p556) target = $region60
        $region59: #{_lambda_.10} parent=51 // pred_region
          %s559 = sand.u32 %s32, 1
          %s560 = scalar_lea.sflag [#allocation7], %s559
          %s561 = sand.u32 %s92, 1
          %s562 = smul.addr %s561, 4
          %s563 = scalar_lea.vmem [#allocation6], %s562
          %s564 = smul.u32 %s40, 16
          %s565 = ssub.s32 %s564, 1
          %p566 = scmp.gt.s32.totalorder %s565, 0
          %s567 = scalar_select %p566, %s565, 0
          %s569 = ssub.s32 64, 64
          %570 = vsyncadd %s560, %s569
          %s571 = smul.addr %s39, 16
          %s572 = sadd.s32 %s567, %s571
          %s573 = smul.addr %s572, 64
          %s574 = scalar_lea.hbm %s1, %s573
          %s576 = sshll.u32 %s563, 4
          %s577 = int_to_ptr.vmem [resolvable:$true] %s576
          %579 = dma.hbm_to_vmem [thread:$0]  %s574, 64, %s577, %s560
        $region60: #{_lambda_.10} parent=51 // pred_fallthru
          _
        // Predicated region
        $region61: #{_lambda_.10} parent=51 // pred_check
          %p580 = pneg %p138
        $region62: #{_lambda_.10} parent=51 // pred_check_branch
          %582 = sbr.rel (%p580) target = $region64
        $region63: #{_lambda_.10} parent=51 // pred_region
          %s583 = sand.u32 %s32, 1
          %s584 = scalar_lea.sflag [#allocation7], %s583
          %s585 = sand.u32 %s128, 1
          %s586 = smul.addr %s585, 4
          %s587 = scalar_lea.vmem [#allocation8], %s586
          %s588 = smul.u32 %s40, 16
          %s589 = sadd.s32 %s588, 16
          %p590 = scmp.lt.s32.totalorder %s589, 15
          %s591 = scalar_select %p590, %s589, 15
          %s593 = ssub.s32 64, 64
          %594 = vsyncadd %s584, %s593
          %s595 = smul.addr %s39, 16
          %s596 = sadd.s32 %s591, %s595
          %s597 = smul.addr %s596, 64
          %s598 = scalar_lea.hbm %s2, %s597
          %s600 = sshll.u32 %s587, 4
          %s601 = int_to_ptr.vmem [resolvable:$true] %s600
          %603 = dma.hbm_to_vmem [thread:$0]  %s598, 64, %s601, %s584
        $region64: #{_lambda_.10} parent=51 // pred_fallthru
          _
      $region52: #{_lambda_.10} parent=5 // pred_fallthru
        _
      %p604 = scmp.le.s32.totalorder 1, %s32
      %p605 = scmp.lt.s32.totalorder %s32, 3
      %p606 = pnand %p604, %p605
      %p607 = pneg %p606
      // Predicated region
      $region65: #{_lambda_.10} parent=5 // pred_check
        _
      $region66: #{_lambda_.10} parent=5 // pred_check_branch
        %609 = sbr.rel (%p606) target = $region68
      $region67: #{_lambda_.10} parent=5 // pred_region
        %s610 = ssub.s32 %s32, 1
        %s611 = sand.u32 %s59, 1
        %s612 = scalar_lea.sflag [#allocation4], %s611
        %s613 = sand.u32 %s59, 1
        %s614 = smul.addr %s613, 64
        %s615 = scalar_lea.vmem [#allocation3], %s614
        // Predicated region
        $region69: #{_lambda_.10} parent=67 // pred_check
          %p616 = pneg %p72
        $region70: #{_lambda_.10} parent=67 // pred_check_branch
          %618 = sbr.rel (%p616) target = $region72
        $region71: #{_lambda_.10} parent=67 // pred_region
          %619 = dma.done %s612, 1024
        $region72: #{_lambda_.10} parent=67 // pred_fallthru
          _
        %s620 = sand.u32 %s37, 1
        %s621 = scalar_lea.sflag [#allocation7], %s620
        %s622 = sand.u32 %s95, 1
        %s623 = smul.addr %s622, 4
        %s624 = scalar_lea.vmem [#allocation6], %s623
        // Predicated region
        $region73: #{_lambda_.10} parent=67 // pred_check
          %p625 = pneg %p108
        $region74: #{_lambda_.10} parent=67 // pred_check_branch
          %627 = sbr.rel (%p625) target = $region76
        $region75: #{_lambda_.10} parent=67 // pred_region
          %628 = dma.done %s621, 64
        $region76: #{_lambda_.10} parent=67 // pred_fallthru
          _
        %s629 = sand.u32 %s37, 1
        %s630 = scalar_lea.sflag [#allocation7], %s629
        %s631 = sand.u32 %s131, 1
        %s632 = smul.addr %s631, 4
        %s633 = scalar_lea.vmem [#allocation8], %s632
        // Predicated region
        $region77: #{_lambda_.10} parent=67 // pred_check
          %p634 = pneg %p144
        $region78: #{_lambda_.10} parent=67 // pred_check_branch
          %636 = sbr.rel (%p634) target = $region80
        $region79: #{_lambda_.10} parent=67 // pred_region
          %637 = dma.done %s630, 64
        $region80: #{_lambda_.10} parent=67 // pred_fallthru
          _
        // Predicated region
        $region81: #{_lambda_.10} parent=67 // pred_check
          %p638 = pneg %p170
        $region82: #{_lambda_.10} parent=67 // pred_check_branch
          %640 = sbr.rel (%p638) target = $region84
        $region83: #{_lambda_.10} parent=67 // pred_region
          %641 = dma.done [#allocation10], 2048
        $region84: #{_lambda_.10} parent=67 // pred_fallthru
          _
        // Predicated region
        $region85: #{_lambda_.10} parent=67 // pred_check
          %p642 = pneg %p204
        $region86: #{_lambda_.10} parent=67 // pred_check_branch
          %644 = sbr.rel (%p642) target = $region88
        $region87: #{_lambda_.10} parent=67 // pred_region
          %645 = dma.done [#allocation10], 128
        $region88: #{_lambda_.10} parent=67 // pred_fallthru
          _
        // Predicated region
        $region89: #{_lambda_.10} parent=67 // pred_check
          %p646 = pneg %p238
        $region90: #{_lambda_.10} parent=67 // pred_check_branch
          %648 = sbr.rel (%p646) target = $region92
        $region91: #{_lambda_.10} parent=67 // pred_region
          %649 = dma.done [#allocation13], 128
        $region92: #{_lambda_.10} parent=67 // pred_fallthru
          _
        // Predicated region
        $region93: #{_lambda_.10} parent=67 // pred_check
          %p650 = pneg %p259
        $region94: #{_lambda_.10} parent=67 // pred_check_branch
          %652 = sbr.rel (%p650) target = $region96
        $region95: #{_lambda_.10} parent=67 // pred_region
          %653 = dma.done [#allocation13], 1024
        $region96: #{_lambda_.10} parent=67 // pred_fallthru
          _
        // Predicated region
        $region97: #{_lambda_.10} parent=67 // pred_check
          %p654 = pneg %p280
        $region98: #{_lambda_.10} parent=67 // pred_check_branch
          %656 = sbr.rel (%p654) target = $region100
        $region99: #{_lambda_.10} parent=67 // pred_region
          %657 = dma.done [#allocation16], 16
        $region100: #{_lambda_.10} parent=67 // pred_fallthru
          _
        // Predicated region
        $region101: #{_lambda_.10} parent=67 // pred_check
          %p658 = pneg %p301
        $region102: #{_lambda_.10} parent=67 // pred_check_branch
          %660 = sbr.rel (%p658) target = $region104
        $region103: #{_lambda_.10} parent=67 // pred_region
          %661 = dma.done [#allocation16], 9216
        $region104: #{_lambda_.10} parent=67 // pred_fallthru
          _
        // Predicated region
        $region105: #{_lambda_.10} parent=67 // pred_check
          %p662 = pneg %p322
        $region106: #{_lambda_.10} parent=67 // pred_check_branch
          %664 = sbr.rel (%p662) target = $region108
        $region107: #{_lambda_.10} parent=67 // pred_region
          %665 = dma.done [#allocation19], 16
        $region108: #{_lambda_.10} parent=67 // pred_fallthru
          _
        // Predicated region
        $region109: #{_lambda_.10} parent=67 // pred_check
          %p666 = pneg %p343
        $region110: #{_lambda_.10} parent=67 // pred_check_branch
          %668 = sbr.rel (%p666) target = $region112
        $region111: #{_lambda_.10} parent=67 // pred_region
          %669 = dma.done [#allocation19], 1024
        $region112: #{_lambda_.10} parent=67 // pred_fallthru
          _
        // Predicated region
        $region113: #{_lambda_.10} parent=67 // pred_check
          %p670 = pneg %p364
        $region114: #{_lambda_.10} parent=67 // pred_check_branch
          %672 = sbr.rel (%p670) target = $region116
        $region115: #{_lambda_.10} parent=67 // pred_region
          %673 = dma.done [#allocation22], 16
        $region116: #{_lambda_.10} parent=67 // pred_fallthru
          _
        %s674 = sand.u32 %s59, 1
        %s675 = scalar_lea.sflag [#allocation4], %s674
        %s676 = sand.u32 %s59, 1
        %s677 = smul.addr %s676, 64
        %s678 = scalar_lea.vmem [#allocation3], %s677
        %p679 = pneg %p72
        %p680 = pneg %p69
        %s681 = sand.u32 %s37, 1
        %s682 = scalar_lea.sflag [#allocation7], %s681
        %s683 = sand.u32 %s95, 1
        %s684 = smul.addr %s683, 4
        %s685 = scalar_lea.vmem [#allocation6], %s684
        %p686 = pneg %p108
        %p687 = pneg %p105
        %s688 = sand.u32 %s37, 1
        %s689 = scalar_lea.sflag [#allocation7], %s688
        %s690 = sand.u32 %s131, 1
        %s691 = smul.addr %s690, 4
        %s692 = scalar_lea.vmem [#allocation8], %s691
        %p693 = pneg %p144
        %p694 = pneg %p141
        %p695 = pneg %p170
        %p696 = pneg %p167
        %p697 = pneg %p204
        %p698 = pneg %p201
        %p699 = pneg %p238
        %p700 = pneg %p235
        %p701 = pneg %p259
        %p702 = pneg %p256
        %p703 = pneg %p280
        %p704 = pneg %p277
        %p705 = pneg %p301
        %p706 = pneg %p298
        %p707 = pneg %p322
        %p708 = pneg %p319
        %p709 = pneg %p343
        %p710 = pneg %p340
        %p711 = pneg %p364
        %p712 = pneg %p361
        %p713 = pneg %p392
        %p714 = pneg %p389
        %s715 = sand.u32 %s379, 1
        %s716 = scalar_lea.sflag [#allocation5], %s715
        %s717 = sand.u32 %s379, 1
        %s718 = smul.addr %s717, 64
        %s719 = scalar_lea.vmem [#allocation23], %s718
        %s720 = smul.u32 16, %s42
        %s721 = smul.u32 %s42, 16
        %s722 = ssub.s32 %s721, 1
        %p723 = scmp.gt.s32.totalorder %s722, 0
        %s724 = scalar_select %p723, %s722, 0
        %s725 = smul.u32 %s42, 16
        %s726 = sadd.s32 %s725, 16
        %p727 = scmp.lt.s32.totalorder %s726, 15
        %s728 = scalar_select %p727, %s726, 15
        %s729 = smul.u32 16, %s42
        %s730 = smul.u32 %s42, 16
        %s731 = ssub.s32 %s730, 1
        %p732 = scmp.gt.s32.totalorder %s731, 0
        %s733 = scalar_select %p732, %s731, 0
        %s734 = smul.u32 %s42, 16
        %s735 = sadd.s32 %s734, 16
        %p736 = scmp.lt.s32.totalorder %s735, 15
        %s737 = scalar_select %p736, %s735, 15
        %s738 = smul.u32 16, %s42
        %740 = vst [vmem:[#allocation2] sm:$0xf] 0
        %741 = vst [vmem:[#allocation2 + $0x48] sm:$0xf0] 0
        %v742 = vld [vmem:[%s615] sm:$0xf]
        %v743 = vld [vmem:[%s615 + $0x4] sm:$0xf]
        %v744 = vld [vmem:[%s615 + $0x8] sm:$0xf]
        %v745 = vld [vmem:[%s615 + $0xc] sm:$0xf]
        %v746 = vld [vmem:[%s615 + $0x10] sm:$0xf]
        %v747 = vld [vmem:[%s615 + $0x14] sm:$0xf]
        %v748 = vld [vmem:[%s615 + $0x18] sm:$0xf]
        %v749 = vld [vmem:[%s615 + $0x1c] sm:$0xf]
        %v750 = vld [vmem:[%s615 + $0x20] sm:$0xf]
        %v751 = vld [vmem:[%s615 + $0x24] sm:$0xf]
        %v752 = vld [vmem:[%s615 + $0x28] sm:$0xf]
        %v753 = vld [vmem:[%s615 + $0x2c] sm:$0xf]
        %v754 = vld [vmem:[%s615 + $0x30] sm:$0xf]
        %v755 = vld [vmem:[%s615 + $0x34] sm:$0xf]
        %v756 = vld [vmem:[%s615 + $0x38] sm:$0xf]
        %v757 = vld [vmem:[%s615 + $0x3c] sm:$0xf]
        %v758 = vld [vmem:[%s624] sm:$0xf]
        %v759 = vld [vmem:[%s633] sm:$0xf]
        %v776 = vunpack.c.l.b16 %v742
        %v777 = vunpack.c.l.b16 %v743
        %v778 = vunpack.c.l.b16 %v744
        %v779 = vunpack.c.l.b16 %v745
        %v780 = vunpack.c.l.b16 %v746
        %v781 = vunpack.c.l.b16 %v747
        %v782 = vunpack.c.l.b16 %v748
        %v783 = vunpack.c.l.b16 %v749
        %v784 = vunpack.c.l.b16 %v750
        %v785 = vunpack.c.l.b16 %v751
        %v786 = vunpack.c.l.b16 %v752
        %v787 = vunpack.c.l.b16 %v753
        %v788 = vunpack.c.l.b16 %v754
        %v789 = vunpack.c.l.b16 %v755
        %v790 = vunpack.c.l.b16 %v756
        %v791 = vunpack.c.l.b16 %v757
        %v792 = vpack.c.b16 %v776, %v776
        %v793 = vpack.c.b16 %v778, %v777
        %v794 = vpack.c.b16 %v780, %v779
        %v795 = vpack.c.b16 %v782, %v781
        %v796 = vpack.c.b16 %v784, %v783
        %v797 = vpack.c.b16 %v786, %v785
        %v798 = vpack.c.b16 %v788, %v787
        %v799 = vpack.c.b16 %v790, %v789
        %v800 = vpack.c.b16 %v791, %v791
        %v809 = vunpack.c.l.b16 %v759
        %v810 = vpack.c.b16 %v809, %v809
        %vm811 = vcmask 1043456
        %v814 = vsel %vm811, %v758, %v792
        %v818 = vsel %vm811, %v800, %v810
        %v820 = vld [vmem:[#allocation9] sm:$0xff]
        %v821 = vld [vmem:[#allocation9 + $0x8] sm:$0xff]
        %v822 = vld [vmem:[#allocation9 + $0x10] sm:$0xff]
        %v823 = vld [vmem:[#allocation9 + $0x18] sm:$0xff]
        %v824 = vld [vmem:[#allocation9 + $0x20] sm:$0xff]
        %v825 = vld [vmem:[#allocation9 + $0x28] sm:$0xff]
        %v826 = vld [vmem:[#allocation9 + $0x30] sm:$0xff]
        %v827 = vld [vmem:[#allocation9 + $0x38] sm:$0xff]
        %v828 = vld [vmem:[#allocation9 + $0x40] sm:$0xff]
        %v829 = vld [vmem:[#allocation9 + $0x48] sm:$0xff]
        %v830 = vld [vmem:[#allocation9 + $0x50] sm:$0xff]
        %v831 = vld [vmem:[#allocation9 + $0x58] sm:$0xff]
        %v832 = vld [vmem:[#allocation9 + $0x60] sm:$0xff]
        %v833 = vld [vmem:[#allocation9 + $0x68] sm:$0xff]
        %v834 = vld [vmem:[#allocation9 + $0x70] sm:$0xff]
        %v835 = vld [vmem:[#allocation9 + $0x78] sm:$0xff]
        %vm836 = vcmp.gt.f32.partialorder %v820, 0.0
        %vm837 = vcmp.gt.f32.partialorder %v821, 0.0
        %vm838 = vcmp.gt.f32.partialorder %v822, 0.0
        %vm839 = vcmp.gt.f32.partialorder %v823, 0.0
        %vm840 = vcmp.gt.f32.partialorder %v824, 0.0
        %vm841 = vcmp.gt.f32.partialorder %v825, 0.0
        %vm842 = vcmp.gt.f32.partialorder %v826, 0.0
        %vm843 = vcmp.gt.f32.partialorder %v827, 0.0
        %vm844 = vcmp.gt.f32.partialorder %v828, 0.0
        %vm845 = vcmp.gt.f32.partialorder %v829, 0.0
        %vm846 = vcmp.gt.f32.partialorder %v830, 0.0
        %vm847 = vcmp.gt.f32.partialorder %v831, 0.0
        %vm848 = vcmp.gt.f32.partialorder %v832, 0.0
        %vm849 = vcmp.gt.f32.partialorder %v833, 0.0
        %vm850 = vcmp.gt.f32.partialorder %v834, 0.0
        %vm851 = vcmp.gt.f32.partialorder %v835, 0.0
        %v852 = vld [vmem:[#allocation11] sm:$0xff]
        %v853 = vld [vmem:[#allocation12] sm:$0xff]
        %vm854 = vcmp.gt.f32.partialorder %v852, 0.0
        %vm855 = vcmp.gt.f32.partialorder %v853, 0.0
        %v856 = vld [vmem:[#allocation14] sm:$0xf]
        %v857 = vld [vmem:[#allocation14 + $0x4] sm:$0xf]
        %v858 = vld [vmem:[#allocation14 + $0x8] sm:$0xf]
        %v859 = vld [vmem:[#allocation14 + $0xc] sm:$0xf]
        %v860 = vld [vmem:[#allocation14 + $0x10] sm:$0xf]
        %v861 = vld [vmem:[#allocation14 + $0x14] sm:$0xf]
        %v862 = vld [vmem:[#allocation14 + $0x18] sm:$0xf]
        %v863 = vld [vmem:[#allocation14 + $0x1c] sm:$0xf]
        %v864 = vld [vmem:[#allocation14 + $0x20] sm:$0xf]
        %v865 = vld [vmem:[#allocation14 + $0x24] sm:$0xf]
        %v866 = vld [vmem:[#allocation14 + $0x28] sm:$0xf]
        %v867 = vld [vmem:[#allocation14 + $0x2c] sm:$0xf]
        %v868 = vld [vmem:[#allocation14 + $0x30] sm:$0xf]
        %v869 = vld [vmem:[#allocation14 + $0x34] sm:$0xf]
        %v870 = vld [vmem:[#allocation14 + $0x38] sm:$0xf]
        %v871 = vld [vmem:[#allocation14 + $0x3c] sm:$0xf]
        %v872 = vld [vmem:[#allocation15] sm:$0x1]
        %v874 = vlaneseq
        %v875 = vshrl.u32 %v874, 7
        %v876 = vsub.s32 0, %v875
        %v877 = vrot.slane %v872, %v876
        %v895 = vunpack.c.l.b16 %v856
        %v896 = vunpack.c.l.b16 %v857
        %v897 = vunpack.c.l.b16 %v858
        %v898 = vunpack.c.l.b16 %v859
        %v899 = vunpack.c.l.b16 %v860
        %v900 = vunpack.c.l.b16 %v861
        %v901 = vunpack.c.l.b16 %v862
        %v902 = vunpack.c.l.b16 %v863
        %v903 = vunpack.c.l.b16 %v864
        %v904 = vunpack.c.l.b16 %v865
        %v905 = vunpack.c.l.b16 %v866
        %v906 = vunpack.c.l.b16 %v867
        %v907 = vunpack.c.l.b16 %v868
        %v908 = vunpack.c.l.b16 %v869
        %v909 = vunpack.c.l.b16 %v870
        %v910 = vunpack.c.l.b16 %v871
        %v911 = vpack.c.b16 %v896, %v895
        %v912 = vpack.c.b16 %v898, %v897
        %v913 = vpack.c.b16 %v900, %v899
        %v914 = vpack.c.b16 %v902, %v901
        %v915 = vpack.c.b16 %v904, %v903
        %v916 = vpack.c.b16 %v906, %v905
        %v917 = vpack.c.b16 %v908, %v907
        %v918 = vpack.c.b16 %v910, %v909
        %927 = vmatprep.subr.bf16.mxu0 0
        %928 = vmatpush1.bf16.msra.mxu0 %v911
        %929 = vmatprep.subr.bf16.mxu0 0
        %930 = vmatpush1.bf16.msra.mxu0 %v912
        %931 = vmatprep.subr.bf16.mxu0 0
        %932 = vmatpush1.bf16.msra.mxu0 %v913
        %933 = vmatprep.subr.bf16.mxu0 0
        %934 = vmatpush1.bf16.msra.mxu0 %v914
        %935 = vmatprep.subr.bf16.mxu0 0
        %936 = vmatpush1.bf16.msra.mxu0 %v915
        %937 = vmatprep.subr.bf16.mxu0 0
        %938 = vmatpush1.bf16.msra.mxu0 %v916
        %939 = vmatprep.subr.bf16.mxu0 0
        %940 = vmatpush1.bf16.msra.mxu0 %v917
        %941 = vmatprep.subr.bf16.mxu0 0
        %942 = vmatpush1.bf16.msra.mxu0 %v918
        %943 = vmatprep.subr.bf16.mxu0 0
        %944 = vmatpush1.bf16.msra.mxu0 0
        %945 = vmatprep.subr.bf16.mxu0 0
        %946 = vmatpush1.bf16.msra.mxu0 0
        %947 = vmatprep.subr.bf16.mxu0 0
        %948 = vmatpush1.bf16.msra.mxu0 0
        %949 = vmatprep.subr.bf16.mxu0 0
        %950 = vmatpush1.bf16.msra.mxu0 0
        %951 = vmatprep.subr.bf16.mxu0 0
        %952 = vmatpush1.bf16.msra.mxu0 0
        %953 = vmatprep.subr.bf16.mxu0 0
        %954 = vmatpush1.bf16.msra.mxu0 0
        %955 = vmatprep.subr.bf16.mxu0 0
        %956 = vmatpush1.bf16.msra.mxu0 0
        %957 = vmatprep.subr.bf16.mxu0 0
        %958 = vmatpush1.bf16.msra.mxu0 0
        %959 = vmatprep.mubr.bf16.mxu0 0
        %960 = vmatmul.mubr.bf16.gmra.mrb[0].mxu0 %v814
        %v961 = vpop.f32.mrb[0].mxu0
        %v962 = vadd.f32 %v877, %v961
        %v963 = vpop.f32.mrb[0].mxu0
        %v964 = vpop.f32.mrb[0].mxu0
        %v965 = vadd.f32 %v877, %v964
        %v966 = vpop.f32.mrb[0].mxu0
        %967 = vmatprep.mubr.bf16.mxu0 0
        %968 = vmatmul.mubr.bf16.gmra.mrb[0].mxu0 %v793
        %v969 = vpop.f32.mrb[0].mxu0
        %v970 = vadd.f32 %v877, %v969
        %v971 = vpop.f32.mrb[0].mxu0
        %v972 = vpop.f32.mrb[0].mxu0
        %v973 = vadd.f32 %v877, %v972
        %v974 = vpop.f32.mrb[0].mxu0
        %975 = vmatprep.mubr.bf16.mxu0 0
        %976 = vmatmul.mubr.bf16.gmra.mrb[0].mxu0 %v794
        %v977 = vpop.f32.mrb[0].mxu0
        %v978 = vadd.f32 %v877, %v977
        %v979 = vpop.f32.mrb[0].mxu0
        %v980 = vpop.f32.mrb[0].mxu0
        %v981 = vadd.f32 %v877, %v980
        %v982 = vpop.f32.mrb[0].mxu0
        %983 = vmatprep.mubr.bf16.mxu0 0
        %984 = vmatmul.mubr.bf16.gmra.mrb[0].mxu0 %v795
        %v985 = vpop.f32.mrb[0].mxu0
        %v986 = vadd.f32 %v877, %v985
        %v987 = vpop.f32.mrb[0].mxu0
        %v988 = vpop.f32.mrb[0].mxu0
        %v989 = vadd.f32 %v877, %v988
        %v990 = vpop.f32.mrb[0].mxu0
        %991 = vmatprep.mubr.bf16.mxu0 0
        %992 = vmatmul.mubr.bf16.gmra.mrb[0].mxu0 %v796
        %v993 = vpop.f32.mrb[0].mxu0
        %v994 = vadd.f32 %v877, %v993
        %v995 = vpop.f32.mrb[0].mxu0
        %v996 = vpop.f32.mrb[0].mxu0
        %v997 = vadd.f32 %v877, %v996
        %v998 = vpop.f32.mrb[0].mxu0
        %999 = vmatprep.mubr.bf16.mxu0 0
        %1000 = vmatmul.mubr.bf16.gmra.mrb[0].mxu0 %v797
        %v1001 = vpop.f32.mrb[0].mxu0
        %v1002 = vadd.f32 %v877, %v1001
        %v1003 = vpop.f32.mrb[0].mxu0
        %v1004 = vpop.f32.mrb[0].mxu0
        %v1005 = vadd.f32 %v877, %v1004
        %v1006 = vpop.f32.mrb[0].mxu0
        %1007 = vmatprep.mubr.bf16.mxu0 0
        %1008 = vmatmul.mubr.bf16.gmra.mrb[0].mxu0 %v798
        %v1009 = vpop.f32.mrb[0].mxu0
        %v1010 = vadd.f32 %v877, %v1009
        %v1011 = vpop.f32.mrb[0].mxu0
        %v1012 = vpop.f32.mrb[0].mxu0
        %v1013 = vadd.f32 %v877, %v1012
        %v1014 = vpop.f32.mrb[0].mxu0
        %1015 = vmatprep.mubr.bf16.mxu0 0
        %1016 = vmatmul.mubr.bf16.gmra.mrb[0].mxu0 %v799
        %v1017 = vpop.f32.mrb[0].mxu0
        %v1018 = vadd.f32 %v877, %v1017
        %v1019 = vpop.f32.mrb[0].mxu0
        %v1020 = vpop.f32.mrb[0].mxu0
        %v1021 = vadd.f32 %v877, %v1020
        %v1022 = vpop.f32.mrb[0].mxu0
        %1023 = vmatprep.mubr.bf16.mxu0 0
        %1024 = vmatmul.mubr.bf16.gmra.mrb[0].mxu0 %v818
        %v1025 = vpop.f32.mrb[0].mxu0
        %v1026 = vadd.f32 %v877, %v1025
        %v1027 = vpop.f32.mrb[0].mxu0
        %v1028 = vpop.f32.mrb[0].mxu0
        %v1029 = vadd.f32 %v877, %v1028
        %v1030 = vpop.f32.mrb[0].mxu0
        %1031 = vdwg.mxu0
        %v1032 = vmax.f32 %v962, 0.0
        %v1033 = vmax.f32 %v965, 0.0
        %v1034 = vmax.f32 %v970, 0.0
        %v1035 = vmax.f32 %v973, 0.0
        %v1036 = vmax.f32 %v978, 0.0
        %v1037 = vmax.f32 %v981, 0.0
        %v1038 = vmax.f32 %v986, 0.0
        %v1039 = vmax.f32 %v989, 0.0
        %v1040 = vmax.f32 %v994, 0.0
        %v1041 = vmax.f32 %v997, 0.0
        %v1042 = vmax.f32 %v1002, 0.0
        %v1043 = vmax.f32 %v1005, 0.0
        %v1044 = vmax.f32 %v1010, 0.0
        %v1045 = vmax.f32 %v1013, 0.0
        %v1046 = vmax.f32 %v1018, 0.0
        %v1047 = vmax.f32 %v1021, 0.0
        %v1048 = vmax.f32 %v1026, 0.0
        %v1049 = vmax.f32 %v1029, 0.0
        %v1050 = vsel %vm854, 1, 0
        %v1051 = vsel %vm836, 1, 0
        %v1052 = vsel %vm837, 1, 0
        %v1053 = vsel %vm838, 1, 0
        %v1054 = vsel %vm839, 1, 0
        %v1055 = vsel %vm840, 1, 0
        %v1056 = vsel %vm841, 1, 0
        %v1057 = vsel %vm842, 1, 0
        %v1058 = vsel %vm843, 1, 0
        %v1059 = vsel %vm844, 1, 0
        %v1060 = vsel %vm845, 1, 0
        %v1061 = vsel %vm846, 1, 0
        %v1062 = vsel %vm847, 1, 0
        %v1063 = vsel %vm848, 1, 0
        %v1064 = vsel %vm849, 1, 0
        %v1065 = vsel %vm850, 1, 0
        %v1066 = vsel %vm851, 1, 0
        %v1067 = vsel %vm855, 1, 0
        %1068 = vset.pattern.permute.xlu0 0
        %1069 = vperm.xlu0 %1068, %v1050
        %v1070 = vpop.permute.xlu0 %1069
        %1071 = vset.pattern.permute.xlu0 0
        %1072 = vperm.xlu0 %1071, %v1051
        %v1073 = vpop.permute.xlu0 %1072
        %1074 = vset.pattern.permute.xlu0 0
        %1075 = vperm.xlu0 %1074, %v1052
        %v1076 = vpop.permute.xlu0 %1075
        %1077 = vset.pattern.permute.xlu0 0
        %1078 = vperm.xlu0 %1077, %v1053
        %v1079 = vpop.permute.xlu0 %1078
        %1080 = vset.pattern.permute.xlu0 0
        %1081 = vperm.xlu0 %1080, %v1054
        %v1082 = vpop.permute.xlu0 %1081
        %1083 = vset.pattern.permute.xlu0 0
        %1084 = vperm.xlu0 %1083, %v1055
        %v1085 = vpop.permute.xlu0 %1084
        %1086 = vset.pattern.permute.xlu0 0
        %1087 = vperm.xlu0 %1086, %v1056
        %v1088 = vpop.permute.xlu0 %1087
        %1089 = vset.pattern.permute.xlu0 0
        %1090 = vperm.xlu0 %1089, %v1057
        %v1091 = vpop.permute.xlu0 %1090
        %1092 = vset.pattern.permute.xlu0 0
        %1093 = vperm.xlu0 %1092, %v1058
        %v1094 = vpop.permute.xlu0 %1093
        %1095 = vset.pattern.permute.xlu0 0
        %1096 = vperm.xlu0 %1095, %v1059
        %v1097 = vpop.permute.xlu0 %1096
        %1098 = vset.pattern.permute.xlu0 0
        %1099 = vperm.xlu0 %1098, %v1060
        %v1100 = vpop.permute.xlu0 %1099
        %1101 = vset.pattern.permute.xlu0 0
        %1102 = vperm.xlu0 %1101, %v1061
        %v1103 = vpop.permute.xlu0 %1102
        %1104 = vset.pattern.permute.xlu0 0
        %1105 = vperm.xlu0 %1104, %v1062
        %v1106 = vpop.permute.xlu0 %1105
        %1107 = vset.pattern.permute.xlu0 0
        %1108 = vperm.xlu0 %1107, %v1063
        %v1109 = vpop.permute.xlu0 %1108
        %1110 = vset.pattern.permute.xlu0 0
        %1111 = vperm.xlu0 %1110, %v1064
        %v1112 = vpop.permute.xlu0 %1111
        %1113 = vset.pattern.permute.xlu0 0
        %1114 = vperm.xlu0 %1113, %v1065
        %v1115 = vpop.permute.xlu0 %1114
        %1116 = vset.pattern.permute.xlu0 0
        %1117 = vperm.xlu0 %1116, %v1066
        %v1118 = vpop.permute.xlu0 %1117
        %1119 = vset.pattern.permute.xlu0 0
        %1120 = vperm.xlu0 %1119, %v1067
        %v1121 = vpop.permute.xlu0 %1120
        %vm1122 = vcmp.eq.s32.totalorder %v1070, 1
        %vm1123 = vcmp.eq.s32.totalorder %v1073, 1
        %vm1124 = vcmp.eq.s32.totalorder %v1076, 1
        %vm1125 = vcmp.eq.s32.totalorder %v1079, 1
        %vm1126 = vcmp.eq.s32.totalorder %v1082, 1
        %vm1127 = vcmp.eq.s32.totalorder %v1085, 1
        %vm1128 = vcmp.eq.s32.totalorder %v1088, 1
        %vm1129 = vcmp.eq.s32.totalorder %v1091, 1
        %vm1130 = vcmp.eq.s32.totalorder %v1094, 1
        %vm1131 = vcmp.eq.s32.totalorder %v1097, 1
        %vm1132 = vcmp.eq.s32.totalorder %v1100, 1
        %vm1133 = vcmp.eq.s32.totalorder %v1103, 1
        %vm1134 = vcmp.eq.s32.totalorder %v1106, 1
        %vm1135 = vcmp.eq.s32.totalorder %v1109, 1
        %vm1136 = vcmp.eq.s32.totalorder %v1112, 1
        %vm1137 = vcmp.eq.s32.totalorder %v1115, 1
        %vm1138 = vcmp.eq.s32.totalorder %v1118, 1
        %vm1139 = vcmp.eq.s32.totalorder %v1121, 1
        %v1140 = vsel %vm1122, %v1032, 0.0
        %v1141 = vsel %vm1123, %v1033, 0.0
        %v1142 = vsel %vm1124, %v1034, 0.0
        %v1143 = vsel %vm1125, %v1035, 0.0
        %v1144 = vsel %vm1126, %v1036, 0.0
        %v1145 = vsel %vm1127, %v1037, 0.0
        %v1146 = vsel %vm1128, %v1038, 0.0
        %v1147 = vsel %vm1129, %v1039, 0.0
        %v1148 = vsel %vm1130, %v1040, 0.0
        %v1149 = vsel %vm1131, %v1041, 0.0
        %v1150 = vsel %vm1132, %v1042, 0.0
        %v1151 = vsel %vm1133, %v1043, 0.0
        %v1152 = vsel %vm1134, %v1044, 0.0
        %v1153 = vsel %vm1135, %v1045, 0.0
        %v1154 = vsel %vm1136, %v1046, 0.0
        %v1155 = vsel %vm1137, %v1047, 0.0
        %v1156 = vsel %vm1138, %v1048, 0.0
        %v1157 = vsel %vm1139, %v1049, 0.0
        %v1158 = vpack.c.bf16 %v1141, %v1140
        %v1159 = vpack.c.bf16 %v1143, %v1142
        %v1160 = vpack.c.bf16 %v1145, %v1144
        %v1161 = vpack.c.bf16 %v1147, %v1146
        %v1162 = vpack.c.bf16 %v1149, %v1148
        %v1163 = vpack.c.bf16 %v1151, %v1150
        %v1164 = vpack.c.bf16 %v1153, %v1152
        %v1165 = vpack.c.bf16 %v1155, %v1154
        %v1166 = vpack.c.bf16 %v1157, %v1156
        %vm1176 = vcmask 1043456
        %v1177 = vrot.slane %v1158, 4
        %v1178 = vrot.slane %v1159, 4
        %v1179 = vsel %vm1176, %v1177, %v1178
        %v1180 = vrot.slane %v1160, 4
        %v1181 = vsel %vm1176, %v1178, %v1180
        %v1182 = vrot.slane %v1161, 4
        %v1183 = vsel %vm1176, %v1180, %v1182
        %v1184 = vrot.slane %v1162, 4
        %v1185 = vsel %vm1176, %v1182, %v1184
        %v1186 = vrot.slane %v1163, 4
        %v1187 = vsel %vm1176, %v1184, %v1186
        %v1188 = vrot.slane %v1164, 4
        %v1189 = vsel %vm1176, %v1186, %v1188
        %v1190 = vrot.slane %v1165, 4
        %v1191 = vsel %vm1176, %v1188, %v1190
        %v1192 = vrot.slane %v1166, 4
        %v1193 = vsel %vm1176, %v1190, %v1192
        %1204 = vst [vmem:[#allocation2] sm:$0xf0] %v1177
        %1205 = vst [vmem:[#allocation2 + $0x8] sm:$0xff] %v1179
        %1206 = vst [vmem:[#allocation2 + $0x10] sm:$0xff] %v1181
        %1207 = vst [vmem:[#allocation2 + $0x18] sm:$0xff] %v1183
        %1208 = vst [vmem:[#allocation2 + $0x20] sm:$0xff] %v1185
        %1209 = vst [vmem:[#allocation2 + $0x28] sm:$0xff] %v1187
        %1210 = vst [vmem:[#allocation2 + $0x30] sm:$0xff] %v1189
        %1211 = vst [vmem:[#allocation2 + $0x38] sm:$0xff] %v1191
        %1212 = vst [vmem:[#allocation2 + $0x40] sm:$0xff] %v1193
        %1213 = vst [vmem:[#allocation2 + $0x48] sm:$0xf] %v1192
        %v1214 = vld [vmem:[#allocation2] sm:$0xf8]
        %v1215 = vld [vmem:[#allocation2 + $0x8] sm:$0xff]
        %v1216 = vld [vmem:[#allocation2 + $0x10] sm:$0xff]
        %v1217 = vld [vmem:[#allocation2 + $0x18] sm:$0xff]
        %v1218 = vld [vmem:[#allocation2 + $0x20] sm:$0xff]
        %v1219 = vld [vmem:[#allocation2 + $0x28] sm:$0xff]
        %v1220 = vld [vmem:[#allocation2 + $0x30] sm:$0xff]
        %v1221 = vld [vmem:[#allocation2 + $0x38] sm:$0xff]
        %v1222 = vld [vmem:[#allocation2 + $0x40] sm:$0xf]
        %v1223 = vld [vmem:[#allocation2] sm:$0xf0]
        %v1224 = vld [vmem:[#allocation2 + $0x40] sm:$0x1f]
        %v1225 = vld [vmem:[#allocation2] sm:$0x80]
        %v1226 = vld [vmem:[#allocation2 + $0x40] sm:$0xff]
        %v1227 = vld [vmem:[#allocation2 + $0x8] sm:$0xff]
        %v1228 = vld [vmem:[#allocation2 + $0x10] sm:$0xff]
        %v1229 = vld [vmem:[#allocation2 + $0x18] sm:$0xff]
        %v1230 = vld [vmem:[#allocation2 + $0x20] sm:$0xff]
        %v1231 = vld [vmem:[#allocation2 + $0x28] sm:$0xff]
        %v1232 = vld [vmem:[#allocation2 + $0x30] sm:$0xff]
        %v1233 = vld [vmem:[#allocation2 + $0x38] sm:$0xff]
        %v1234 = vld [vmem:[#allocation2 + $0x40] sm:$0xff]
        %v1235 = vld [vmem:[#allocation2 + $0x48] sm:$0x1]
        %v1236 = vld [vmem:[#allocation2 + $0x8] sm:$0xf8]
        %v1237 = vld [vmem:[#allocation2 + $0x48] sm:$0xf]
        %v1238 = vld [vmem:[#allocation2 + $0x8] sm:$0xf0]
        %v1239 = vld [vmem:[#allocation2 + $0x48] sm:$0x1f]
        %vm1240 = vsmask.f32 7424
        %v1242 = vshrl.u32 %v1223, 16
        %v1244 = vshll.u32 %v1223, 16
        %v1246 = vrot.slane %v1244, 1
        %v1247 = vor.u32 %v1242, %v1246
        %v1249 = vshll.u32 %v1215, 16
        %v1251 = vrot.slane %v1249, 1
        %v1252 = vsel %vm1240, %v1247, %v1251
        %v1253 = vshrl.u32 %v1215, 16
        %v1255 = vor.u32 %v1253, %v1251
        %v1257 = vshll.u32 %v1216, 16
        %v1259 = vrot.slane %v1257, 1
        %v1260 = vsel %vm1240, %v1255, %v1259
        %v1261 = vshrl.u32 %v1216, 16
        %v1263 = vor.u32 %v1261, %v1259
        %v1265 = vshll.u32 %v1217, 16
        %v1267 = vrot.slane %v1265, 1
        %v1268 = vsel %vm1240, %v1263, %v1267
        %v1269 = vshrl.u32 %v1217, 16
        %v1271 = vor.u32 %v1269, %v1267
        %v1273 = vshll.u32 %v1218, 16
        %v1275 = vrot.slane %v1273, 1
        %v1276 = vsel %vm1240, %v1271, %v1275
        %v1277 = vshrl.u32 %v1218, 16
        %v1279 = vor.u32 %v1277, %v1275
        %v1281 = vshll.u32 %v1219, 16
        %v1283 = vrot.slane %v1281, 1
        %v1284 = vsel %vm1240, %v1279, %v1283
        %v1285 = vshrl.u32 %v1219, 16
        %v1287 = vor.u32 %v1285, %v1283
        %v1289 = vshll.u32 %v1220, 16
        %v1291 = vrot.slane %v1289, 1
        %v1292 = vsel %vm1240, %v1287, %v1291
        %v1293 = vshrl.u32 %v1220, 16
        %v1295 = vor.u32 %v1293, %v1291
        %v1297 = vshll.u32 %v1221, 16
        %v1299 = vrot.slane %v1297, 1
        %v1300 = vsel %vm1240, %v1295, %v1299
        %v1301 = vshrl.u32 %v1221, 16
        %v1303 = vor.u32 %v1301, %v1299
        %v1305 = vshll.u32 %v1222, 16
        %v1307 = vrot.slane %v1305, 1
        %v1308 = vsel %vm1240, %v1303, %v1307
        %v1309 = vshrl.u32 %v1222, 16
        %v1311 = vor.u32 %v1309, %v1307
        %vm1321 = vcmask 1046528
        %v1322 = vrot.slane %v1223, 1
        %v1323 = vrot.slane %v1215, 1
        %v1324 = vsel %vm1321, %v1322, %v1323
        %v1325 = vrot.slane %v1216, 1
        %v1326 = vsel %vm1321, %v1323, %v1325
        %v1327 = vrot.slane %v1217, 1
        %v1328 = vsel %vm1321, %v1325, %v1327
        %v1329 = vrot.slane %v1218, 1
        %v1330 = vsel %vm1321, %v1327, %v1329
        %v1331 = vrot.slane %v1219, 1
        %v1332 = vsel %vm1321, %v1329, %v1331
        %v1333 = vrot.slane %v1220, 1
        %v1334 = vsel %vm1321, %v1331, %v1333
        %v1335 = vrot.slane %v1221, 1
        %v1336 = vsel %vm1321, %v1333, %v1335
        %v1337 = vrot.slane %v1224, 1
        %v1338 = vsel %vm1321, %v1335, %v1337
        %v1341 = vrot.slane %v1225, 4
        %v1342 = vrot.slane %v1215, 4
        %v1343 = vsel %vm1176, %v1341, %v1342
        %v1344 = vrot.slane %v1216, 4
        %v1345 = vsel %vm1176, %v1342, %v1344
        %v1346 = vrot.slane %v1217, 4
        %v1347 = vsel %vm1176, %v1344, %v1346
        %v1348 = vrot.slane %v1218, 4
        %v1349 = vsel %vm1176, %v1346, %v1348
        %v1350 = vrot.slane %v1219, 4
        %v1351 = vsel %vm1176, %v1348, %v1350
        %v1352 = vrot.slane %v1220, 4
        %v1353 = vsel %vm1176, %v1350, %v1352
        %v1354 = vrot.slane %v1221, 4
        %v1355 = vsel %vm1176, %v1352, %v1354
        %v1356 = vrot.slane %v1226, 4
        %v1357 = vsel %vm1176, %v1354, %v1356
        %vm1358 = vsmask.f32 3328
        %v1359 = vrot.slane %v1253, 4
        %v1360 = vrot.slane %v1249, 5
        %v1361 = vor.u32 %v1359, %v1360
        %v1362 = vrot.slane %v1261, 4
        %v1363 = vrot.slane %v1257, 5
        %v1364 = vor.u32 %v1362, %v1363
        %v1365 = vsel %vm1358, %v1361, %v1364
        %v1366 = vrot.slane %v1269, 4
        %v1367 = vrot.slane %v1265, 5
        %v1368 = vor.u32 %v1366, %v1367
        %v1369 = vsel %vm1358, %v1364, %v1368
        %v1370 = vrot.slane %v1277, 4
        %v1371 = vrot.slane %v1273, 5
        %v1372 = vor.u32 %v1370, %v1371
        %v1373 = vsel %vm1358, %v1368, %v1372
        %v1374 = vrot.slane %v1285, 4
        %v1375 = vrot.slane %v1281, 5
        %v1376 = vor.u32 %v1374, %v1375
        %v1377 = vsel %vm1358, %v1372, %v1376
        %v1378 = vrot.slane %v1293, 4
        %v1379 = vrot.slane %v1289, 5
        %v1380 = vor.u32 %v1378, %v1379
        %v1381 = vsel %vm1358, %v1376, %v1380
        %v1382 = vrot.slane %v1301, 4
        %v1383 = vrot.slane %v1297, 5
        %v1384 = vor.u32 %v1382, %v1383
        %v1385 = vsel %vm1358, %v1380, %v1384
        %v1387 = vshrl.u32 %v1226, 16
        %v1389 = vrot.slane %v1387, 4
        %v1390 = vshll.u32 %v1226, 16
        %v1392 = vrot.slane %v1390, 5
        %v1393 = vor.u32 %v1389, %v1392
        %v1394 = vsel %vm1358, %v1384, %v1393
        %vm1404 = vcmask 1042432
        %v1405 = vrot.slane %v1227, 5
        %v1406 = vrot.slane %v1228, 5
        %v1407 = vsel %vm1404, %v1405, %v1406
        %v1408 = vrot.slane %v1229, 5
        %v1409 = vsel %vm1404, %v1406, %v1408
        %v1410 = vrot.slane %v1230, 5
        %v1411 = vsel %vm1404, %v1408, %v1410
        %v1412 = vrot.slane %v1231, 5
        %v1413 = vsel %vm1404, %v1410, %v1412
        %v1414 = vrot.slane %v1232, 5
        %v1415 = vsel %vm1404, %v1412, %v1414
        %v1416 = vrot.slane %v1233, 5
        %v1417 = vsel %vm1404, %v1414, %v1416
        %v1418 = vrot.slane %v1234, 5
        %v1419 = vsel %vm1404, %v1416, %v1418
        %v1420 = vrot.slane %v1235, 5
        %v1421 = vsel %vm1404, %v1418, %v1420
        %v1423 = vshrl.u32 %v1238, 16
        %v1425 = vshll.u32 %v1238, 16
        %v1427 = vrot.slane %v1425, 1
        %v1428 = vor.u32 %v1423, %v1427
        %v1430 = vshll.u32 %v1228, 16
        %v1432 = vrot.slane %v1430, 1
        %v1433 = vsel %vm1240, %v1428, %v1432
        %v1434 = vshrl.u32 %v1228, 16
        %v1436 = vor.u32 %v1434, %v1432
        %v1438 = vshll.u32 %v1229, 16
        %v1440 = vrot.slane %v1438, 1
        %v1441 = vsel %vm1240, %v1436, %v1440
        %v1442 = vshrl.u32 %v1229, 16
        %v1444 = vor.u32 %v1442, %v1440
        %v1446 = vshll.u32 %v1230, 16
        %v1448 = vrot.slane %v1446, 1
        %v1449 = vsel %vm1240, %v1444, %v1448
        %v1450 = vshrl.u32 %v1230, 16
        %v1452 = vor.u32 %v1450, %v1448
        %v1454 = vshll.u32 %v1231, 16
        %v1456 = vrot.slane %v1454, 1
        %v1457 = vsel %vm1240, %v1452, %v1456
        %v1458 = vshrl.u32 %v1231, 16
        %v1460 = vor.u32 %v1458, %v1456
        %v1462 = vshll.u32 %v1232, 16
        %v1464 = vrot.slane %v1462, 1
        %v1465 = vsel %vm1240, %v1460, %v1464
        %v1466 = vshrl.u32 %v1232, 16
        %v1468 = vor.u32 %v1466, %v1464
        %v1470 = vshll.u32 %v1233, 16
        %v1472 = vrot.slane %v1470, 1
        %v1473 = vsel %vm1240, %v1468, %v1472
        %v1474 = vshrl.u32 %v1233, 16
        %v1476 = vor.u32 %v1474, %v1472
        %v1478 = vshll.u32 %v1234, 16
        %v1480 = vrot.slane %v1478, 1
        %v1481 = vsel %vm1240, %v1476, %v1480
        %v1482 = vshrl.u32 %v1234, 16
        %v1484 = vor.u32 %v1482, %v1480
        %v1486 = vshll.u32 %v1237, 16
        %v1488 = vrot.slane %v1486, 1
        %v1489 = vsel %vm1240, %v1484, %v1488
        %v1490 = vshrl.u32 %v1237, 16
        %v1492 = vor.u32 %v1490, %v1488
        %v1495 = vrot.slane %v1238, 1
        %v1496 = vrot.slane %v1228, 1
        %v1497 = vsel %vm1321, %v1495, %v1496
        %v1498 = vrot.slane %v1229, 1
        %v1499 = vsel %vm1321, %v1496, %v1498
        %v1500 = vrot.slane %v1230, 1
        %v1501 = vsel %vm1321, %v1498, %v1500
        %v1502 = vrot.slane %v1231, 1
        %v1503 = vsel %vm1321, %v1500, %v1502
        %v1504 = vrot.slane %v1232, 1
        %v1505 = vsel %vm1321, %v1502, %v1504
        %v1506 = vrot.slane %v1233, 1
        %v1507 = vsel %vm1321, %v1504, %v1506
        %v1508 = vrot.slane %v1234, 1
        %v1509 = vsel %vm1321, %v1506, %v1508
        %v1510 = vrot.slane %v1239, 1
        %v1511 = vsel %vm1321, %v1508, %v1510
        %v1512 = vld [vmem:[#allocation17] sm:$0xf]
        %v1513 = vld [vmem:[#allocation17 + $0x4] sm:$0xf]
        %v1514 = vld [vmem:[#allocation17 + $0x8] sm:$0xf]
        %v1515 = vld [vmem:[#allocation17 + $0xc] sm:$0xf]
        %v1516 = vld [vmem:[#allocation17 + $0x10] sm:$0xf]
        %v1517 = vld [vmem:[#allocation17 + $0x14] sm:$0xf]
        %v1518 = vld [vmem:[#allocation17 + $0x18] sm:$0xf]
        %v1519 = vld [vmem:[#allocation17 + $0x1c] sm:$0xf]
        %v1520 = vld [vmem:[#allocation17 + $0x20] sm:$0xf]
        %v1521 = vld [vmem:[#allocation17 + $0x24] sm:$0xf]
        %v1522 = vld [vmem:[#allocation17 + $0x28] sm:$0xf]
        %v1523 = vld [vmem:[#allocation17 + $0x2c] sm:$0xf]
        %v1524 = vld [vmem:[#allocation17 + $0x30] sm:$0xf]
        %v1525 = vld [vmem:[#allocation17 + $0x34] sm:$0xf]
        %v1526 = vld [vmem:[#allocation17 + $0x38] sm:$0xf]
        %v1527 = vld [vmem:[#allocation17 + $0x3c] sm:$0xf]
        %v1528 = vld [vmem:[#allocation17 + $0x40] sm:$0xf]
        %v1529 = vld [vmem:[#allocation17 + $0x44] sm:$0xf]
        %v1530 = vld [vmem:[#allocation17 + $0x48] sm:$0xf]
        %v1531 = vld [vmem:[#allocation17 + $0x4c] sm:$0xf]
        %v1532 = vld [vmem:[#allocation17 + $0x50] sm:$0xf]
        %v1533 = vld [vmem:[#allocation17 + $0x54] sm:$0xf]
        %v1534 = vld [vmem:[#allocation17 + $0x58] sm:$0xf]
        %v1535 = vld [vmem:[#allocation17 + $0x5c] sm:$0xf]
        %v1536 = vld [vmem:[#allocation17 + $0x60] sm:$0xf]
        %v1537 = vld [vmem:[#allocation17 + $0x64] sm:$0xf]
        %v1538 = vld [vmem:[#allocation17 + $0x68] sm:$0xf]
        %v1539 = vld [vmem:[#allocation17 + $0x6c] sm:$0xf]
        %v1540 = vld [vmem:[#allocation17 + $0x70] sm:$0xf]
        %v1541 = vld [vmem:[#allocation17 + $0x74] sm:$0xf]
        %v1542 = vld [vmem:[#allocation17 + $0x78] sm:$0xf]
        %v1543 = vld [vmem:[#allocation17 + $0x7c] sm:$0xf]
        %v1544 = vld [vmem:[#allocation17 + $0x80] sm:$0xf]
        %v1545 = vld [vmem:[#allocation17 + $0x84] sm:$0xf]
        %v1546 = vld [vmem:[#allocation17 + $0x88] sm:$0xf]
        %v1547 = vld [vmem:[#allocation17 + $0x8c] sm:$0xf]
        %v1548 = vld [vmem:[#allocation17 + $0x90] sm:$0xf]
        %v1549 = vld [vmem:[#allocation17 + $0x94] sm:$0xf]
        %v1550 = vld [vmem:[#allocation17 + $0x98] sm:$0xf]
        %v1551 = vld [vmem:[#allocation17 + $0x9c] sm:$0xf]
        %v1552 = vld [vmem:[#allocation17 + $0xa0] sm:$0xf]
        %v1553 = vld [vmem:[#allocation17 + $0xa4] sm:$0xf]
        %v1554 = vld [vmem:[#allocation17 + $0xa8] sm:$0xf]
        %v1555 = vld [vmem:[#allocation17 + $0xac] sm:$0xf]
        %v1556 = vld [vmem:[#allocation17 + $0xb0] sm:$0xf]
        %v1557 = vld [vmem:[#allocation17 + $0xb4] sm:$0xf]
        %v1558 = vld [vmem:[#allocation17 + $0xb8] sm:$0xf]
        %v1559 = vld [vmem:[#allocation17 + $0xbc] sm:$0xf]
        %v1560 = vld [vmem:[#allocation17 + $0xc0] sm:$0xf]
        %v1561 = vld [vmem:[#allocation17 + $0xc4] sm:$0xf]
        %v1562 = vld [vmem:[#allocation17 + $0xc8] sm:$0xf]
        %v1563 = vld [vmem:[#allocation17 + $0xcc] sm:$0xf]
        %v1564 = vld [vmem:[#allocation17 + $0xd0] sm:$0xf]
        %v1565 = vld [vmem:[#allocation17 + $0xd4] sm:$0xf]
        %v1566 = vld [vmem:[#allocation17 + $0xd8] sm:$0xf]
        %v1567 = vld [vmem:[#allocation17 + $0xdc] sm:$0xf]
        %v1568 = vld [vmem:[#allocation17 + $0xe0] sm:$0xf]
        %v1569 = vld [vmem:[#allocation17 + $0xe4] sm:$0xf]
        %v1570 = vld [vmem:[#allocation17 + $0xe8] sm:$0xf]
        %v1571 = vld [vmem:[#allocation17 + $0xec] sm:$0xf]
        %v1572 = vld [vmem:[#allocation17 + $0xf0] sm:$0xf]
        %v1573 = vld [vmem:[#allocation17 + $0xf4] sm:$0xf]
        %v1574 = vld [vmem:[#allocation17 + $0xf8] sm:$0xf]
        %v1575 = vld [vmem:[#allocation17 + $0xfc] sm:$0xf]
        %v1576 = vld [vmem:[#allocation17 + $0x100] sm:$0xf]
        %v1577 = vld [vmem:[#allocation17 + $0x104] sm:$0xf]
        %v1578 = vld [vmem:[#allocation17 + $0x108] sm:$0xf]
        %v1579 = vld [vmem:[#allocation17 + $0x10c] sm:$0xf]
        %v1580 = vld [vmem:[#allocation17 + $0x110] sm:$0xf]
        %v1581 = vld [vmem:[#allocation17 + $0x114] sm:$0xf]
        %v1582 = vld [vmem:[#allocation17 + $0x118] sm:$0xf]
        %v1583 = vld [vmem:[#allocation17 + $0x11c] sm:$0xf]
        %v1584 = vld [vmem:[#allocation17 + $0x120] sm:$0xf]
        %v1585 = vld [vmem:[#allocation17 + $0x124] sm:$0xf]
        %v1586 = vld [vmem:[#allocation17 + $0x128] sm:$0xf]
        %v1587 = vld [vmem:[#allocation17 + $0x12c] sm:$0xf]
        %v1588 = vld [vmem:[#allocation17 + $0x130] sm:$0xf]
        %v1589 = vld [vmem:[#allocation17 + $0x134] sm:$0xf]
        %v1590 = vld [vmem:[#allocation17 + $0x138] sm:$0xf]
        %v1591 = vld [vmem:[#allocation17 + $0x13c] sm:$0xf]
        %v1592 = vld [vmem:[#allocation17 + $0x140] sm:$0xf]
        %v1593 = vld [vmem:[#allocation17 + $0x144] sm:$0xf]
        %v1594 = vld [vmem:[#allocation17 + $0x148] sm:$0xf]
        %v1595 = vld [vmem:[#allocation17 + $0x14c] sm:$0xf]
        %v1596 = vld [vmem:[#allocation17 + $0x150] sm:$0xf]
        %v1597 = vld [vmem:[#allocation17 + $0x154] sm:$0xf]
        %v1598 = vld [vmem:[#allocation17 + $0x158] sm:$0xf]
        %v1599 = vld [vmem:[#allocation17 + $0x15c] sm:$0xf]
        %v1600 = vld [vmem:[#allocation17 + $0x160] sm:$0xf]
        %v1601 = vld [vmem:[#allocation17 + $0x164] sm:$0xf]
        %v1602 = vld [vmem:[#allocation17 + $0x168] sm:$0xf]
        %v1603 = vld [vmem:[#allocation17 + $0x16c] sm:$0xf]
        %v1604 = vld [vmem:[#allocation17 + $0x170] sm:$0xf]
        %v1605 = vld [vmem:[#allocation17 + $0x174] sm:$0xf]
        %v1606 = vld [vmem:[#allocation17 + $0x178] sm:$0xf]
        %v1607 = vld [vmem:[#allocation17 + $0x17c] sm:$0xf]
        %v1608 = vld [vmem:[#allocation17 + $0x180] sm:$0xf]
        %v1609 = vld [vmem:[#allocation17 + $0x184] sm:$0xf]
        %v1610 = vld [vmem:[#allocation17 + $0x188] sm:$0xf]
        %v1611 = vld [vmem:[#allocation17 + $0x18c] sm:$0xf]
        %v1612 = vld [vmem:[#allocation17 + $0x190] sm:$0xf]
        %v1613 = vld [vmem:[#allocation17 + $0x194] sm:$0xf]
        %v1614 = vld [vmem:[#allocation17 + $0x198] sm:$0xf]
        %v1615 = vld [vmem:[#allocation17 + $0x19c] sm:$0xf]
        %v1616 = vld [vmem:[#allocation17 + $0x1a0] sm:$0xf]
        %v1617 = vld [vmem:[#allocation17 + $0x1a4] sm:$0xf]
        %v1618 = vld [vmem:[#allocation17 + $0x1a8] sm:$0xf]
        %v1619 = vld [vmem:[#allocation17 + $0x1ac] sm:$0xf]
        %v1620 = vld [vmem:[#allocation17 + $0x1b0] sm:$0xf]
        %v1621 = vld [vmem:[#allocation17 + $0x1b4] sm:$0xf]
        %v1622 = vld [vmem:[#allocation17 + $0x1b8] sm:$0xf]
        %v1623 = vld [vmem:[#allocation17 + $0x1bc] sm:$0xf]
        %v1624 = vld [vmem:[#allocation17 + $0x1c0] sm:$0xf]
        %v1625 = vld [vmem:[#allocation17 + $0x1c4] sm:$0xf]
        %v1626 = vld [vmem:[#allocation17 + $0x1c8] sm:$0xf]
        %v1627 = vld [vmem:[#allocation17 + $0x1cc] sm:$0xf]
        %v1628 = vld [vmem:[#allocation17 + $0x1d0] sm:$0xf]
        %v1629 = vld [vmem:[#allocation17 + $0x1d4] sm:$0xf]
        %v1630 = vld [vmem:[#allocation17 + $0x1d8] sm:$0xf]
        %v1631 = vld [vmem:[#allocation17 + $0x1dc] sm:$0xf]
        %v1632 = vld [vmem:[#allocation17 + $0x1e0] sm:$0xf]
        %v1633 = vld [vmem:[#allocation17 + $0x1e4] sm:$0xf]
        %v1634 = vld [vmem:[#allocation17 + $0x1e8] sm:$0xf]
        %v1635 = vld [vmem:[#allocation17 + $0x1ec] sm:$0xf]
        %v1636 = vld [vmem:[#allocation17 + $0x1f0] sm:$0xf]
        %v1637 = vld [vmem:[#allocation17 + $0x1f4] sm:$0xf]
        %v1638 = vld [vmem:[#allocation17 + $0x1f8] sm:$0xf]
        %v1639 = vld [vmem:[#allocation17 + $0x1fc] sm:$0xf]
        %v1640 = vld [vmem:[#allocation17 + $0x200] sm:$0xf]
        %v1641 = vld [vmem:[#allocation17 + $0x204] sm:$0xf]
        %v1642 = vld [vmem:[#allocation17 + $0x208] sm:$0xf]
        %v1643 = vld [vmem:[#allocation17 + $0x20c] sm:$0xf]
        %v1644 = vld [vmem:[#allocation17 + $0x210] sm:$0xf]
        %v1645 = vld [vmem:[#allocation17 + $0x214] sm:$0xf]
        %v1646 = vld [vmem:[#allocation17 + $0x218] sm:$0xf]
        %v1647 = vld [vmem:[#allocation17 + $0x21c] sm:$0xf]
        %v1648 = vld [vmem:[#allocation17 + $0x220] sm:$0xf]
        %v1649 = vld [vmem:[#allocation17 + $0x224] sm:$0xf]
        %v1650 = vld [vmem:[#allocation17 + $0x228] sm:$0xf]
        %v1651 = vld [vmem:[#allocation17 + $0x22c] sm:$0xf]
        %v1652 = vld [vmem:[#allocation17 + $0x230] sm:$0xf]
        %v1653 = vld [vmem:[#allocation17 + $0x234] sm:$0xf]
        %v1654 = vld [vmem:[#allocation17 + $0x238] sm:$0xf]
        %v1655 = vld [vmem:[#allocation17 + $0x23c] sm:$0xf]
        %v1656 = vld [vmem:[#allocation18] sm:$0x1]
        %v1658 = vlaneseq
        %v1659 = vshrl.u32 %v1658, 7
        %v1660 = vsub.s32 0, %v1659
        %v1661 = vrot.slane %v1656, %v1660
        %vm1663 = vsmask.f32 4352
        %v1665 = vshrl.u32 %v1214, 16
        %v1667 = vrot.slane %v1665, 3
        %v1668 = vshll.u32 %v1214, 16
        %v1670 = vrot.slane %v1668, 4
        %v1671 = vor.u32 %v1667, %v1670
        %v1672 = vrot.slane %v1253, 3
        %v1673 = vrot.slane %v1249, 4
        %v1674 = vor.u32 %v1672, %v1673
        %v1675 = vsel %vm1663, %v1671, %v1674
        %v1677 = vshrl.u32 %v1252, 16
        %v1679 = vrot.slane %v1677, 3
        %v1680 = vshll.u32 %v1252, 16
        %v1682 = vrot.slane %v1680, 4
        %v1683 = vor.u32 %v1679, %v1682
        %v1685 = vshrl.u32 %v1260, 16
        %v1687 = vrot.slane %v1685, 3
        %v1688 = vshll.u32 %v1260, 16
        %v1690 = vrot.slane %v1688, 4
        %v1691 = vor.u32 %v1687, %v1690
        %v1692 = vsel %vm1663, %v1683, %v1691
        %v1694 = vshrl.u32 %v1324, 16
        %v1696 = vrot.slane %v1694, 3
        %v1697 = vshll.u32 %v1324, 16
        %v1699 = vrot.slane %v1697, 4
        %v1700 = vor.u32 %v1696, %v1699
        %v1702 = vshrl.u32 %v1326, 16
        %v1704 = vrot.slane %v1702, 3
        %v1705 = vshll.u32 %v1326, 16
        %v1707 = vrot.slane %v1705, 4
        %v1708 = vor.u32 %v1704, %v1707
        %v1709 = vsel %vm1663, %v1700, %v1708
        %v1711 = vshrl.u32 %v1343, 16
        %v1713 = vrot.slane %v1711, 3
        %v1714 = vshll.u32 %v1343, 16
        %v1716 = vrot.slane %v1714, 4
        %v1717 = vor.u32 %v1713, %v1716
        %v1719 = vshrl.u32 %v1345, 16
        %v1721 = vrot.slane %v1719, 3
        %v1722 = vshll.u32 %v1345, 16
        %v1724 = vrot.slane %v1722, 4
        %v1725 = vor.u32 %v1721, %v1724
        %v1726 = vsel %vm1663, %v1717, %v1725
        %v1728 = vshrl.u32 %v1361, 16
        %v1730 = vrot.slane %v1728, 3
        %v1731 = vshll.u32 %v1361, 16
        %v1733 = vrot.slane %v1731, 4
        %v1734 = vor.u32 %v1730, %v1733
        %v1736 = vshrl.u32 %v1365, 16
        %v1738 = vrot.slane %v1736, 3
        %v1739 = vshll.u32 %v1365, 16
        %v1741 = vrot.slane %v1739, 4
        %v1742 = vor.u32 %v1738, %v1741
        %v1743 = vsel %vm1663, %v1734, %v1742
        %v1745 = vshrl.u32 %v1405, 16
        %v1747 = vrot.slane %v1745, 3
        %v1748 = vshll.u32 %v1405, 16
        %v1750 = vrot.slane %v1748, 4
        %v1751 = vor.u32 %v1747, %v1750
        %v1753 = vshrl.u32 %v1407, 16
        %v1755 = vrot.slane %v1753, 3
        %v1756 = vshll.u32 %v1407, 16
        %v1758 = vrot.slane %v1756, 4
        %v1759 = vor.u32 %v1755, %v1758
        %v1760 = vsel %vm1663, %v1751, %v1759
        %v1762 = vshrl.u32 %v1236, 16
        %v1764 = vrot.slane %v1762, 3
        %v1765 = vshll.u32 %v1236, 16
        %v1767 = vrot.slane %v1765, 4
        %v1768 = vor.u32 %v1764, %v1767
        %v1769 = vrot.slane %v1434, 3
        %v1770 = vrot.slane %v1430, 4
        %v1771 = vor.u32 %v1769, %v1770
        %v1772 = vsel %vm1663, %v1768, %v1771
        %v1774 = vshrl.u32 %v1433, 16
        %v1776 = vrot.slane %v1774, 3
        %v1777 = vshll.u32 %v1433, 16
        %v1779 = vrot.slane %v1777, 4
        %v1780 = vor.u32 %v1776, %v1779
        %v1782 = vshrl.u32 %v1441, 16
        %v1784 = vrot.slane %v1782, 3
        %v1785 = vshll.u32 %v1441, 16
        %v1787 = vrot.slane %v1785, 4
        %v1788 = vor.u32 %v1784, %v1787
        %v1789 = vsel %vm1663, %v1780, %v1788
        %v1791 = vshrl.u32 %v1497, 16
        %v1793 = vrot.slane %v1791, 3
        %v1794 = vshll.u32 %v1497, 16
        %v1796 = vrot.slane %v1794, 4
        %v1797 = vor.u32 %v1793, %v1796
        %v1799 = vshrl.u32 %v1499, 16
        %v1801 = vrot.slane %v1799, 3
        %v1802 = vshll.u32 %v1499, 16
        %v1804 = vrot.slane %v1802, 4
        %v1805 = vor.u32 %v1801, %v1804
        %v1806 = vsel %vm1663, %v1797, %v1805
        %v1807 = vrot.slane %v1261, 3
        %v1808 = vrot.slane %v1257, 4
        %v1809 = vor.u32 %v1807, %v1808
        %v1810 = vsel %vm1663, %v1674, %v1809
        %v1812 = vshrl.u32 %v1268, 16
        %v1814 = vrot.slane %v1812, 3
        %v1815 = vshll.u32 %v1268, 16
        %v1817 = vrot.slane %v1815, 4
        %v1818 = vor.u32 %v1814, %v1817
        %v1819 = vsel %vm1663, %v1691, %v1818
        %v1821 = vshrl.u32 %v1328, 16
        %v1823 = vrot.slane %v1821, 3
        %v1824 = vshll.u32 %v1328, 16
        %v1826 = vrot.slane %v1824, 4
        %v1827 = vor.u32 %v1823, %v1826
        %v1828 = vsel %vm1663, %v1708, %v1827
        %v1830 = vshrl.u32 %v1347, 16
        %v1832 = vrot.slane %v1830, 3
        %v1833 = vshll.u32 %v1347, 16
        %v1835 = vrot.slane %v1833, 4
        %v1836 = vor.u32 %v1832, %v1835
        %v1837 = vsel %vm1663, %v1725, %v1836
        %v1839 = vshrl.u32 %v1369, 16
        %v1841 = vrot.slane %v1839, 3
        %v1842 = vshll.u32 %v1369, 16
        %v1844 = vrot.slane %v1842, 4
        %v1845 = vor.u32 %v1841, %v1844
        %v1846 = vsel %vm1663, %v1742, %v1845
        %v1848 = vshrl.u32 %v1409, 16
        %v1850 = vrot.slane %v1848, 3
        %v1851 = vshll.u32 %v1409, 16
        %v1853 = vrot.slane %v1851, 4
        %v1854 = vor.u32 %v1850, %v1853
        %v1855 = vsel %vm1663, %v1759, %v1854
        %v1856 = vrot.slane %v1442, 3
        %v1857 = vrot.slane %v1438, 4
        %v1858 = vor.u32 %v1856, %v1857
        %v1859 = vsel %vm1663, %v1771, %v1858
        %v1861 = vshrl.u32 %v1449, 16
        %v1863 = vrot.slane %v1861, 3
        %v1864 = vshll.u32 %v1449, 16
        %v1866 = vrot.slane %v1864, 4
        %v1867 = vor.u32 %v1863, %v1866
        %v1868 = vsel %vm1663, %v1788, %v1867
        %v1870 = vshrl.u32 %v1501, 16
        %v1872 = vrot.slane %v1870, 3
        %v1873 = vshll.u32 %v1501, 16
        %v1875 = vrot.slane %v1873, 4
        %v1876 = vor.u32 %v1872, %v1875
        %v1877 = vsel %vm1663, %v1805, %v1876
        %v1878 = vrot.slane %v1269, 3
        %v1879 = vrot.slane %v1265, 4
        %v1880 = vor.u32 %v1878, %v1879
        %v1881 = vsel %vm1663, %v1809, %v1880
        %v1883 = vshrl.u32 %v1276, 16
        %v1885 = vrot.slane %v1883, 3
        %v1886 = vshll.u32 %v1276, 16
        %v1888 = vrot.slane %v1886, 4
        %v1889 = vor.u32 %v1885, %v1888
        %v1890 = vsel %vm1663, %v1818, %v1889
        %v1892 = vshrl.u32 %v1330, 16
        %v1894 = vrot.slane %v1892, 3
        %v1895 = vshll.u32 %v1330, 16
        %v1897 = vrot.slane %v1895, 4
        %v1898 = vor.u32 %v1894, %v1897
        %v1899 = vsel %vm1663, %v1827, %v1898
        %v1901 = vshrl.u32 %v1349, 16
        %v1903 = vrot.slane %v1901, 3
        %v1904 = vshll.u32 %v1349, 16
        %v1906 = vrot.slane %v1904, 4
        %v1907 = vor.u32 %v1903, %v1906
        %v1908 = vsel %vm1663, %v1836, %v1907
        %v1910 = vshrl.u32 %v1373, 16
        %v1912 = vrot.slane %v1910, 3
        %v1913 = vshll.u32 %v1373, 16
        %v1915 = vrot.slane %v1913, 4
        %v1916 = vor.u32 %v1912, %v1915
        %v1917 = vsel %vm1663, %v1845, %v1916
        %v1919 = vshrl.u32 %v1411, 16
        %v1921 = vrot.slane %v1919, 3
        %v1922 = vshll.u32 %v1411, 16
        %v1924 = vrot.slane %v1922, 4
        %v1925 = vor.u32 %v1921, %v1924
        %v1926 = vsel %vm1663, %v1854, %v1925
        %v1927 = vrot.slane %v1450, 3
        %v1928 = vrot.slane %v1446, 4
        %v1929 = vor.u32 %v1927, %v1928
        %v1930 = vsel %vm1663, %v1858, %v1929
        %v1932 = vshrl.u32 %v1457, 16
        %v1934 = vrot.slane %v1932, 3
        %v1935 = vshll.u32 %v1457, 16
        %v1937 = vrot.slane %v1935, 4
        %v1938 = vor.u32 %v1934, %v1937
        %v1939 = vsel %vm1663, %v1867, %v1938
        %v1941 = vshrl.u32 %v1503, 16
        %v1943 = vrot.slane %v1941, 3
        %v1944 = vshll.u32 %v1503, 16
        %v1946 = vrot.slane %v1944, 4
        %v1947 = vor.u32 %v1943, %v1946
        %v1948 = vsel %vm1663, %v1876, %v1947
        %v1949 = vrot.slane %v1277, 3
        %v1950 = vrot.slane %v1273, 4
        %v1951 = vor.u32 %v1949, %v1950
        %v1952 = vsel %vm1663, %v1880, %v1951
        %v1954 = vshrl.u32 %v1284, 16
        %v1956 = vrot.slane %v1954, 3
        %v1957 = vshll.u32 %v1284, 16
        %v1959 = vrot.slane %v1957, 4
        %v1960 = vor.u32 %v1956, %v1959
        %v1961 = vsel %vm1663, %v1889, %v1960
        %v1963 = vshrl.u32 %v1332, 16
        %v1965 = vrot.slane %v1963, 3
        %v1966 = vshll.u32 %v1332, 16
        %v1968 = vrot.slane %v1966, 4
        %v1969 = vor.u32 %v1965, %v1968
        %v1970 = vsel %vm1663, %v1898, %v1969
        %v1972 = vshrl.u32 %v1351, 16
        %v1974 = vrot.slane %v1972, 3
        %v1975 = vshll.u32 %v1351, 16
        %v1977 = vrot.slane %v1975, 4
        %v1978 = vor.u32 %v1974, %v1977
        %v1979 = vsel %vm1663, %v1907, %v1978
        %v1981 = vshrl.u32 %v1377, 16
        %v1983 = vrot.slane %v1981, 3
        %v1984 = vshll.u32 %v1377, 16
        %v1986 = vrot.slane %v1984, 4
        %v1987 = vor.u32 %v1983, %v1986
        %v1988 = vsel %vm1663, %v1916, %v1987
        %v1990 = vshrl.u32 %v1413, 16
        %v1992 = vrot.slane %v1990, 3
        %v1993 = vshll.u32 %v1413, 16
        %v1995 = vrot.slane %v1993, 4
        %v1996 = vor.u32 %v1992, %v1995
        %v1997 = vsel %vm1663, %v1925, %v1996
        %v1998 = vrot.slane %v1458, 3
        %v1999 = vrot.slane %v1454, 4
        %v2000 = vor.u32 %v1998, %v1999
        %v2001 = vsel %vm1663, %v1929, %v2000
        %v2003 = vshrl.u32 %v1465, 16
        %v2005 = vrot.slane %v2003, 3
        %v2006 = vshll.u32 %v1465, 16
        %v2008 = vrot.slane %v2006, 4
        %v2009 = vor.u32 %v2005, %v2008
        %v2010 = vsel %vm1663, %v1938, %v2009
        %v2012 = vshrl.u32 %v1505, 16
        %v2014 = vrot.slane %v2012, 3
        %v2015 = vshll.u32 %v1505, 16
        %v2017 = vrot.slane %v2015, 4
        %v2018 = vor.u32 %v2014, %v2017
        %v2019 = vsel %vm1663, %v1947, %v2018
        %v2020 = vrot.slane %v1285, 3
        %v2021 = vrot.slane %v1281, 4
        %v2022 = vor.u32 %v2020, %v2021
        %v2023 = vsel %vm1663, %v1951, %v2022
        %v2025 = vshrl.u32 %v1292, 16
        %v2027 = vrot.slane %v2025, 3
        %v2028 = vshll.u32 %v1292, 16
        %v2030 = vrot.slane %v2028, 4
        %v2031 = vor.u32 %v2027, %v2030
        %v2032 = vsel %vm1663, %v1960, %v2031
        %v2034 = vshrl.u32 %v1334, 16
        %v2036 = vrot.slane %v2034, 3
        %v2037 = vshll.u32 %v1334, 16
        %v2039 = vrot.slane %v2037, 4
        %v2040 = vor.u32 %v2036, %v2039
        %v2041 = vsel %vm1663, %v1969, %v2040
        %v2043 = vshrl.u32 %v1353, 16
        %v2045 = vrot.slane %v2043, 3
        %v2046 = vshll.u32 %v1353, 16
        %v2048 = vrot.slane %v2046, 4
        %v2049 = vor.u32 %v2045, %v2048
        %v2050 = vsel %vm1663, %v1978, %v2049
        %v2052 = vshrl.u32 %v1381, 16
        %v2054 = vrot.slane %v2052, 3
        %v2055 = vshll.u32 %v1381, 16
        %v2057 = vrot.slane %v2055, 4
        %v2058 = vor.u32 %v2054, %v2057
        %v2059 = vsel %vm1663, %v1987, %v2058
        %v2061 = vshrl.u32 %v1415, 16
        %v2063 = vrot.slane %v2061, 3
        %v2064 = vshll.u32 %v1415, 16
        %v2066 = vrot.slane %v2064, 4
        %v2067 = vor.u32 %v2063, %v2066
        %v2068 = vsel %vm1663, %v1996, %v2067
        %v2069 = vrot.slane %v1466, 3
        %v2070 = vrot.slane %v1462, 4
        %v2071 = vor.u32 %v2069, %v2070
        %v2072 = vsel %vm1663, %v2000, %v2071
        %v2074 = vshrl.u32 %v1473, 16
        %v2076 = vrot.slane %v2074, 3
        %v2077 = vshll.u32 %v1473, 16
        %v2079 = vrot.slane %v2077, 4
        %v2080 = vor.u32 %v2076, %v2079
        %v2081 = vsel %vm1663, %v2009, %v2080
        %v2083 = vshrl.u32 %v1507, 16
        %v2085 = vrot.slane %v2083, 3
        %v2086 = vshll.u32 %v1507, 16
        %v2088 = vrot.slane %v2086, 4
        %v2089 = vor.u32 %v2085, %v2088
        %v2090 = vsel %vm1663, %v2018, %v2089
        %v2091 = vrot.slane %v1293, 3
        %v2092 = vrot.slane %v1289, 4
        %v2093 = vor.u32 %v2091, %v2092
        %v2094 = vsel %vm1663, %v2022, %v2093
        %v2096 = vshrl.u32 %v1300, 16
        %v2098 = vrot.slane %v2096, 3
        %v2099 = vshll.u32 %v1300, 16
        %v2101 = vrot.slane %v2099, 4
        %v2102 = vor.u32 %v2098, %v2101
        %v2103 = vsel %vm1663, %v2031, %v2102
        %v2105 = vshrl.u32 %v1336, 16
        %v2107 = vrot.slane %v2105, 3
        %v2108 = vshll.u32 %v1336, 16
        %v2110 = vrot.slane %v2108, 4
        %v2111 = vor.u32 %v2107, %v2110
        %v2112 = vsel %vm1663, %v2040, %v2111
        %v2114 = vshrl.u32 %v1355, 16
        %v2116 = vrot.slane %v2114, 3
        %v2117 = vshll.u32 %v1355, 16
        %v2119 = vrot.slane %v2117, 4
        %v2120 = vor.u32 %v2116, %v2119
        %v2121 = vsel %vm1663, %v2049, %v2120
        %v2123 = vshrl.u32 %v1385, 16
        %v2125 = vrot.slane %v2123, 3
        %v2126 = vshll.u32 %v1385, 16
        %v2128 = vrot.slane %v2126, 4
        %v2129 = vor.u32 %v2125, %v2128
        %v2130 = vsel %vm1663, %v2058, %v2129
        %v2132 = vshrl.u32 %v1417, 16
        %v2134 = vrot.slane %v2132, 3
        %v2135 = vshll.u32 %v1417, 16
        %v2137 = vrot.slane %v2135, 4
        %v2138 = vor.u32 %v2134, %v2137
        %v2139 = vsel %vm1663, %v2067, %v2138
        %v2140 = vrot.slane %v1474, 3
        %v2141 = vrot.slane %v1470, 4
        %v2142 = vor.u32 %v2140, %v2141
        %v2143 = vsel %vm1663, %v2071, %v2142
        %v2145 = vshrl.u32 %v1481, 16
        %v2147 = vrot.slane %v2145, 3
        %v2148 = vshll.u32 %v1481, 16
        %v2150 = vrot.slane %v2148, 4
        %v2151 = vor.u32 %v2147, %v2150
        %v2152 = vsel %vm1663, %v2080, %v2151
        %v2154 = vshrl.u32 %v1509, 16
        %v2156 = vrot.slane %v2154, 3
        %v2157 = vshll.u32 %v1509, 16
        %v2159 = vrot.slane %v2157, 4
        %v2160 = vor.u32 %v2156, %v2159
        %v2161 = vsel %vm1663, %v2089, %v2160
        %v2162 = vrot.slane %v1301, 3
        %v2163 = vrot.slane %v1297, 4
        %v2164 = vor.u32 %v2162, %v2163
        %v2165 = vsel %vm1663, %v2093, %v2164
        %v2167 = vshrl.u32 %v1308, 16
        %v2169 = vrot.slane %v2167, 3
        %v2170 = vshll.u32 %v1308, 16
        %v2172 = vrot.slane %v2170, 4
        %v2173 = vor.u32 %v2169, %v2172
        %v2174 = vsel %vm1663, %v2102, %v2173
        %v2176 = vshrl.u32 %v1338, 16
        %v2178 = vrot.slane %v2176, 3
        %v2179 = vshll.u32 %v1338, 16
        %v2181 = vrot.slane %v2179, 4
        %v2182 = vor.u32 %v2178, %v2181
        %v2183 = vsel %vm1663, %v2111, %v2182
        %v2185 = vshrl.u32 %v1357, 16
        %v2187 = vrot.slane %v2185, 3
        %v2188 = vshll.u32 %v1357, 16
        %v2190 = vrot.slane %v2188, 4
        %v2191 = vor.u32 %v2187, %v2190
        %v2192 = vsel %vm1663, %v2120, %v2191
        %v2194 = vshrl.u32 %v1394, 16
        %v2196 = vrot.slane %v2194, 3
        %v2197 = vshll.u32 %v1394, 16
        %v2199 = vrot.slane %v2197, 4
        %v2200 = vor.u32 %v2196, %v2199
        %v2201 = vsel %vm1663, %v2129, %v2200
        %v2203 = vshrl.u32 %v1419, 16
        %v2205 = vrot.slane %v2203, 3
        %v2206 = vshll.u32 %v1419, 16
        %v2208 = vrot.slane %v2206, 4
        %v2209 = vor.u32 %v2205, %v2208
        %v2210 = vsel %vm1663, %v2138, %v2209
        %v2211 = vrot.slane %v1482, 3
        %v2212 = vrot.slane %v1478, 4
        %v2213 = vor.u32 %v2211, %v2212
        %v2214 = vsel %vm1663, %v2142, %v2213
        %v2216 = vshrl.u32 %v1489, 16
        %v2218 = vrot.slane %v2216, 3
        %v2219 = vshll.u32 %v1489, 16
        %v2221 = vrot.slane %v2219, 4
        %v2222 = vor.u32 %v2218, %v2221
        %v2223 = vsel %vm1663, %v2151, %v2222
        %v2225 = vshrl.u32 %v1511, 16
        %v2227 = vrot.slane %v2225, 3
        %v2228 = vshll.u32 %v1511, 16
        %v2230 = vrot.slane %v2228, 4
        %v2231 = vor.u32 %v2227, %v2230
        %v2232 = vsel %vm1663, %v2160, %v2231
        %v2233 = vrot.slane %v1309, 3
        %v2234 = vrot.slane %v1305, 4
        %v2235 = vor.u32 %v2233, %v2234
        %v2236 = vsel %vm1663, %v2164, %v2235
        %v2238 = vshrl.u32 %v1311, 16
        %v2240 = vrot.slane %v2238, 3
        %v2241 = vshll.u32 %v1311, 16
        %v2243 = vrot.slane %v2241, 4
        %v2244 = vor.u32 %v2240, %v2243
        %v2245 = vsel %vm1663, %v2173, %v2244
        %v2247 = vshrl.u32 %v1337, 16
        %v2249 = vrot.slane %v2247, 3
        %v2250 = vshll.u32 %v1337, 16
        %v2252 = vrot.slane %v2250, 4
        %v2253 = vor.u32 %v2249, %v2252
        %v2254 = vsel %vm1663, %v2182, %v2253
        %v2256 = vshrl.u32 %v1356, 16
        %v2258 = vrot.slane %v2256, 3
        %v2259 = vshll.u32 %v1356, 16
        %v2261 = vrot.slane %v2259, 4
        %v2262 = vor.u32 %v2258, %v2261
        %v2263 = vsel %vm1663, %v2191, %v2262
        %v2265 = vshrl.u32 %v1393, 16
        %v2267 = vrot.slane %v2265, 3
        %v2268 = vshll.u32 %v1393, 16
        %v2270 = vrot.slane %v2268, 4
        %v2271 = vor.u32 %v2267, %v2270
        %v2272 = vsel %vm1663, %v2200, %v2271
        %v2274 = vshrl.u32 %v1421, 16
        %v2276 = vrot.slane %v2274, 3
        %v2277 = vshll.u32 %v1421, 16
        %v2279 = vrot.slane %v2277, 4
        %v2280 = vor.u32 %v2276, %v2279
        %v2281 = vsel %vm1663, %v2209, %v2280
        %v2282 = vrot.slane %v1490, 3
        %v2283 = vrot.slane %v1486, 4
        %v2284 = vor.u32 %v2282, %v2283
        %v2285 = vsel %vm1663, %v2213, %v2284
        %v2287 = vshrl.u32 %v1492, 16
        %v2289 = vrot.slane %v2287, 3
        %v2290 = vshll.u32 %v1492, 16
        %v2292 = vrot.slane %v2290, 4
        %v2293 = vor.u32 %v2289, %v2292
        %v2294 = vsel %vm1663, %v2222, %v2293
        %v2296 = vshrl.u32 %v1510, 16
        %v2298 = vrot.slane %v2296, 3
        %v2299 = vshll.u32 %v1510, 16
        %v2301 = vrot.slane %v2299, 4
        %v2302 = vor.u32 %v2298, %v2301
        %v2303 = vsel %vm1663, %v2231, %v2302
        %v2520 = vunpack.c.l.b16 %v1512
        %v2521 = vunpack.c.l.b16 %v1513
        %v2522 = vunpack.c.l.b16 %v1514
        %v2523 = vunpack.c.l.b16 %v1515
        %v2524 = vunpack.c.l.b16 %v1516
        %v2525 = vunpack.c.l.b16 %v1517
        %v2526 = vunpack.c.l.b16 %v1518
        %v2527 = vunpack.c.l.b16 %v1519
        %v2528 = vunpack.c.l.b16 %v1520
        %v2529 = vunpack.c.l.b16 %v1521
        %v2530 = vunpack.c.l.b16 %v1522
        %v2531 = vunpack.c.l.b16 %v1523
        %v2532 = vunpack.c.l.b16 %v1524
        %v2533 = vunpack.c.l.b16 %v1525
        %v2534 = vunpack.c.l.b16 %v1526
        %v2535 = vunpack.c.l.b16 %v1527
        %v2536 = vunpack.c.l.b16 %v1528
        %v2537 = vunpack.c.l.b16 %v1529
        %v2538 = vunpack.c.l.b16 %v1530
        %v2539 = vunpack.c.l.b16 %v1531
        %v2540 = vunpack.c.l.b16 %v1532
        %v2541 = vunpack.c.l.b16 %v1533
        %v2542 = vunpack.c.l.b16 %v1534
        %v2543 = vunpack.c.l.b16 %v1535
        %v2544 = vunpack.c.l.b16 %v1536
        %v2545 = vunpack.c.l.b16 %v1537
        %v2546 = vunpack.c.l.b16 %v1538
        %v2547 = vunpack.c.l.b16 %v1539
        %v2548 = vunpack.c.l.b16 %v1540
        %v2549 = vunpack.c.l.b16 %v1541
        %v2550 = vunpack.c.l.b16 %v1542
        %v2551 = vunpack.c.l.b16 %v1543
        %v2552 = vunpack.c.l.b16 %v1544
        %v2553 = vunpack.c.l.b16 %v1545
        %v2554 = vunpack.c.l.b16 %v1546
        %v2555 = vunpack.c.l.b16 %v1547
        %v2556 = vunpack.c.l.b16 %v1548
        %v2557 = vunpack.c.l.b16 %v1549
        %v2558 = vunpack.c.l.b16 %v1550
        %v2559 = vunpack.c.l.b16 %v1551
        %v2560 = vunpack.c.l.b16 %v1552
        %v2561 = vunpack.c.l.b16 %v1553
        %v2562 = vunpack.c.l.b16 %v1554
        %v2563 = vunpack.c.l.b16 %v1555
        %v2564 = vunpack.c.l.b16 %v1556
        %v2565 = vunpack.c.l.b16 %v1557
        %v2566 = vunpack.c.l.b16 %v1558
        %v2567 = vunpack.c.l.b16 %v1559
        %v2568 = vunpack.c.l.b16 %v1560
        %v2569 = vunpack.c.l.b16 %v1561
        %v2570 = vunpack.c.l.b16 %v1562
        %v2571 = vunpack.c.l.b16 %v1563
        %v2572 = vunpack.c.l.b16 %v1564
        %v2573 = vunpack.c.l.b16 %v1565
        %v2574 = vunpack.c.l.b16 %v1566
        %v2575 = vunpack.c.l.b16 %v1567
        %v2576 = vunpack.c.l.b16 %v1568
        %v2577 = vunpack.c.l.b16 %v1569
        %v2578 = vunpack.c.l.b16 %v1570
        %v2579 = vunpack.c.l.b16 %v1571
        %v2580 = vunpack.c.l.b16 %v1572
        %v2581 = vunpack.c.l.b16 %v1573
        %v2582 = vunpack.c.l.b16 %v1574
        %v2583 = vunpack.c.l.b16 %v1575
        %v2584 = vunpack.c.l.b16 %v1576
        %v2585 = vunpack.c.l.b16 %v1577
        %v2586 = vunpack.c.l.b16 %v1578
        %v2587 = vunpack.c.l.b16 %v1579
        %v2588 = vunpack.c.l.b16 %v1580
        %v2589 = vunpack.c.l.b16 %v1581
        %v2590 = vunpack.c.l.b16 %v1582
        %v2591 = vunpack.c.l.b16 %v1583
        %v2592 = vunpack.c.l.b16 %v1584
        %v2593 = vunpack.c.l.b16 %v1585
        %v2594 = vunpack.c.l.b16 %v1586
        %v2595 = vunpack.c.l.b16 %v1587
        %v2596 = vunpack.c.l.b16 %v1588
        %v2597 = vunpack.c.l.b16 %v1589
        %v2598 = vunpack.c.l.b16 %v1590
        %v2599 = vunpack.c.l.b16 %v1591
        %v2600 = vunpack.c.l.b16 %v1592
        %v2601 = vunpack.c.l.b16 %v1593
        %v2602 = vunpack.c.l.b16 %v1594
        %v2603 = vunpack.c.l.b16 %v1595
        %v2604 = vunpack.c.l.b16 %v1596
        %v2605 = vunpack.c.l.b16 %v1597
        %v2606 = vunpack.c.l.b16 %v1598
        %v2607 = vunpack.c.l.b16 %v1599
        %v2608 = vunpack.c.l.b16 %v1600
        %v2609 = vunpack.c.l.b16 %v1601
        %v2610 = vunpack.c.l.b16 %v1602
        %v2611 = vunpack.c.l.b16 %v1603
        %v2612 = vunpack.c.l.b16 %v1604
        %v2613 = vunpack.c.l.b16 %v1605
        %v2614 = vunpack.c.l.b16 %v1606
        %v2615 = vunpack.c.l.b16 %v1607
        %v2616 = vunpack.c.l.b16 %v1608
        %v2617 = vunpack.c.l.b16 %v1609
        %v2618 = vunpack.c.l.b16 %v1610
        %v2619 = vunpack.c.l.b16 %v1611
        %v2620 = vunpack.c.l.b16 %v1612
        %v2621 = vunpack.c.l.b16 %v1613
        %v2622 = vunpack.c.l.b16 %v1614
        %v2623 = vunpack.c.l.b16 %v1615
        %v2624 = vunpack.c.l.b16 %v1616
        %v2625 = vunpack.c.l.b16 %v1617
        %v2626 = vunpack.c.l.b16 %v1618
        %v2627 = vunpack.c.l.b16 %v1619
        %v2628 = vunpack.c.l.b16 %v1620
        %v2629 = vunpack.c.l.b16 %v1621
        %v2630 = vunpack.c.l.b16 %v1622
        %v2631 = vunpack.c.l.b16 %v1623
        %v2632 = vunpack.c.l.b16 %v1624
        %v2633 = vunpack.c.l.b16 %v1625
        %v2634 = vunpack.c.l.b16 %v1626
        %v2635 = vunpack.c.l.b16 %v1627
        %v2636 = vunpack.c.l.b16 %v1628
        %v2637 = vunpack.c.l.b16 %v1629
        %v2638 = vunpack.c.l.b16 %v1630
        %v2639 = vunpack.c.l.b16 %v1631
        %v2640 = vunpack.c.l.b16 %v1632
        %v2641 = vunpack.c.l.b16 %v1633
        %v2642 = vunpack.c.l.b16 %v1634
        %v2643 = vunpack.c.l.b16 %v1635
        %v2644 = vunpack.c.l.b16 %v1636
        %v2645 = vunpack.c.l.b16 %v1637
        %v2646 = vunpack.c.l.b16 %v1638
        %v2647 = vunpack.c.l.b16 %v1639
        %v2648 = vunpack.c.l.b16 %v1640
        %v2649 = vunpack.c.l.b16 %v1641
        %v2650 = vunpack.c.l.b16 %v1642
        %v2651 = vunpack.c.l.b16 %v1643
        %v2652 = vunpack.c.l.b16 %v1644
        %v2653 = vunpack.c.l.b16 %v1645
        %v2654 = vunpack.c.l.b16 %v1646
        %v2655 = vunpack.c.l.b16 %v1647
        %v2656 = vunpack.c.l.b16 %v1648
        %v2657 = vunpack.c.l.b16 %v1649
        %v2658 = vunpack.c.l.b16 %v1650
        %v2659 = vunpack.c.l.b16 %v1651
        %v2660 = vunpack.c.l.b16 %v1652
        %v2661 = vunpack.c.l.b16 %v1653
        %v2662 = vunpack.c.l.b16 %v1654
        %v2663 = vunpack.c.l.b16 %v1655
        %v2664 = vpack.c.b16 %v2521, %v2520
        %v2665 = vpack.c.b16 %v2523, %v2522
        %v2666 = vpack.c.b16 %v2525, %v2524
        %v2667 = vpack.c.b16 %v2527, %v2526
        %v2668 = vpack.c.b16 %v2529, %v2528
        %v2669 = vpack.c.b16 %v2531, %v2530
        %v2670 = vpack.c.b16 %v2533, %v2532
        %v2671 = vpack.c.b16 %v2535, %v2534
        %v2672 = vpack.c.b16 %v2537, %v2536
        %v2673 = vpack.c.b16 %v2539, %v2538
        %v2674 = vpack.c.b16 %v2541, %v2540
        %v2675 = vpack.c.b16 %v2543, %v2542
        %v2676 = vpack.c.b16 %v2545, %v2544
        %v2677 = vpack.c.b16 %v2547, %v2546
        %v2678 = vpack.c.b16 %v2549, %v2548
        %v2679 = vpack.c.b16 %v2551, %v2550
        %v2680 = vpack.c.b16 %v2553, %v2552
        %v2681 = vpack.c.b16 %v2555, %v2554
        %v2682 = vpack.c.b16 %v2557, %v2556
        %v2683 = vpack.c.b16 %v2559, %v2558
        %v2684 = vpack.c.b16 %v2561, %v2560
        %v2685 = vpack.c.b16 %v2563, %v2562
        %v2686 = vpack.c.b16 %v2565, %v2564
        %v2687 = vpack.c.b16 %v2567, %v2566
        %v2688 = vpack.c.b16 %v2569, %v2568
        %v2689 = vpack.c.b16 %v2571, %v2570
        %v2690 = vpack.c.b16 %v2573, %v2572
        %v2691 = vpack.c.b16 %v2575, %v2574
        %v2692 = vpack.c.b16 %v2577, %v2576
        %v2693 = vpack.c.b16 %v2579, %v2578
        %v2694 = vpack.c.b16 %v2581, %v2580
        %v2695 = vpack.c.b16 %v2583, %v2582
        %v2696 = vpack.c.b16 %v2585, %v2584
        %v2697 = vpack.c.b16 %v2587, %v2586
        %v2698 = vpack.c.b16 %v2589, %v2588
        %v2699 = vpack.c.b16 %v2591, %v2590
        %v2700 = vpack.c.b16 %v2593, %v2592
        %v2701 = vpack.c.b16 %v2595, %v2594
        %v2702 = vpack.c.b16 %v2597, %v2596
        %v2703 = vpack.c.b16 %v2599, %v2598
        %v2704 = vpack.c.b16 %v2601, %v2600
        %v2705 = vpack.c.b16 %v2603, %v2602
        %v2706 = vpack.c.b16 %v2605, %v2604
        %v2707 = vpack.c.b16 %v2607, %v2606
        %v2708 = vpack.c.b16 %v2609, %v2608
        %v2709 = vpack.c.b16 %v2611, %v2610
        %v2710 = vpack.c.b16 %v2613, %v2612
        %v2711 = vpack.c.b16 %v2615, %v2614
        %v2712 = vpack.c.b16 %v2617, %v2616
        %v2713 = vpack.c.b16 %v2619, %v2618
        %v2714 = vpack.c.b16 %v2621, %v2620
        %v2715 = vpack.c.b16 %v2623, %v2622
        %v2716 = vpack.c.b16 %v2625, %v2624
        %v2717 = vpack.c.b16 %v2627, %v2626
        %v2718 = vpack.c.b16 %v2629, %v2628
        %v2719 = vpack.c.b16 %v2631, %v2630
        %v2720 = vpack.c.b16 %v2633, %v2632
        %v2721 = vpack.c.b16 %v2635, %v2634
        %v2722 = vpack.c.b16 %v2637, %v2636
        %v2723 = vpack.c.b16 %v2639, %v2638
        %v2724 = vpack.c.b16 %v2641, %v2640
        %v2725 = vpack.c.b16 %v2643, %v2642
        %v2726 = vpack.c.b16 %v2645, %v2644
        %v2727 = vpack.c.b16 %v2647, %v2646
        %v2728 = vpack.c.b16 %v2649, %v2648
        %v2729 = vpack.c.b16 %v2651, %v2650
        %v2730 = vpack.c.b16 %v2653, %v2652
        %v2731 = vpack.c.b16 %v2655, %v2654
        %v2732 = vpack.c.b16 %v2657, %v2656
        %v2733 = vpack.c.b16 %v2659, %v2658
        %v2734 = vpack.c.b16 %v2661, %v2660
        %v2735 = vpack.c.b16 %v2663, %v2662
        %2808 = vmatprep.subr.bf16.mxu0 0
        %2809 = vmatpush1.bf16.msra.mxu0 %v2664
        %2810 = vmatprep.subr.bf16.mxu0 0
        %2811 = vmatpush1.bf16.msra.mxu0 %v2665
        %2812 = vmatprep.subr.bf16.mxu0 0
        %2813 = vmatpush1.bf16.msra.mxu0 %v2666
        %2814 = vmatprep.subr.bf16.mxu0 0
        %2815 = vmatpush1.bf16.msra.mxu0 %v2667
        %2816 = vmatprep.subr.bf16.mxu0 0
        %2817 = vmatpush1.bf16.msra.mxu0 %v2668
        %2818 = vmatprep.subr.bf16.mxu0 0
        %2819 = vmatpush1.bf16.msra.mxu0 %v2669
        %2820 = vmatprep.subr.bf16.mxu0 0
        %2821 = vmatpush1.bf16.msra.mxu0 %v2670
        %2822 = vmatprep.subr.bf16.mxu0 0
        %2823 = vmatpush1.bf16.msra.mxu0 %v2671
        %2824 = vmatprep.subr.bf16.mxu0 0
        %2825 = vmatpush1.bf16.msra.mxu0 %v2672
        %2826 = vmatprep.subr.bf16.mxu0 0
        %2827 = vmatpush1.bf16.msra.mxu0 %v2673
        %2828 = vmatprep.subr.bf16.mxu0 0
        %2829 = vmatpush1.bf16.msra.mxu0 %v2674
        %2830 = vmatprep.subr.bf16.mxu0 0
        %2831 = vmatpush1.bf16.msra.mxu0 %v2675
        %2832 = vmatprep.subr.bf16.mxu0 0
        %2833 = vmatpush1.bf16.msra.mxu0 %v2676
        %2834 = vmatprep.subr.bf16.mxu0 0
        %2835 = vmatpush1.bf16.msra.mxu0 %v2677
        %2836 = vmatprep.subr.bf16.mxu0 0
        %2837 = vmatpush1.bf16.msra.mxu0 %v2678
        %2838 = vmatprep.subr.bf16.mxu0 0
        %2839 = vmatpush1.bf16.msra.mxu0 %v2679
        %2840 = vmatprep.mubr.bf16.mxu0 %v1692
        %2841 = vmatmul.mubr.bf16.gmra.mrb[0].mxu0 %v1675
        %v2842 = vpop.f32.mrb[0].mxu0
        %v2843 = vadd.f32 %v1661, %v2842
        %v2844 = vpop.f32.mrb[0].mxu0
        %v2845 = vpop.f32.mrb[0].mxu0
        %v2846 = vadd.f32 %v1661, %v2845
        %v2847 = vpop.f32.mrb[0].mxu0
        %2848 = vmatprep.mubr.bf16.mxu0 %v1819
        %2849 = vmatmul.mubr.bf16.gmra.mrb[0].mxu0 %v1810
        %v2850 = vpop.f32.mrb[0].mxu0
        %v2851 = vadd.f32 %v1661, %v2850
        %v2852 = vpop.f32.mrb[0].mxu0
        %v2853 = vpop.f32.mrb[0].mxu0
        %v2854 = vadd.f32 %v1661, %v2853
        %v2855 = vpop.f32.mrb[0].mxu0
        %2856 = vmatprep.mubr.bf16.mxu0 %v1890
        %2857 = vmatmul.mubr.bf16.gmra.mrb[0].mxu0 %v1881
        %v2858 = vpop.f32.mrb[0].mxu0
        %v2859 = vadd.f32 %v1661, %v2858
        %v2860 = vpop.f32.mrb[0].mxu0
        %v2861 = vpop.f32.mrb[0].mxu0
        %v2862 = vadd.f32 %v1661, %v2861
        %v2863 = vpop.f32.mrb[0].mxu0
        %2864 = vmatprep.mubr.bf16.mxu0 %v1961
        %2865 = vmatmul.mubr.bf16.gmra.mrb[0].mxu0 %v1952
        %v2866 = vpop.f32.mrb[0].mxu0
        %v2867 = vadd.f32 %v1661, %v2866
        %v2868 = vpop.f32.mrb[0].mxu0
        %v2869 = vpop.f32.mrb[0].mxu0
        %v2870 = vadd.f32 %v1661, %v2869
        %v2871 = vpop.f32.mrb[0].mxu0
        %2872 = vmatprep.mubr.bf16.mxu0 %v2032
        %2873 = vmatmul.mubr.bf16.gmra.mrb[0].mxu0 %v2023
        %v2874 = vpop.f32.mrb[0].mxu0
        %v2875 = vadd.f32 %v1661, %v2874
        %v2876 = vpop.f32.mrb[0].mxu0
        %v2877 = vpop.f32.mrb[0].mxu0
        %v2878 = vadd.f32 %v1661, %v2877
        %v2879 = vpop.f32.mrb[0].mxu0
        %2880 = vmatprep.mubr.bf16.mxu0 %v2103
        %2881 = vmatmul.mubr.bf16.gmra.mrb[0].mxu0 %v2094
        %v2882 = vpop.f32.mrb[0].mxu0
        %v2883 = vadd.f32 %v1661, %v2882
        %v2884 = vpop.f32.mrb[0].mxu0
        %v2885 = vpop.f32.mrb[0].mxu0
        %v2886 = vadd.f32 %v1661, %v2885
        %v2887 = vpop.f32.mrb[0].mxu0
        %2888 = vmatprep.mubr.bf16.mxu0 %v2174
        %2889 = vmatmul.mubr.bf16.gmra.mrb[0].mxu0 %v2165
        %v2890 = vpop.f32.mrb[0].mxu0
        %v2891 = vadd.f32 %v1661, %v2890
        %v2892 = vpop.f32.mrb[0].mxu0
        %v2893 = vpop.f32.mrb[0].mxu0
        %v2894 = vadd.f32 %v1661, %v2893
        %v2895 = vpop.f32.mrb[0].mxu0
        %2896 = vmatprep.mubr.bf16.mxu0 %v2245
        %2897 = vmatmul.mubr.bf16.gmra.mrb[0].mxu0 %v2236
        %v2898 = vpop.f32.mrb[0].mxu0
        %v2899 = vadd.f32 %v1661, %v2898
        %v2900 = vpop.f32.mrb[0].mxu0
        %v2901 = vpop.f32.mrb[0].mxu0
        %v2902 = vadd.f32 %v1661, %v2901
        %v2903 = vpop.f32.mrb[0].mxu0
        %2904 = vdwg.mxu0
        %2905 = vmatprep.subr.bf16.mxu0 0
        %2906 = vmatpush1.bf16.msra.mxu0 %v2680
        %2907 = vmatprep.subr.bf16.mxu0 0
        %2908 = vmatpush1.bf16.msra.mxu0 %v2681
        %2909 = vmatprep.subr.bf16.mxu0 0
        %2910 = vmatpush1.bf16.msra.mxu0 %v2682
        %2911 = vmatprep.subr.bf16.mxu0 0
        %2912 = vmatpush1.bf16.msra.mxu0 %v2683
        %2913 = vmatprep.subr.bf16.mxu0 0
        %2914 = vmatpush1.bf16.msra.mxu0 %v2684
        %2915 = vmatprep.subr.bf16.mxu0 0
        %2916 = vmatpush1.bf16.msra.mxu0 %v2685
        %2917 = vmatprep.subr.bf16.mxu0 0
        %2918 = vmatpush1.bf16.msra.mxu0 %v2686
        %2919 = vmatprep.subr.bf16.mxu0 0
        %2920 = vmatpush1.bf16.msra.mxu0 %v2687
        %2921 = vmatprep.subr.bf16.mxu0 0
        %2922 = vmatpush1.bf16.msra.mxu0 %v2688
        %2923 = vmatprep.subr.bf16.mxu0 0
        %2924 = vmatpush1.bf16.msra.mxu0 %v2689
        %2925 = vmatprep.subr.bf16.mxu0 0
        %2926 = vmatpush1.bf16.msra.mxu0 %v2690
        %2927 = vmatprep.subr.bf16.mxu0 0
        %2928 = vmatpush1.bf16.msra.mxu0 %v2691
        %2929 = vmatprep.subr.bf16.mxu0 0
        %2930 = vmatpush1.bf16.msra.mxu0 %v2692
        %2931 = vmatprep.subr.bf16.mxu0 0
        %2932 = vmatpush1.bf16.msra.mxu0 %v2693
        %2933 = vmatprep.subr.bf16.mxu0 0
        %2934 = vmatpush1.bf16.msra.mxu0 %v2694
        %2935 = vmatprep.subr.bf16.mxu0 0
        %2936 = vmatpush1.bf16.msra.mxu0 %v2695
        %2937 = vmatprep.mubr.bf16.mxu0 %v1726
        %2938 = vmatmul.mubr.bf16.gmra.mrb[0].mxu0 %v1709
        %v2939 = vpop.f32.mrb[0].mxu0
        %v2940 = vadd.f32 %v2843, %v2939
        %v2941 = vpop.f32.mrb[0].mxu0
        %v2942 = vpop.f32.mrb[0].mxu0
        %v2943 = vadd.f32 %v2846, %v2942
        %v2944 = vpop.f32.mrb[0].mxu0
        %2945 = vmatprep.mubr.bf16.mxu0 %v1837
        %2946 = vmatmul.mubr.bf16.gmra.mrb[0].mxu0 %v1828
        %v2947 = vpop.f32.mrb[0].mxu0
        %v2948 = vadd.f32 %v2851, %v2947
        %v2949 = vpop.f32.mrb[0].mxu0
        %v2950 = vpop.f32.mrb[0].mxu0
        %v2951 = vadd.f32 %v2854, %v2950
        %v2952 = vpop.f32.mrb[0].mxu0
        %2953 = vmatprep.mubr.bf16.mxu0 %v1908
        %2954 = vmatmul.mubr.bf16.gmra.mrb[0].mxu0 %v1899
        %v2955 = vpop.f32.mrb[0].mxu0
        %v2956 = vadd.f32 %v2859, %v2955
        %v2957 = vpop.f32.mrb[0].mxu0
        %v2958 = vpop.f32.mrb[0].mxu0
        %v2959 = vadd.f32 %v2862, %v2958
        %v2960 = vpop.f32.mrb[0].mxu0
        %2961 = vmatprep.mubr.bf16.mxu0 %v1979
        %2962 = vmatmul.mubr.bf16.gmra.mrb[0].mxu0 %v1970
        %v2963 = vpop.f32.mrb[0].mxu0
        %v2964 = vadd.f32 %v2867, %v2963
        %v2965 = vpop.f32.mrb[0].mxu0
        %v2966 = vpop.f32.mrb[0].mxu0
        %v2967 = vadd.f32 %v2870, %v2966
        %v2968 = vpop.f32.mrb[0].mxu0
        %2969 = vmatprep.mubr.bf16.mxu0 %v2050
        %2970 = vmatmul.mubr.bf16.gmra.mrb[0].mxu0 %v2041
        %v2971 = vpop.f32.mrb[0].mxu0
        %v2972 = vadd.f32 %v2875, %v2971
        %v2973 = vpop.f32.mrb[0].mxu0
        %v2974 = vpop.f32.mrb[0].mxu0
        %v2975 = vadd.f32 %v2878, %v2974
        %v2976 = vpop.f32.mrb[0].mxu0
        %2977 = vmatprep.mubr.bf16.mxu0 %v2121
        %2978 = vmatmul.mubr.bf16.gmra.mrb[0].mxu0 %v2112
        %v2979 = vpop.f32.mrb[0].mxu0
        %v2980 = vadd.f32 %v2883, %v2979
        %v2981 = vpop.f32.mrb[0].mxu0
        %v2982 = vpop.f32.mrb[0].mxu0
        %v2983 = vadd.f32 %v2886, %v2982
        %v2984 = vpop.f32.mrb[0].mxu0
        %2985 = vmatprep.mubr.bf16.mxu0 %v2192
        %2986 = vmatmul.mubr.bf16.gmra.mrb[0].mxu0 %v2183
        %v2987 = vpop.f32.mrb[0].mxu0
        %v2988 = vadd.f32 %v2891, %v2987
        %v2989 = vpop.f32.mrb[0].mxu0
        %v2990 = vpop.f32.mrb[0].mxu0
        %v2991 = vadd.f32 %v2894, %v2990
        %v2992 = vpop.f32.mrb[0].mxu0
        %2993 = vmatprep.mubr.bf16.mxu0 %v2263
        %2994 = vmatmul.mubr.bf16.gmra.mrb[0].mxu0 %v2254
        %v2995 = vpop.f32.mrb[0].mxu0
        %v2996 = vadd.f32 %v2899, %v2995
        %v2997 = vpop.f32.mrb[0].mxu0
        %v2998 = vpop.f32.mrb[0].mxu0
        %v2999 = vadd.f32 %v2902, %v2998
        %v3000 = vpop.f32.mrb[0].mxu0
        %3001 = vdwg.mxu0
        %3002 = vmatprep.subr.bf16.mxu0 0
        %3003 = vmatpush1.bf16.msra.mxu0 %v2696
        %3004 = vmatprep.subr.bf16.mxu0 0
        %3005 = vmatpush1.bf16.msra.mxu0 %v2697
        %3006 = vmatprep.subr.bf16.mxu0 0
        %3007 = vmatpush1.bf16.msra.mxu0 %v2698
        %3008 = vmatprep.subr.bf16.mxu0 0
        %3009 = vmatpush1.bf16.msra.mxu0 %v2699
        %3010 = vmatprep.subr.bf16.mxu0 0
        %3011 = vmatpush1.bf16.msra.mxu0 %v2700
        %3012 = vmatprep.subr.bf16.mxu0 0
        %3013 = vmatpush1.bf16.msra.mxu0 %v2701
        %3014 = vmatprep.subr.bf16.mxu0 0
        %3015 = vmatpush1.bf16.msra.mxu0 %v2702
        %3016 = vmatprep.subr.bf16.mxu0 0
        %3017 = vmatpush1.bf16.msra.mxu0 %v2703
        %3018 = vmatprep.subr.bf16.mxu0 0
        %3019 = vmatpush1.bf16.msra.mxu0 %v2704
        %3020 = vmatprep.subr.bf16.mxu0 0
        %3021 = vmatpush1.bf16.msra.mxu0 %v2705
        %3022 = vmatprep.subr.bf16.mxu0 0
        %3023 = vmatpush1.bf16.msra.mxu0 %v2706
        %3024 = vmatprep.subr.bf16.mxu0 0
        %3025 = vmatpush1.bf16.msra.mxu0 %v2707
        %3026 = vmatprep.subr.bf16.mxu0 0
        %3027 = vmatpush1.bf16.msra.mxu0 %v2708
        %3028 = vmatprep.subr.bf16.mxu0 0
        %3029 = vmatpush1.bf16.msra.mxu0 %v2709
        %3030 = vmatprep.subr.bf16.mxu0 0
        %3031 = vmatpush1.bf16.msra.mxu0 %v2710
        %3032 = vmatprep.subr.bf16.mxu0 0
        %3033 = vmatpush1.bf16.msra.mxu0 %v2711
        %3034 = vmatprep.mubr.bf16.mxu0 %v1760
        %3035 = vmatmul.mubr.bf16.gmra.mrb[0].mxu0 %v1743
        %v3036 = vpop.f32.mrb[0].mxu0
        %v3037 = vadd.f32 %v2940, %v3036
        %v3038 = vpop.f32.mrb[0].mxu0
        %v3039 = vpop.f32.mrb[0].mxu0
        %v3040 = vadd.f32 %v2943, %v3039
        %v3041 = vpop.f32.mrb[0].mxu0
        %3042 = vmatprep.mubr.bf16.mxu0 %v1855
        %3043 = vmatmul.mubr.bf16.gmra.mrb[0].mxu0 %v1846
        %v3044 = vpop.f32.mrb[0].mxu0
        %v3045 = vadd.f32 %v2948, %v3044
        %v3046 = vpop.f32.mrb[0].mxu0
        %v3047 = vpop.f32.mrb[0].mxu0
        %v3048 = vadd.f32 %v2951, %v3047
        %v3049 = vpop.f32.mrb[0].mxu0
        %3050 = vmatprep.mubr.bf16.mxu0 %v1926
        %3051 = vmatmul.mubr.bf16.gmra.mrb[0].mxu0 %v1917
        %v3052 = vpop.f32.mrb[0].mxu0
        %v3053 = vadd.f32 %v2956, %v3052
        %v3054 = vpop.f32.mrb[0].mxu0
        %v3055 = vpop.f32.mrb[0].mxu0
        %v3056 = vadd.f32 %v2959, %v3055
        %v3057 = vpop.f32.mrb[0].mxu0
        %3058 = vmatprep.mubr.bf16.mxu0 %v1997
        %3059 = vmatmul.mubr.bf16.gmra.mrb[0].mxu0 %v1988
        %v3060 = vpop.f32.mrb[0].mxu0
        %v3061 = vadd.f32 %v2964, %v3060
        %v3062 = vpop.f32.mrb[0].mxu0
        %v3063 = vpop.f32.mrb[0].mxu0
        %v3064 = vadd.f32 %v2967, %v3063
        %v3065 = vpop.f32.mrb[0].mxu0
        %3066 = vmatprep.mubr.bf16.mxu0 %v2068
        %3067 = vmatmul.mubr.bf16.gmra.mrb[0].mxu0 %v2059
        %v3068 = vpop.f32.mrb[0].mxu0
        %v3069 = vadd.f32 %v2972, %v3068
        %v3070 = vpop.f32.mrb[0].mxu0
        %v3071 = vpop.f32.mrb[0].mxu0
        %v3072 = vadd.f32 %v2975, %v3071
        %v3073 = vpop.f32.mrb[0].mxu0
        %3074 = vmatprep.mubr.bf16.mxu0 %v2139
        %3075 = vmatmul.mubr.bf16.gmra.mrb[0].mxu0 %v2130
        %v3076 = vpop.f32.mrb[0].mxu0
        %v3077 = vadd.f32 %v2980, %v3076
        %v3078 = vpop.f32.mrb[0].mxu0
        %v3079 = vpop.f32.mrb[0].mxu0
        %v3080 = vadd.f32 %v2983, %v3079
        %v3081 = vpop.f32.mrb[0].mxu0
        %3082 = vmatprep.mubr.bf16.mxu0 %v2210
        %3083 = vmatmul.mubr.bf16.gmra.mrb[0].mxu0 %v2201
        %v3084 = vpop.f32.mrb[0].mxu0
        %v3085 = vadd.f32 %v2988, %v3084
        %v3086 = vpop.f32.mrb[0].mxu0
        %v3087 = vpop.f32.mrb[0].mxu0
        %v3088 = vadd.f32 %v2991, %v3087
        %v3089 = vpop.f32.mrb[0].mxu0
        %3090 = vmatprep.mubr.bf16.mxu0 %v2281
        %3091 = vmatmul.mubr.bf16.gmra.mrb[0].mxu0 %v2272
        %v3092 = vpop.f32.mrb[0].mxu0
        %v3093 = vadd.f32 %v2996, %v3092
        %v3094 = vpop.f32.mrb[0].mxu0
        %v3095 = vpop.f32.mrb[0].mxu0
        %v3096 = vadd.f32 %v2999, %v3095
        %v3097 = vpop.f32.mrb[0].mxu0
        %3098 = vdwg.mxu0
        %3099 = vmatprep.subr.bf16.mxu0 0
        %3100 = vmatpush1.bf16.msra.mxu0 %v2712
        %3101 = vmatprep.subr.bf16.mxu0 0
        %3102 = vmatpush1.bf16.msra.mxu0 %v2713
        %3103 = vmatprep.subr.bf16.mxu0 0
        %3104 = vmatpush1.bf16.msra.mxu0 %v2714
        %3105 = vmatprep.subr.bf16.mxu0 0
        %3106 = vmatpush1.bf16.msra.mxu0 %v2715
        %3107 = vmatprep.subr.bf16.mxu0 0
        %3108 = vmatpush1.bf16.msra.mxu0 %v2716
        %3109 = vmatprep.subr.bf16.mxu0 0
        %3110 = vmatpush1.bf16.msra.mxu0 %v2717
        %3111 = vmatprep.subr.bf16.mxu0 0
        %3112 = vmatpush1.bf16.msra.mxu0 %v2718
        %3113 = vmatprep.subr.bf16.mxu0 0
        %3114 = vmatpush1.bf16.msra.mxu0 %v2719
        %3115 = vmatprep.subr.bf16.mxu0 0
        %3116 = vmatpush1.bf16.msra.mxu0 %v2720
        %3117 = vmatprep.subr.bf16.mxu0 0
        %3118 = vmatpush1.bf16.msra.mxu0 %v2721
        %3119 = vmatprep.subr.bf16.mxu0 0
        %3120 = vmatpush1.bf16.msra.mxu0 %v2722
        %3121 = vmatprep.subr.bf16.mxu0 0
        %3122 = vmatpush1.bf16.msra.mxu0 %v2723
        %3123 = vmatprep.subr.bf16.mxu0 0
        %3124 = vmatpush1.bf16.msra.mxu0 %v2724
        %3125 = vmatprep.subr.bf16.mxu0 0
        %3126 = vmatpush1.bf16.msra.mxu0 %v2725
        %3127 = vmatprep.subr.bf16.mxu0 0
        %3128 = vmatpush1.bf16.msra.mxu0 %v2726
        %3129 = vmatprep.subr.bf16.mxu0 0
        %3130 = vmatpush1.bf16.msra.mxu0 %v2727
        %3131 = vmatprep.mubr.bf16.mxu0 %v1789
        %3132 = vmatmul.mubr.bf16.gmra.mrb[0].mxu0 %v1772
        %v3133 = vpop.f32.mrb[0].mxu0
        %v3134 = vadd.f32 %v3037, %v3133
        %v3135 = vpop.f32.mrb[0].mxu0
        %v3136 = vpop.f32.mrb[0].mxu0
        %v3137 = vadd.f32 %v3040, %v3136
        %v3138 = vpop.f32.mrb[0].mxu0
        %3139 = vmatprep.mubr.bf16.mxu0 %v1868
        %3140 = vmatmul.mubr.bf16.gmra.mrb[0].mxu0 %v1859
        %v3141 = vpop.f32.mrb[0].mxu0
        %v3142 = vadd.f32 %v3045, %v3141
        %v3143 = vpop.f32.mrb[0].mxu0
        %v3144 = vpop.f32.mrb[0].mxu0
        %v3145 = vadd.f32 %v3048, %v3144
        %v3146 = vpop.f32.mrb[0].mxu0
        %3147 = vmatprep.mubr.bf16.mxu0 %v1939
        %3148 = vmatmul.mubr.bf16.gmra.mrb[0].mxu0 %v1930
        %v3149 = vpop.f32.mrb[0].mxu0
        %v3150 = vadd.f32 %v3053, %v3149
        %v3151 = vpop.f32.mrb[0].mxu0
        %v3152 = vpop.f32.mrb[0].mxu0
        %v3153 = vadd.f32 %v3056, %v3152
        %v3154 = vpop.f32.mrb[0].mxu0
        %3155 = vmatprep.mubr.bf16.mxu0 %v2010
        %3156 = vmatmul.mubr.bf16.gmra.mrb[0].mxu0 %v2001
        %v3157 = vpop.f32.mrb[0].mxu0
        %v3158 = vadd.f32 %v3061, %v3157
        %v3159 = vpop.f32.mrb[0].mxu0
        %v3160 = vpop.f32.mrb[0].mxu0
        %v3161 = vadd.f32 %v3064, %v3160
        %v3162 = vpop.f32.mrb[0].mxu0
        %3163 = vmatprep.mubr.bf16.mxu0 %v2081
        %3164 = vmatmul.mubr.bf16.gmra.mrb[0].mxu0 %v2072
        %v3165 = vpop.f32.mrb[0].mxu0
        %v3166 = vadd.f32 %v3069, %v3165
        %v3167 = vpop.f32.mrb[0].mxu0
        %v3168 = vpop.f32.mrb[0].mxu0
        %v3169 = vadd.f32 %v3072, %v3168
        %v3170 = vpop.f32.mrb[0].mxu0
        %3171 = vmatprep.mubr.bf16.mxu0 %v2152
        %3172 = vmatmul.mubr.bf16.gmra.mrb[0].mxu0 %v2143
        %v3173 = vpop.f32.mrb[0].mxu0
        %v3174 = vadd.f32 %v3077, %v3173
        %v3175 = vpop.f32.mrb[0].mxu0
        %v3176 = vpop.f32.mrb[0].mxu0
        %v3177 = vadd.f32 %v3080, %v3176
        %v3178 = vpop.f32.mrb[0].mxu0
        %3179 = vmatprep.mubr.bf16.mxu0 %v2223
        %3180 = vmatmul.mubr.bf16.gmra.mrb[0].mxu0 %v2214
        %v3181 = vpop.f32.mrb[0].mxu0
        %v3182 = vadd.f32 %v3085, %v3181
        %v3183 = vpop.f32.mrb[0].mxu0
        %v3184 = vpop.f32.mrb[0].mxu0
        %v3185 = vadd.f32 %v3088, %v3184
        %v3186 = vpop.f32.mrb[0].mxu0
        %3187 = vmatprep.mubr.bf16.mxu0 %v2294
        %3188 = vmatmul.mubr.bf16.gmra.mrb[0].mxu0 %v2285
        %v3189 = vpop.f32.mrb[0].mxu0
        %v3190 = vadd.f32 %v3093, %v3189
        %v3191 = vpop.f32.mrb[0].mxu0
        %v3192 = vpop.f32.mrb[0].mxu0
        %v3193 = vadd.f32 %v3096, %v3192
        %v3194 = vpop.f32.mrb[0].mxu0
        %3195 = vdwg.mxu0
        %3196 = vmatprep.subr.bf16.mxu0 0
        %3197 = vmatpush1.bf16.msra.mxu0 %v2728
        %3198 = vmatprep.subr.bf16.mxu0 0
        %3199 = vmatpush1.bf16.msra.mxu0 %v2729
        %3200 = vmatprep.subr.bf16.mxu0 0
        %3201 = vmatpush1.bf16.msra.mxu0 %v2730
        %3202 = vmatprep.subr.bf16.mxu0 0
        %3203 = vmatpush1.bf16.msra.mxu0 %v2731
        %3204 = vmatprep.subr.bf16.mxu0 0
        %3205 = vmatpush1.bf16.msra.mxu0 %v2732
        %3206 = vmatprep.subr.bf16.mxu0 0
        %3207 = vmatpush1.bf16.msra.mxu0 %v2733
        %3208 = vmatprep.subr.bf16.mxu0 0
        %3209 = vmatpush1.bf16.msra.mxu0 %v2734
        %3210 = vmatprep.subr.bf16.mxu0 0
        %3211 = vmatpush1.bf16.msra.mxu0 %v2735
        %3212 = vmatprep.subr.bf16.mxu0 0
        %3213 = vmatpush1.bf16.msra.mxu0 0
        %3214 = vmatprep.subr.bf16.mxu0 0
        %3215 = vmatpush1.bf16.msra.mxu0 0
        %3216 = vmatprep.subr.bf16.mxu0 0
        %3217 = vmatpush1.bf16.msra.mxu0 0
        %3218 = vmatprep.subr.bf16.mxu0 0
        %3219 = vmatpush1.bf16.msra.mxu0 0
        %3220 = vmatprep.subr.bf16.mxu0 0
        %3221 = vmatpush1.bf16.msra.mxu0 0
        %3222 = vmatprep.subr.bf16.mxu0 0
        %3223 = vmatpush1.bf16.msra.mxu0 0
        %3224 = vmatprep.subr.bf16.mxu0 0
        %3225 = vmatpush1.bf16.msra.mxu0 0
        %3226 = vmatprep.subr.bf16.mxu0 0
        %3227 = vmatpush1.bf16.msra.mxu0 0
        %3228 = vmatprep.mubr.bf16.mxu0 0
        %3229 = vmatmul.mubr.bf16.gmra.mrb[0].mxu0 %v1806
        %v3230 = vpop.f32.mrb[0].mxu0
        %v3231 = vadd.f32 %v3134, %v3230
        %v3232 = vpop.f32.mrb[0].mxu0
        %v3233 = vpop.f32.mrb[0].mxu0
        %v3234 = vadd.f32 %v3137, %v3233
        %v3235 = vpop.f32.mrb[0].mxu0
        %3236 = vmatprep.mubr.bf16.mxu0 0
        %3237 = vmatmul.mubr.bf16.gmra.mrb[0].mxu0 %v1877
        %v3238 = vpop.f32.mrb[0].mxu0
        %v3239 = vadd.f32 %v3142, %v3238
        %v3240 = vpop.f32.mrb[0].mxu0
        %v3241 = vpop.f32.mrb[0].mxu0
        %v3242 = vadd.f32 %v3145, %v3241
        %v3243 = vpop.f32.mrb[0].mxu0
        %3244 = vmatprep.mubr.bf16.mxu0 0
        %3245 = vmatmul.mubr.bf16.gmra.mrb[0].mxu0 %v1948
        %v3246 = vpop.f32.mrb[0].mxu0
        %v3247 = vadd.f32 %v3150, %v3246
        %v3248 = vpop.f32.mrb[0].mxu0
        %v3249 = vpop.f32.mrb[0].mxu0
        %v3250 = vadd.f32 %v3153, %v3249
        %v3251 = vpop.f32.mrb[0].mxu0
        %3252 = vmatprep.mubr.bf16.mxu0 0
        %3253 = vmatmul.mubr.bf16.gmra.mrb[0].mxu0 %v2019
        %v3254 = vpop.f32.mrb[0].mxu0
        %v3255 = vadd.f32 %v3158, %v3254
        %v3256 = vpop.f32.mrb[0].mxu0
        %v3257 = vpop.f32.mrb[0].mxu0
        %v3258 = vadd.f32 %v3161, %v3257
        %v3259 = vpop.f32.mrb[0].mxu0
        %3260 = vmatprep.mubr.bf16.mxu0 0
        %3261 = vmatmul.mubr.bf16.gmra.mrb[0].mxu0 %v2090
        %v3262 = vpop.f32.mrb[0].mxu0
        %v3263 = vadd.f32 %v3166, %v3262
        %v3264 = vpop.f32.mrb[0].mxu0
        %v3265 = vpop.f32.mrb[0].mxu0
        %v3266 = vadd.f32 %v3169, %v3265
        %v3267 = vpop.f32.mrb[0].mxu0
        %3268 = vmatprep.mubr.bf16.mxu0 0
        %3269 = vmatmul.mubr.bf16.gmra.mrb[0].mxu0 %v2161
        %v3270 = vpop.f32.mrb[0].mxu0
        %v3271 = vadd.f32 %v3174, %v3270
        %v3272 = vpop.f32.mrb[0].mxu0
        %v3273 = vpop.f32.mrb[0].mxu0
        %v3274 = vadd.f32 %v3177, %v3273
        %v3275 = vpop.f32.mrb[0].mxu0
        %3276 = vmatprep.mubr.bf16.mxu0 0
        %3277 = vmatmul.mubr.bf16.gmra.mrb[0].mxu0 %v2232
        %v3278 = vpop.f32.mrb[0].mxu0
        %v3279 = vadd.f32 %v3182, %v3278
        %v3280 = vpop.f32.mrb[0].mxu0
        %v3281 = vpop.f32.mrb[0].mxu0
        %v3282 = vadd.f32 %v3185, %v3281
        %v3283 = vpop.f32.mrb[0].mxu0
        %3284 = vmatprep.mubr.bf16.mxu0 0
        %3285 = vmatmul.mubr.bf16.gmra.mrb[0].mxu0 %v2303
        %v3286 = vpop.f32.mrb[0].mxu0
        %v3287 = vadd.f32 %v3190, %v3286
        %v3288 = vpop.f32.mrb[0].mxu0
        %v3289 = vpop.f32.mrb[0].mxu0
        %v3290 = vadd.f32 %v3193, %v3289
        %v3291 = vpop.f32.mrb[0].mxu0
        %3292 = vdwg.mxu0
        %v3293 = vmax.f32 %v3231, 0.0
        %v3294 = vmax.f32 %v3234, 0.0
        %v3295 = vmax.f32 %v3239, 0.0
        %v3296 = vmax.f32 %v3242, 0.0
        %v3297 = vmax.f32 %v3247, 0.0
        %v3298 = vmax.f32 %v3250, 0.0
        %v3299 = vmax.f32 %v3255, 0.0
        %v3300 = vmax.f32 %v3258, 0.0
        %v3301 = vmax.f32 %v3263, 0.0
        %v3302 = vmax.f32 %v3266, 0.0
        %v3303 = vmax.f32 %v3271, 0.0
        %v3304 = vmax.f32 %v3274, 0.0
        %v3305 = vmax.f32 %v3279, 0.0
        %v3306 = vmax.f32 %v3282, 0.0
        %v3307 = vmax.f32 %v3287, 0.0
        %v3308 = vmax.f32 %v3290, 0.0
        %v3309 = vsel %vm1123, %v3293, 0.0
        %v3310 = vsel %vm1124, %v3294, 0.0
        %v3311 = vsel %vm1125, %v3295, 0.0
        %v3312 = vsel %vm1126, %v3296, 0.0
        %v3313 = vsel %vm1127, %v3297, 0.0
        %v3314 = vsel %vm1128, %v3298, 0.0
        %v3315 = vsel %vm1129, %v3299, 0.0
        %v3316 = vsel %vm1130, %v3300, 0.0
        %v3317 = vsel %vm1131, %v3301, 0.0
        %v3318 = vsel %vm1132, %v3302, 0.0
        %v3319 = vsel %vm1133, %v3303, 0.0
        %v3320 = vsel %vm1134, %v3304, 0.0
        %v3321 = vsel %vm1135, %v3305, 0.0
        %v3322 = vsel %vm1136, %v3306, 0.0
        %v3323 = vsel %vm1137, %v3307, 0.0
        %v3324 = vsel %vm1138, %v3308, 0.0
        %v3325 = vpack.c.bf16 %v3310, %v3309
        %v3326 = vpack.c.bf16 %v3312, %v3311
        %v3327 = vpack.c.bf16 %v3314, %v3313
        %v3328 = vpack.c.bf16 %v3316, %v3315
        %v3329 = vpack.c.bf16 %v3318, %v3317
        %v3330 = vpack.c.bf16 %v3320, %v3319
        %v3331 = vpack.c.bf16 %v3322, %v3321
        %v3332 = vpack.c.bf16 %v3324, %v3323
        %v3333 = vld [vmem:[#allocation20] sm:$0xf]
        %v3334 = vld [vmem:[#allocation20 + $0x4] sm:$0xf]
        %v3335 = vld [vmem:[#allocation20 + $0x8] sm:$0xf]
        %v3336 = vld [vmem:[#allocation20 + $0xc] sm:$0xf]
        %v3337 = vld [vmem:[#allocation20 + $0x10] sm:$0xf]
        %v3338 = vld [vmem:[#allocation20 + $0x14] sm:$0xf]
        %v3339 = vld [vmem:[#allocation20 + $0x18] sm:$0xf]
        %v3340 = vld [vmem:[#allocation20 + $0x1c] sm:$0xf]
        %v3341 = vld [vmem:[#allocation20 + $0x20] sm:$0xf]
        %v3342 = vld [vmem:[#allocation20 + $0x24] sm:$0xf]
        %v3343 = vld [vmem:[#allocation20 + $0x28] sm:$0xf]
        %v3344 = vld [vmem:[#allocation20 + $0x2c] sm:$0xf]
        %v3345 = vld [vmem:[#allocation20 + $0x30] sm:$0xf]
        %v3346 = vld [vmem:[#allocation20 + $0x34] sm:$0xf]
        %v3347 = vld [vmem:[#allocation20 + $0x38] sm:$0xf]
        %v3348 = vld [vmem:[#allocation20 + $0x3c] sm:$0xf]
        %v3349 = vld [vmem:[#allocation21] sm:$0x1]
        %v3351 = vlaneseq
        %v3352 = vshrl.u32 %v3351, 7
        %v3353 = vsub.s32 0, %v3352
        %v3354 = vrot.slane %v3349, %v3353
        %v3372 = vunpack.c.l.b16 %v3333
        %v3373 = vunpack.c.l.b16 %v3334
        %v3374 = vunpack.c.l.b16 %v3335
        %v3375 = vunpack.c.l.b16 %v3336
        %v3376 = vunpack.c.l.b16 %v3337
        %v3377 = vunpack.c.l.b16 %v3338
        %v3378 = vunpack.c.l.b16 %v3339
        %v3379 = vunpack.c.l.b16 %v3340
        %v3380 = vunpack.c.l.b16 %v3341
        %v3381 = vunpack.c.l.b16 %v3342
        %v3382 = vunpack.c.l.b16 %v3343
        %v3383 = vunpack.c.l.b16 %v3344
        %v3384 = vunpack.c.l.b16 %v3345
        %v3385 = vunpack.c.l.b16 %v3346
        %v3386 = vunpack.c.l.b16 %v3347
        %v3387 = vunpack.c.l.b16 %v3348
        %v3388 = vpack.c.b16 %v3373, %v3372
        %v3389 = vpack.c.b16 %v3375, %v3374
        %v3390 = vpack.c.b16 %v3377, %v3376
        %v3391 = vpack.c.b16 %v3379, %v3378
        %v3392 = vpack.c.b16 %v3381, %v3380
        %v3393 = vpack.c.b16 %v3383, %v3382
        %v3394 = vpack.c.b16 %v3385, %v3384
        %v3395 = vpack.c.b16 %v3387, %v3386
        %3404 = vmatprep.subr.bf16.mxu0 0
        %3405 = vmatpush1.bf16.msra.mxu0 %v3388
        %3406 = vmatprep.subr.bf16.mxu0 0
        %3407 = vmatpush1.bf16.msra.mxu0 %v3389
        %3408 = vmatprep.subr.bf16.mxu0 0
        %3409 = vmatpush1.bf16.msra.mxu0 %v3390
        %3410 = vmatprep.subr.bf16.mxu0 0
        %3411 = vmatpush1.bf16.msra.mxu0 %v3391
        %3412 = vmatprep.subr.bf16.mxu0 0
        %3413 = vmatpush1.bf16.msra.mxu0 %v3392
        %3414 = vmatprep.subr.bf16.mxu0 0
        %3415 = vmatpush1.bf16.msra.mxu0 %v3393
        %3416 = vmatprep.subr.bf16.mxu0 0
        %3417 = vmatpush1.bf16.msra.mxu0 %v3394
        %3418 = vmatprep.subr.bf16.mxu0 0
        %3419 = vmatpush1.bf16.msra.mxu0 %v3395
        %3420 = vmatprep.subr.bf16.mxu0 0
        %3421 = vmatpush1.bf16.msra.mxu0 0
        %3422 = vmatprep.subr.bf16.mxu0 0
        %3423 = vmatpush1.bf16.msra.mxu0 0
        %3424 = vmatprep.subr.bf16.mxu0 0
        %3425 = vmatpush1.bf16.msra.mxu0 0
        %3426 = vmatprep.subr.bf16.mxu0 0
        %3427 = vmatpush1.bf16.msra.mxu0 0
        %3428 = vmatprep.subr.bf16.mxu0 0
        %3429 = vmatpush1.bf16.msra.mxu0 0
        %3430 = vmatprep.subr.bf16.mxu0 0
        %3431 = vmatpush1.bf16.msra.mxu0 0
        %3432 = vmatprep.subr.bf16.mxu0 0
        %3433 = vmatpush1.bf16.msra.mxu0 0
        %3434 = vmatprep.subr.bf16.mxu0 0
        %3435 = vmatpush1.bf16.msra.mxu0 0
        %3436 = vmatprep.mubr.bf16.mxu0 0
        %3437 = vmatmul.mubr.bf16.gmra.mrb[0].mxu0 %v3325
        %v3438 = vpop.f32.mrb[0].mxu0
        %v3439 = vadd.f32 %v3354, %v3438
        %v3440 = vpop.f32.mrb[0].mxu0
        %v3441 = vpop.f32.mrb[0].mxu0
        %v3442 = vadd.f32 %v3354, %v3441
        %v3443 = vpop.f32.mrb[0].mxu0
        %3444 = vmatprep.mubr.bf16.mxu0 0
        %3445 = vmatmul.mubr.bf16.gmra.mrb[0].mxu0 %v3326
        %v3446 = vpop.f32.mrb[0].mxu0
        %v3447 = vadd.f32 %v3354, %v3446
        %v3448 = vpop.f32.mrb[0].mxu0
        %v3449 = vpop.f32.mrb[0].mxu0
        %v3450 = vadd.f32 %v3354, %v3449
        %v3451 = vpop.f32.mrb[0].mxu0
        %3452 = vmatprep.mubr.bf16.mxu0 0
        %3453 = vmatmul.mubr.bf16.gmra.mrb[0].mxu0 %v3327
        %v3454 = vpop.f32.mrb[0].mxu0
        %v3455 = vadd.f32 %v3354, %v3454
        %v3456 = vpop.f32.mrb[0].mxu0
        %v3457 = vpop.f32.mrb[0].mxu0
        %v3458 = vadd.f32 %v3354, %v3457
        %v3459 = vpop.f32.mrb[0].mxu0
        %3460 = vmatprep.mubr.bf16.mxu0 0
        %3461 = vmatmul.mubr.bf16.gmra.mrb[0].mxu0 %v3328
        %v3462 = vpop.f32.mrb[0].mxu0
        %v3463 = vadd.f32 %v3354, %v3462
        %v3464 = vpop.f32.mrb[0].mxu0
        %v3465 = vpop.f32.mrb[0].mxu0
        %v3466 = vadd.f32 %v3354, %v3465
        %v3467 = vpop.f32.mrb[0].mxu0
        %3468 = vmatprep.mubr.bf16.mxu0 0
        %3469 = vmatmul.mubr.bf16.gmra.mrb[0].mxu0 %v3329
        %v3470 = vpop.f32.mrb[0].mxu0
        %v3471 = vadd.f32 %v3354, %v3470
        %v3472 = vpop.f32.mrb[0].mxu0
        %v3473 = vpop.f32.mrb[0].mxu0
        %v3474 = vadd.f32 %v3354, %v3473
        %v3475 = vpop.f32.mrb[0].mxu0
        %3476 = vmatprep.mubr.bf16.mxu0 0
        %3477 = vmatmul.mubr.bf16.gmra.mrb[0].mxu0 %v3330
        %v3478 = vpop.f32.mrb[0].mxu0
        %v3479 = vadd.f32 %v3354, %v3478
        %v3480 = vpop.f32.mrb[0].mxu0
        %v3481 = vpop.f32.mrb[0].mxu0
        %v3482 = vadd.f32 %v3354, %v3481
        %v3483 = vpop.f32.mrb[0].mxu0
        %3484 = vmatprep.mubr.bf16.mxu0 0
        %3485 = vmatmul.mubr.bf16.gmra.mrb[0].mxu0 %v3331
        %v3486 = vpop.f32.mrb[0].mxu0
        %v3487 = vadd.f32 %v3354, %v3486
        %v3488 = vpop.f32.mrb[0].mxu0
        %v3489 = vpop.f32.mrb[0].mxu0
        %v3490 = vadd.f32 %v3354, %v3489
        %v3491 = vpop.f32.mrb[0].mxu0
        %3492 = vmatprep.mubr.bf16.mxu0 0
        %3493 = vmatmul.mubr.bf16.gmra.mrb[0].mxu0 %v3332
        %v3494 = vpop.f32.mrb[0].mxu0
        %v3495 = vadd.f32 %v3354, %v3494
        %v3496 = vpop.f32.mrb[0].mxu0
        %v3497 = vpop.f32.mrb[0].mxu0
        %v3498 = vadd.f32 %v3354, %v3497
        %v3499 = vpop.f32.mrb[0].mxu0
        %3500 = vdwg.mxu0
        %v3501 = vunpack.c.l.bf16 %v742
        %v3502 = vunpack.c.l.bf16 %v743
        %v3503 = vunpack.c.l.bf16 %v744
        %v3504 = vunpack.c.l.bf16 %v745
        %v3505 = vunpack.c.l.bf16 %v746
        %v3506 = vunpack.c.l.bf16 %v747
        %v3507 = vunpack.c.l.bf16 %v748
        %v3508 = vunpack.c.l.bf16 %v749
        %v3509 = vunpack.c.l.bf16 %v750
        %v3510 = vunpack.c.l.bf16 %v751
        %v3511 = vunpack.c.l.bf16 %v752
        %v3512 = vunpack.c.l.bf16 %v753
        %v3513 = vunpack.c.l.bf16 %v754
        %v3514 = vunpack.c.l.bf16 %v755
        %v3515 = vunpack.c.l.bf16 %v756
        %v3516 = vunpack.c.l.bf16 %v757
        %v3517 = vadd.f32 %v3439, %v3501
        %v3518 = vadd.f32 %v3442, %v3502
        %v3519 = vadd.f32 %v3447, %v3503
        %v3520 = vadd.f32 %v3450, %v3504
        %v3521 = vadd.f32 %v3455, %v3505
        %v3522 = vadd.f32 %v3458, %v3506
        %v3523 = vadd.f32 %v3463, %v3507
        %v3524 = vadd.f32 %v3466, %v3508
        %v3525 = vadd.f32 %v3471, %v3509
        %v3526 = vadd.f32 %v3474, %v3510
        %v3527 = vadd.f32 %v3479, %v3511
        %v3528 = vadd.f32 %v3482, %v3512
        %v3529 = vadd.f32 %v3487, %v3513
        %v3530 = vadd.f32 %v3490, %v3514
        %v3531 = vadd.f32 %v3495, %v3515
        %v3532 = vadd.f32 %v3498, %v3516
        %v3533 = vsel %vm1123, %v3517, 0.0
        %v3534 = vsel %vm1124, %v3518, 0.0
        %v3535 = vsel %vm1125, %v3519, 0.0
        %v3536 = vsel %vm1126, %v3520, 0.0
        %v3537 = vsel %vm1127, %v3521, 0.0
        %v3538 = vsel %vm1128, %v3522, 0.0
        %v3539 = vsel %vm1129, %v3523, 0.0
        %v3540 = vsel %vm1130, %v3524, 0.0
        %v3541 = vsel %vm1131, %v3525, 0.0
        %v3542 = vsel %vm1132, %v3526, 0.0
        %v3543 = vsel %vm1133, %v3527, 0.0
        %v3544 = vsel %vm1134, %v3528, 0.0
        %v3545 = vsel %vm1135, %v3529, 0.0
        %v3546 = vsel %vm1136, %v3530, 0.0
        %v3547 = vsel %vm1137, %v3531, 0.0
        %v3548 = vsel %vm1138, %v3532, 0.0
        %v3549 = vpack.c.bf16 %v3534, %v3533
        %v3550 = vpack.c.bf16 %v3536, %v3535
        %v3551 = vpack.c.bf16 %v3538, %v3537
        %v3552 = vpack.c.bf16 %v3540, %v3539
        %v3553 = vpack.c.bf16 %v3542, %v3541
        %v3554 = vpack.c.bf16 %v3544, %v3543
        %v3555 = vpack.c.bf16 %v3546, %v3545
        %v3556 = vpack.c.bf16 %v3548, %v3547
        %v3565 = vunpack.c.l.b16 %v3549
        %v3566 = vunpack.c.h.b16 %v3549
        %v3567 = vunpack.c.l.b16 %v3550
        %v3568 = vunpack.c.h.b16 %v3550
        %v3569 = vunpack.c.l.b16 %v3551
        %v3570 = vunpack.c.h.b16 %v3551
        %v3571 = vunpack.c.l.b16 %v3552
        %v3572 = vunpack.c.h.b16 %v3552
        %v3573 = vunpack.c.l.b16 %v3553
        %v3574 = vunpack.c.h.b16 %v3553
        %v3575 = vunpack.c.l.b16 %v3554
        %v3576 = vunpack.c.h.b16 %v3554
        %v3577 = vunpack.c.l.b16 %v3555
        %v3578 = vunpack.c.h.b16 %v3555
        %v3579 = vunpack.c.l.b16 %v3556
        %v3580 = vunpack.c.h.b16 %v3556
        %v3581 = vpack.c.b16 %v3565, %v3565
        %v3582 = vpack.c.b16 %v3566, %v3566
        %v3583 = vpack.c.b16 %v3567, %v3567
        %v3584 = vpack.c.b16 %v3568, %v3568
        %v3585 = vpack.c.b16 %v3569, %v3569
        %v3586 = vpack.c.b16 %v3570, %v3570
        %v3587 = vpack.c.b16 %v3571, %v3571
        %v3588 = vpack.c.b16 %v3572, %v3572
        %v3589 = vpack.c.b16 %v3573, %v3573
        %v3590 = vpack.c.b16 %v3574, %v3574
        %v3591 = vpack.c.b16 %v3575, %v3575
        %v3592 = vpack.c.b16 %v3576, %v3576
        %v3593 = vpack.c.b16 %v3577, %v3577
        %v3594 = vpack.c.b16 %v3578, %v3578
        %v3595 = vpack.c.b16 %v3579, %v3579
        %v3596 = vpack.c.b16 %v3580, %v3580
        %3613 = vst [vmem:[%s719] sm:$0xf] %v3581
        %3614 = vst [vmem:[%s719 + $0x4] sm:$0xf] %v3582
        %3615 = vst [vmem:[%s719 + $0x8] sm:$0xf] %v3583
        %3616 = vst [vmem:[%s719 + $0xc] sm:$0xf] %v3584
        %3617 = vst [vmem:[%s719 + $0x10] sm:$0xf] %v3585
        %3618 = vst [vmem:[%s719 + $0x14] sm:$0xf] %v3586
        %3619 = vst [vmem:[%s719 + $0x18] sm:$0xf] %v3587
        %3620 = vst [vmem:[%s719 + $0x1c] sm:$0xf] %v3588
        %3621 = vst [vmem:[%s719 + $0x20] sm:$0xf] %v3589
        %3622 = vst [vmem:[%s719 + $0x24] sm:$0xf] %v3590
        %3623 = vst [vmem:[%s719 + $0x28] sm:$0xf] %v3591
        %3624 = vst [vmem:[%s719 + $0x2c] sm:$0xf] %v3592
        %3625 = vst [vmem:[%s719 + $0x30] sm:$0xf] %v3593
        %3626 = vst [vmem:[%s719 + $0x34] sm:$0xf] %v3594
        %3627 = vst [vmem:[%s719 + $0x38] sm:$0xf] %v3595
        %3628 = vst [vmem:[%s719 + $0x3c] sm:$0xf] %v3596
        %s3629 = sand.u32 %s379, 1
        %s3630 = scalar_lea.sflag [#allocation5], %s3629
        %s3631 = sand.u32 %s379, 1
        %s3632 = smul.addr %s3631, 64
        %s3633 = scalar_lea.vmem [#allocation23], %s3632
        // Predicated region
        $region117: #{_lambda_.10} parent=67 // pred_check
          %p3634 = pneg %p389
        $region118: #{_lambda_.10} parent=67 // pred_check_branch
          %3636 = sbr.rel (%p3634) target = $region120
        $region119: #{_lambda_.10} parent=67 // pred_region
          %s3637 = smul.u32 16, %s42
          %s3639 = ssub.s32 1024, 1024
          %3640 = vsyncadd %s3630, %s3639
          %s3641 = smul.addr %s41, 16
          %s3642 = sadd.s32 %s3637, %s3641
          %s3643 = smul.addr %s3642, 64
          %s3644 = scalar_lea.hbm %s12, %s3643
          %s3645 = sshll.u32 %s3633, 4
          %s3646 = int_to_ptr.vmem [resolvable:$true] %s3645
          %3651 = dma.vmem_to_hbm [thread:$0]  %s3646, 1024, %s3644, %s3630, 64, 64, 4
        $region120: #{_lambda_.10} parent=67 // pred_fallthru
          _
      $region68: #{_lambda_.10} parent=5 // pred_fallthru
        _
      %p3652 = scmp.le.s32.totalorder 2, %s32
      // Predicated region
      $region121: #{_lambda_.10} parent=5 // pred_check
        %p3653 = pneg %p3652
      $region122: #{_lambda_.10} parent=5 // pred_check_branch
        %3655 = sbr.rel (%p3653) target = $region124
      $region123: #{_lambda_.10} parent=5 // pred_region
        %s3656 = ssub.s32 %s32, 2
        // Predicated region
        $region125: #{_lambda_.10} parent=123 // pred_check
          %p3657 = pneg %p395
        $region126: #{_lambda_.10} parent=123 // pred_check_branch
          %3659 = sbr.rel (%p3657) target = $region128
        $region127: #{_lambda_.10} parent=123 // pred_region
          %s3660 = sand.u32 %s380, 1
          %s3661 = scalar_lea.sflag [#allocation5], %s3660
          %s3662 = sand.u32 %s380, 1
          %s3663 = smul.addr %s3662, 64
          %s3664 = scalar_lea.vmem [#allocation23], %s3663
          %3665 = dma.done %s3661, 1024
        $region128: #{_lambda_.10} parent=123 // pred_fallthru
          _
      $region124: #{_lambda_.10} parent=5 // pred_fallthru
        _
    $region6: #{_lambda_.10} parent=1 // loop_footer
      %s36 = sadd.s32 1, %s32
    $region7: #{_lambda_.10} parent=1 // loop_footer_branch
      %31 = sbr.rel target = $region3
    $region8: #{_lambda_.10} parent=1 // loop_exit
      _
    %3666 = vsyncpa [#allocation4], 1
    %s3667 = scalar_lea.sflag [#allocation4], 1
    %3668 = vsyncpa %s3667, 1
    %3669 = vsyncpa [#allocation7], 1
    %s3670 = scalar_lea.sflag [#allocation7], 1
    %3671 = vsyncpa %s3670, 1
    %3672 = vsyncpa [#allocation10], 1
    %3673 = vsyncpa [#allocation13], 1
    %3674 = vsyncpa [#allocation16], 1
    %3675 = vsyncpa [#allocation19], 1
    %3676 = vsyncpa [#allocation22], 1
    %3677 = vsyncpa [#allocation5], 1
    %s3678 = scalar_lea.sflag [#allocation5], 1
    %3679 = vsyncpa %s3678, 1

// kernel: _lambda_.13
$region0: #{_lambda_.13}
  #allocation0 [shape = 'u32[]', space=smem, size = 0x4, offset = 0x4, fixed_abs, tag = 'smem constant byte address 0x4 - core index']
  #allocation1 [shape = 'u32[144,128]{1,0:T(1,128)}', space=vmem, size = 0x12000, scoped, tag = 'internal scratch']
  %s0 = inlined_call_operand.hbm [shape: bf16[8,896], index: 0, kind: input, shape index: {}]
  %s1 = inlined_call_operand.hbm [shape: bf16[896,128], index: 1, kind: input, shape index: {}]
  %s2 = inlined_call_operand.hbm [shape: f32[1,128], index: 2, kind: input, shape index: {}]
  %s3 = inlined_call_operand.hbm [shape: bf16[8,128], index: 3, kind: output, shape index: {}]
  %s4 = sld [smem:[#allocation0]]
  $region34: #{_lambda_.13} parent=0
    _
  %s6 = ssub.s32 1, %s4
  %s7 = scalar_select 0, %s6, %s4
  $region1: #{_lambda_.13} parent=0
    #allocation2 [shape = 'u8[14336]{0}', space=vmem, size = 0x3800, scoped, tag = 'input window, operand 0, single buffered']
    #allocation3 [shape = 's32[1]{0}', space=sflag, size = 0x4, scoped, tag = 'scoped memory for _lambda_.13']
    #allocation4 [shape = 's32[1]{0}', space=sflag, size = 0x4, scoped, tag = 'scoped memory for _lambda_.13']
    #allocation5 [shape = 'u8[229376]{0}', space=vmem, size = 0x38000, scoped, tag = 'input window, operand 1, single buffered']
    #allocation6 [shape = 's32[1]{0}', space=sflag, size = 0x4, scoped, tag = 'scoped memory for _lambda_.13']
    #allocation7 [shape = 'u8[512]{0}', space=vmem, size = 0x400, scoped, tag = 'input window, operand 2, single buffered']
    #allocation8 [shape = 'u8[2048]{0}', space=vmem, size = 0x800, scoped, tag = 'output window, operand 0, single buffered']
    %8 = vsyncpa [#allocation3], 0
    %9 = vsyncpa [#allocation6], 0
    %10 = vsyncpa [#allocation4], 0
    // Predicated region
    $region2: #{_lambda_.13} parent=1 // pred_check
      _
    $region3: #{_lambda_.13} parent=1 // pred_check_branch
      %12 = sbr.rel (0) target = $region5
    $region4: #{_lambda_.13} parent=1 // pred_region
      %s14 = ssub.s32 448, 448
      %15 = vsyncadd [#allocation3], %s14
      %s17 = sshll.u32 [#allocation2], 4
      %s18 = int_to_ptr.vmem [resolvable:$true] %s17
      %20 = dma.hbm_to_vmem [thread:$0]  %s0, 448, %s18, [#allocation3]
    $region5: #{_lambda_.13} parent=1 // pred_fallthru
      _
    // Predicated region
    $region6: #{_lambda_.13} parent=1 // pred_check
      _
    $region7: #{_lambda_.13} parent=1 // pred_check_branch
      %22 = sbr.rel (0) target = $region9
    $region8: #{_lambda_.13} parent=1 // pred_region
      %s24 = ssub.s32 7168, 7168
      %25 = vsyncadd [#allocation6], %s24
      %s26 = sshll.u32 [#allocation5], 4
      %s27 = int_to_ptr.vmem [resolvable:$true] %s26
      %32 = dma.hbm_to_vmem [thread:$0]  %s1, 7168, %s27, [#allocation6], 64, 64, 4
    $region9: #{_lambda_.13} parent=1 // pred_fallthru
      _
    // Predicated region
    $region10: #{_lambda_.13} parent=1 // pred_check
      _
    $region11: #{_lambda_.13} parent=1 // pred_check_branch
      %34 = sbr.rel (0) target = $region13
    $region12: #{_lambda_.13} parent=1 // pred_region
      %s36 = ssub.s32 16, 16
      %37 = vsyncadd [#allocation6], %s36
      %s39 = sshll.u32 [#allocation7], 4
      %s40 = int_to_ptr.vmem [resolvable:$true] %s39
      %42 = dma.hbm_to_vmem [thread:$0]  %s2, 16, %s40, [#allocation6]
    $region13: #{_lambda_.13} parent=1 // pred_fallthru
      _
    // Predicated region
    $region14: #{_lambda_.13} parent=1 // pred_check
      _
    $region15: #{_lambda_.13} parent=1 // pred_check_branch
      %44 = sbr.rel (0) target = $region17
    $region16: #{_lambda_.13} parent=1 // pred_region
      %45 = dma.done [#allocation3], 448
    $region17: #{_lambda_.13} parent=1 // pred_fallthru
      _
    // Predicated region
    $region18: #{_lambda_.13} parent=1 // pred_check
      _
    $region19: #{_lambda_.13} parent=1 // pred_check_branch
      %47 = sbr.rel (0) target = $region21
    $region20: #{_lambda_.13} parent=1 // pred_region
      %48 = dma.done [#allocation6], 7168
    $region21: #{_lambda_.13} parent=1 // pred_fallthru
      _
    // Predicated region
    $region22: #{_lambda_.13} parent=1 // pred_check
      _
    $region23: #{_lambda_.13} parent=1 // pred_check_branch
      %50 = sbr.rel (0) target = $region25
    $region24: #{_lambda_.13} parent=1 // pred_region
      %51 = dma.done [#allocation6], 16
    $region25: #{_lambda_.13} parent=1 // pred_fallthru
      _
    %v53 = vld [vmem:[#allocation2] sm:$0xff]
    %v54 = vld [vmem:[#allocation2 + $0x8] sm:$0xff]
    %v55 = vld [vmem:[#allocation2 + $0x10] sm:$0xff]
    %v56 = vld [vmem:[#allocation2 + $0x18] sm:$0xf]
    %v57 = vld [vmem:[#allocation5] sm:$0xf]
    %v58 = vld [vmem:[#allocation5 + $0x4] sm:$0xf]
    %v59 = vld [vmem:[#allocation5 + $0x8] sm:$0xf]
    %v60 = vld [vmem:[#allocation5 + $0xc] sm:$0xf]
    %v61 = vld [vmem:[#allocation5 + $0x10] sm:$0xf]
    %v62 = vld [vmem:[#allocation5 + $0x14] sm:$0xf]
    %v63 = vld [vmem:[#allocation5 + $0x18] sm:$0xf]
    %v64 = vld [vmem:[#allocation5 + $0x1c] sm:$0xf]
    %v65 = vld [vmem:[#allocation5 + $0x20] sm:$0xf]
    %v66 = vld [vmem:[#allocation5 + $0x24] sm:$0xf]
    %v67 = vld [vmem:[#allocation5 + $0x28] sm:$0xf]
    %v68 = vld [vmem:[#allocation5 + $0x2c] sm:$0xf]
    %v69 = vld [vmem:[#allocation5 + $0x30] sm:$0xf]
    %v70 = vld [vmem:[#allocation5 + $0x34] sm:$0xf]
    %v71 = vld [vmem:[#allocation5 + $0x38] sm:$0xf]
    %v72 = vld [vmem:[#allocation5 + $0x3c] sm:$0xf]
    %v73 = vld [vmem:[#allocation5 + $0x40] sm:$0xf]
    %v74 = vld [vmem:[#allocation5 + $0x44] sm:$0xf]
    %v75 = vld [vmem:[#allocation5 + $0x48] sm:$0xf]
    %v76 = vld [vmem:[#allocation5 + $0x4c] sm:$0xf]
    %v77 = vld [vmem:[#allocation5 + $0x50] sm:$0xf]
    %v78 = vld [vmem:[#allocation5 + $0x54] sm:$0xf]
    %v79 = vld [vmem:[#allocation5 + $0x58] sm:$0xf]
    %v80 = vld [vmem:[#allocation5 + $0x5c] sm:$0xf]
    %v81 = vld [vmem:[#allocation5 + $0x60] sm:$0xf]
    %v82 = vld [vmem:[#allocation5 + $0x64] sm:$0xf]
    %v83 = vld [vmem:[#allocation5 + $0x68] sm:$0xf]
    %v84 = vld [vmem:[#allocation5 + $0x6c] sm:$0xf]
    %v85 = vld [vmem:[#allocation5 + $0x70] sm:$0xf]
    %v86 = vld [vmem:[#allocation5 + $0x74] sm:$0xf]
    %v87 = vld [vmem:[#allocation5 + $0x78] sm:$0xf]
    %v88 = vld [vmem:[#allocation5 + $0x7c] sm:$0xf]
    %v89 = vld [vmem:[#allocation5 + $0x80] sm:$0xf]
    %v90 = vld [vmem:[#allocation5 + $0x84] sm:$0xf]
    %v91 = vld [vmem:[#allocation5 + $0x88] sm:$0xf]
    %v92 = vld [vmem:[#allocation5 + $0x8c] sm:$0xf]
    %v93 = vld [vmem:[#allocation5 + $0x90] sm:$0xf]
    %v94 = vld [vmem:[#allocation5 + $0x94] sm:$0xf]
    %v95 = vld [vmem:[#allocation5 + $0x98] sm:$0xf]
    %v96 = vld [vmem:[#allocation5 + $0x9c] sm:$0xf]
    %v97 = vld [vmem:[#allocation5 + $0xa0] sm:$0xf]
    %v98 = vld [vmem:[#allocation5 + $0xa4] sm:$0xf]
    %v99 = vld [vmem:[#allocation5 + $0xa8] sm:$0xf]
    %v100 = vld [vmem:[#allocation5 + $0xac] sm:$0xf]
    %v101 = vld [vmem:[#allocation5 + $0xb0] sm:$0xf]
    %v102 = vld [vmem:[#allocation5 + $0xb4] sm:$0xf]
    %v103 = vld [vmem:[#allocation5 + $0xb8] sm:$0xf]
    %v104 = vld [vmem:[#allocation5 + $0xbc] sm:$0xf]
    %v105 = vld [vmem:[#allocation5 + $0xc0] sm:$0xf]
    %v106 = vld [vmem:[#allocation5 + $0xc4] sm:$0xf]
    %v107 = vld [vmem:[#allocation5 + $0xc8] sm:$0xf]
    %v108 = vld [vmem:[#allocation5 + $0xcc] sm:$0xf]
    %v109 = vld [vmem:[#allocation5 + $0xd0] sm:$0xf]
    %v110 = vld [vmem:[#allocation5 + $0xd4] sm:$0xf]
    %v111 = vld [vmem:[#allocation5 + $0xd8] sm:$0xf]
    %v112 = vld [vmem:[#allocation5 + $0xdc] sm:$0xf]
    %v113 = vld [vmem:[#allocation5 + $0xe0] sm:$0xf]
    %v114 = vld [vmem:[#allocation5 + $0xe4] sm:$0xf]
    %v115 = vld [vmem:[#allocation5 + $0xe8] sm:$0xf]
    %v116 = vld [vmem:[#allocation5 + $0xec] sm:$0xf]
    %v117 = vld [vmem:[#allocation5 + $0xf0] sm:$0xf]
    %v118 = vld [vmem:[#allocation5 + $0xf4] sm:$0xf]
    %v119 = vld [vmem:[#allocation5 + $0xf8] sm:$0xf]
    %v120 = vld [vmem:[#allocation5 + $0xfc] sm:$0xf]
    %v121 = vld [vmem:[#allocation5 + $0x100] sm:$0xf]
    %v122 = vld [vmem:[#allocation5 + $0x104] sm:$0xf]
    %v123 = vld [vmem:[#allocation5 + $0x108] sm:$0xf]
    %v124 = vld [vmem:[#allocation5 + $0x10c] sm:$0xf]
    %v125 = vld [vmem:[#allocation5 + $0x110] sm:$0xf]
    %v126 = vld [vmem:[#allocation5 + $0x114] sm:$0xf]
    %v127 = vld [vmem:[#allocation5 + $0x118] sm:$0xf]
    %v128 = vld [vmem:[#allocation5 + $0x11c] sm:$0xf]
    %v129 = vld [vmem:[#allocation5 + $0x120] sm:$0xf]
    %v130 = vld [vmem:[#allocation5 + $0x124] sm:$0xf]
    %v131 = vld [vmem:[#allocation5 + $0x128] sm:$0xf]
    %v132 = vld [vmem:[#allocation5 + $0x12c] sm:$0xf]
    %v133 = vld [vmem:[#allocation5 + $0x130] sm:$0xf]
    %v134 = vld [vmem:[#allocation5 + $0x134] sm:$0xf]
    %v135 = vld [vmem:[#allocation5 + $0x138] sm:$0xf]
    %v136 = vld [vmem:[#allocation5 + $0x13c] sm:$0xf]
    %v137 = vld [vmem:[#allocation5 + $0x140] sm:$0xf]
    %v138 = vld [vmem:[#allocation5 + $0x144] sm:$0xf]
    %v139 = vld [vmem:[#allocation5 + $0x148] sm:$0xf]
    %v140 = vld [vmem:[#allocation5 + $0x14c] sm:$0xf]
    %v141 = vld [vmem:[#allocation5 + $0x150] sm:$0xf]
    %v142 = vld [vmem:[#allocation5 + $0x154] sm:$0xf]
    %v143 = vld [vmem:[#allocation5 + $0x158] sm:$0xf]
    %v144 = vld [vmem:[#allocation5 + $0x15c] sm:$0xf]
    %v145 = vld [vmem:[#allocation5 + $0x160] sm:$0xf]
    %v146 = vld [vmem:[#allocation5 + $0x164] sm:$0xf]
    %v147 = vld [vmem:[#allocation5 + $0x168] sm:$0xf]
    %v148 = vld [vmem:[#allocation5 + $0x16c] sm:$0xf]
    %v149 = vld [vmem:[#allocation5 + $0x170] sm:$0xf]
    %v150 = vld [vmem:[#allocation5 + $0x174] sm:$0xf]
    %v151 = vld [vmem:[#allocation5 + $0x178] sm:$0xf]
    %v152 = vld [vmem:[#allocation5 + $0x17c] sm:$0xf]
    %v153 = vld [vmem:[#allocation5 + $0x180] sm:$0xf]
    %v154 = vld [vmem:[#allocation5 + $0x184] sm:$0xf]
    %v155 = vld [vmem:[#allocation5 + $0x188] sm:$0xf]
    %v156 = vld [vmem:[#allocation5 + $0x18c] sm:$0xf]
    %v157 = vld [vmem:[#allocation5 + $0x190] sm:$0xf]
    %v158 = vld [vmem:[#allocation5 + $0x194] sm:$0xf]
    %v159 = vld [vmem:[#allocation5 + $0x198] sm:$0xf]
    %v160 = vld [vmem:[#allocation5 + $0x19c] sm:$0xf]
    %v161 = vld [vmem:[#allocation5 + $0x1a0] sm:$0xf]
    %v162 = vld [vmem:[#allocation5 + $0x1a4] sm:$0xf]
    %v163 = vld [vmem:[#allocation5 + $0x1a8] sm:$0xf]
    %v164 = vld [vmem:[#allocation5 + $0x1ac] sm:$0xf]
    %v165 = vld [vmem:[#allocation5 + $0x1b0] sm:$0xf]
    %v166 = vld [vmem:[#allocation5 + $0x1b4] sm:$0xf]
    %v167 = vld [vmem:[#allocation5 + $0x1b8] sm:$0xf]
    %v168 = vld [vmem:[#allocation5 + $0x1bc] sm:$0xf]
    %v169 = vld [vmem:[#allocation7] sm:$0x1]
    %v171 = vlaneseq
    %v172 = vshrl.u32 %v171, 7
    %v173 = vsub.s32 0, %v172
    %v174 = vrot.slane %v169, %v173
    %v180 = vunpack.c.l.b16 %v53
    %v181 = vunpack.c.h.b16 %v53
    %v182 = vunpack.c.l.b16 %v54
    %v183 = vunpack.c.h.b16 %v54
    %v184 = vunpack.c.l.b16 %v55
    %v185 = vunpack.c.h.b16 %v55
    %v186 = vunpack.c.l.b16 %v56
    %v187 = vpack.c.b16 %v180, %v180
    %v188 = vpack.c.b16 %v181, %v181
    %v189 = vpack.c.b16 %v182, %v182
    %v190 = vpack.c.b16 %v183, %v183
    %v191 = vpack.c.b16 %v184, %v184
    %v192 = vpack.c.b16 %v185, %v185
    %v193 = vpack.c.b16 %v186, %v186
    %v313 = vunpack.c.l.b16 %v57
    %v314 = vunpack.c.l.b16 %v58
    %v315 = vunpack.c.l.b16 %v59
    %v316 = vunpack.c.l.b16 %v60
    %v317 = vunpack.c.l.b16 %v61
    %v318 = vunpack.c.l.b16 %v62
    %v319 = vunpack.c.l.b16 %v63
    %v320 = vunpack.c.l.b16 %v64
    %v321 = vunpack.c.l.b16 %v65
    %v322 = vunpack.c.l.b16 %v66
    %v323 = vunpack.c.l.b16 %v67
    %v324 = vunpack.c.l.b16 %v68
    %v325 = vunpack.c.l.b16 %v69
    %v326 = vunpack.c.l.b16 %v70
    %v327 = vunpack.c.l.b16 %v71
    %v328 = vunpack.c.l.b16 %v72
    %v329 = vunpack.c.l.b16 %v73
    %v330 = vunpack.c.l.b16 %v74
    %v331 = vunpack.c.l.b16 %v75
    %v332 = vunpack.c.l.b16 %v76
    %v333 = vunpack.c.l.b16 %v77
    %v334 = vunpack.c.l.b16 %v78
    %v335 = vunpack.c.l.b16 %v79
    %v336 = vunpack.c.l.b16 %v80
    %v337 = vunpack.c.l.b16 %v81
    %v338 = vunpack.c.l.b16 %v82
    %v339 = vunpack.c.l.b16 %v83
    %v340 = vunpack.c.l.b16 %v84
    %v341 = vunpack.c.l.b16 %v85
    %v342 = vunpack.c.l.b16 %v86
    %v343 = vunpack.c.l.b16 %v87
    %v344 = vunpack.c.l.b16 %v88
    %v345 = vunpack.c.l.b16 %v89
    %v346 = vunpack.c.l.b16 %v90
    %v347 = vunpack.c.l.b16 %v91
    %v348 = vunpack.c.l.b16 %v92
    %v349 = vunpack.c.l.b16 %v93
    %v350 = vunpack.c.l.b16 %v94
    %v351 = vunpack.c.l.b16 %v95
    %v352 = vunpack.c.l.b16 %v96
    %v353 = vunpack.c.l.b16 %v97
    %v354 = vunpack.c.l.b16 %v98
    %v355 = vunpack.c.l.b16 %v99
    %v356 = vunpack.c.l.b16 %v100
    %v357 = vunpack.c.l.b16 %v101
    %v358 = vunpack.c.l.b16 %v102
    %v359 = vunpack.c.l.b16 %v103
    %v360 = vunpack.c.l.b16 %v104
    %v361 = vunpack.c.l.b16 %v105
    %v362 = vunpack.c.l.b16 %v106
    %v363 = vunpack.c.l.b16 %v107
    %v364 = vunpack.c.l.b16 %v108
    %v365 = vunpack.c.l.b16 %v109
    %v366 = vunpack.c.l.b16 %v110
    %v367 = vunpack.c.l.b16 %v111
    %v368 = vunpack.c.l.b16 %v112
    %v369 = vunpack.c.l.b16 %v113
    %v370 = vunpack.c.l.b16 %v114
    %v371 = vunpack.c.l.b16 %v115
    %v372 = vunpack.c.l.b16 %v116
    %v373 = vunpack.c.l.b16 %v117
    %v374 = vunpack.c.l.b16 %v118
    %v375 = vunpack.c.l.b16 %v119
    %v376 = vunpack.c.l.b16 %v120
    %v377 = vunpack.c.l.b16 %v121
    %v378 = vunpack.c.l.b16 %v122
    %v379 = vunpack.c.l.b16 %v123
    %v380 = vunpack.c.l.b16 %v124
    %v381 = vunpack.c.l.b16 %v125
    %v382 = vunpack.c.l.b16 %v126
    %v383 = vunpack.c.l.b16 %v127
    %v384 = vunpack.c.l.b16 %v128
    %v385 = vunpack.c.l.b16 %v129
    %v386 = vunpack.c.l.b16 %v130
    %v387 = vunpack.c.l.b16 %v131
    %v388 = vunpack.c.l.b16 %v132
    %v389 = vunpack.c.l.b16 %v133
    %v390 = vunpack.c.l.b16 %v134
    %v391 = vunpack.c.l.b16 %v135
    %v392 = vunpack.c.l.b16 %v136
    %v393 = vunpack.c.l.b16 %v137
    %v394 = vunpack.c.l.b16 %v138
    %v395 = vunpack.c.l.b16 %v139
    %v396 = vunpack.c.l.b16 %v140
    %v397 = vunpack.c.l.b16 %v141
    %v398 = vunpack.c.l.b16 %v142
    %v399 = vunpack.c.l.b16 %v143
    %v400 = vunpack.c.l.b16 %v144
    %v401 = vunpack.c.l.b16 %v145
    %v402 = vunpack.c.l.b16 %v146
    %v403 = vunpack.c.l.b16 %v147
    %v404 = vunpack.c.l.b16 %v148
    %v405 = vunpack.c.l.b16 %v149
    %v406 = vunpack.c.l.b16 %v150
    %v407 = vunpack.c.l.b16 %v151
    %v408 = vunpack.c.l.b16 %v152
    %v409 = vunpack.c.l.b16 %v153
    %v410 = vunpack.c.l.b16 %v154
    %v411 = vunpack.c.l.b16 %v155
    %v412 = vunpack.c.l.b16 %v156
    %v413 = vunpack.c.l.b16 %v157
    %v414 = vunpack.c.l.b16 %v158
    %v415 = vunpack.c.l.b16 %v159
    %v416 = vunpack.c.l.b16 %v160
    %v417 = vunpack.c.l.b16 %v161
    %v418 = vunpack.c.l.b16 %v162
    %v419 = vunpack.c.l.b16 %v163
    %v420 = vunpack.c.l.b16 %v164
    %v421 = vunpack.c.l.b16 %v165
    %v422 = vunpack.c.l.b16 %v166
    %v423 = vunpack.c.l.b16 %v167
    %v424 = vunpack.c.l.b16 %v168
    %v425 = vpack.c.b16 %v314, %v313
    %v426 = vpack.c.b16 %v316, %v315
    %v427 = vpack.c.b16 %v318, %v317
    %v428 = vpack.c.b16 %v320, %v319
    %v429 = vpack.c.b16 %v322, %v321
    %v430 = vpack.c.b16 %v324, %v323
    %v431 = vpack.c.b16 %v326, %v325
    %v432 = vpack.c.b16 %v328, %v327
    %v433 = vpack.c.b16 %v330, %v329
    %v434 = vpack.c.b16 %v332, %v331
    %v435 = vpack.c.b16 %v334, %v333
    %v436 = vpack.c.b16 %v336, %v335
    %v437 = vpack.c.b16 %v338, %v337
    %v438 = vpack.c.b16 %v340, %v339
    %v439 = vpack.c.b16 %v342, %v341
    %v440 = vpack.c.b16 %v344, %v343
    %v441 = vpack.c.b16 %v346, %v345
    %v442 = vpack.c.b16 %v348, %v347
    %v443 = vpack.c.b16 %v350, %v349
    %v444 = vpack.c.b16 %v352, %v351
    %v445 = vpack.c.b16 %v354, %v353
    %v446 = vpack.c.b16 %v356, %v355
    %v447 = vpack.c.b16 %v358, %v357
    %v448 = vpack.c.b16 %v360, %v359
    %v449 = vpack.c.b16 %v362, %v361
    %v450 = vpack.c.b16 %v364, %v363
    %v451 = vpack.c.b16 %v366, %v365
    %v452 = vpack.c.b16 %v368, %v367
    %v453 = vpack.c.b16 %v370, %v369
    %v454 = vpack.c.b16 %v372, %v371
    %v455 = vpack.c.b16 %v374, %v373
    %v456 = vpack.c.b16 %v376, %v375
    %v457 = vpack.c.b16 %v378, %v377
    %v458 = vpack.c.b16 %v380, %v379
    %v459 = vpack.c.b16 %v382, %v381
    %v460 = vpack.c.b16 %v384, %v383
    %v461 = vpack.c.b16 %v386, %v385
    %v462 = vpack.c.b16 %v388, %v387
    %v463 = vpack.c.b16 %v390, %v389
    %v464 = vpack.c.b16 %v392, %v391
    %v465 = vpack.c.b16 %v394, %v393
    %v466 = vpack.c.b16 %v396, %v395
    %v467 = vpack.c.b16 %v398, %v397
    %v468 = vpack.c.b16 %v400, %v399
    %v469 = vpack.c.b16 %v402, %v401
    %v470 = vpack.c.b16 %v404, %v403
    %v471 = vpack.c.b16 %v406, %v405
    %v472 = vpack.c.b16 %v408, %v407
    %v473 = vpack.c.b16 %v410, %v409
    %v474 = vpack.c.b16 %v412, %v411
    %v475 = vpack.c.b16 %v414, %v413
    %v476 = vpack.c.b16 %v416, %v415
    %v477 = vpack.c.b16 %v418, %v417
    %v478 = vpack.c.b16 %v420, %v419
    %v479 = vpack.c.b16 %v422, %v421
    %v480 = vpack.c.b16 %v424, %v423
    %537 = vmatprep.subr.bf16.mxu0 0
    %538 = vmatpush1.bf16.msra.mxu0 %v425
    %539 = vmatprep.subr.bf16.mxu0 0
    %540 = vmatpush1.bf16.msra.mxu0 %v426
    %541 = vmatprep.subr.bf16.mxu0 0
    %542 = vmatpush1.bf16.msra.mxu0 %v427
    %543 = vmatprep.subr.bf16.mxu0 0
    %544 = vmatpush1.bf16.msra.mxu0 %v428
    %545 = vmatprep.subr.bf16.mxu0 0
    %546 = vmatpush1.bf16.msra.mxu0 %v429
    %547 = vmatprep.subr.bf16.mxu0 0
    %548 = vmatpush1.bf16.msra.mxu0 %v430
    %549 = vmatprep.subr.bf16.mxu0 0
    %550 = vmatpush1.bf16.msra.mxu0 %v431
    %551 = vmatprep.subr.bf16.mxu0 0
    %552 = vmatpush1.bf16.msra.mxu0 %v432
    %553 = vmatprep.subr.bf16.mxu0 0
    %554 = vmatpush1.bf16.msra.mxu0 %v433
    %555 = vmatprep.subr.bf16.mxu0 0
    %556 = vmatpush1.bf16.msra.mxu0 %v434
    %557 = vmatprep.subr.bf16.mxu0 0
    %558 = vmatpush1.bf16.msra.mxu0 %v435
    %559 = vmatprep.subr.bf16.mxu0 0
    %560 = vmatpush1.bf16.msra.mxu0 %v436
    %561 = vmatprep.subr.bf16.mxu0 0
    %562 = vmatpush1.bf16.msra.mxu0 %v437
    %563 = vmatprep.subr.bf16.mxu0 0
    %564 = vmatpush1.bf16.msra.mxu0 %v438
    %565 = vmatprep.subr.bf16.mxu0 0
    %566 = vmatpush1.bf16.msra.mxu0 %v439
    %567 = vmatprep.subr.bf16.mxu0 0
    %568 = vmatpush1.bf16.msra.mxu0 %v440
    %569 = vmatprep.mubr.bf16.mxu0 %v188
    %570 = vmatmul.mubr.bf16.gmra.mrb[0].mxu0 %v187
    %v571 = vpop.f32.mrb[0].mxu0
    %v572 = vadd.f32 %v174, %v571
    %v573 = vpop.f32.mrb[0].mxu0
    %v574 = vpop.f32.mrb[0].mxu0
    %v575 = vpop.f32.mrb[0].mxu0
    %576 = vdwg.mxu0
    %577 = vmatprep.subr.bf16.mxu0 0
    %578 = vmatpush1.bf16.msra.mxu0 %v441
    %579 = vmatprep.subr.bf16.mxu0 0
    %580 = vmatpush1.bf16.msra.mxu0 %v442
    %581 = vmatprep.subr.bf16.mxu0 0
    %582 = vmatpush1.bf16.msra.mxu0 %v443
    %583 = vmatprep.subr.bf16.mxu0 0
    %584 = vmatpush1.bf16.msra.mxu0 %v444
    %585 = vmatprep.subr.bf16.mxu0 0
    %586 = vmatpush1.bf16.msra.mxu0 %v445
    %587 = vmatprep.subr.bf16.mxu0 0
    %588 = vmatpush1.bf16.msra.mxu0 %v446
    %589 = vmatprep.subr.bf16.mxu0 0
    %590 = vmatpush1.bf16.msra.mxu0 %v447
    %591 = vmatprep.subr.bf16.mxu0 0
    %592 = vmatpush1.bf16.msra.mxu0 %v448
    %593 = vmatprep.subr.bf16.mxu0 0
    %594 = vmatpush1.bf16.msra.mxu0 %v449
    %595 = vmatprep.subr.bf16.mxu0 0
    %596 = vmatpush1.bf16.msra.mxu0 %v450
    %597 = vmatprep.subr.bf16.mxu0 0
    %598 = vmatpush1.bf16.msra.mxu0 %v451
    %599 = vmatprep.subr.bf16.mxu0 0
    %600 = vmatpush1.bf16.msra.mxu0 %v452
    %601 = vmatprep.subr.bf16.mxu0 0
    %602 = vmatpush1.bf16.msra.mxu0 %v453
    %603 = vmatprep.subr.bf16.mxu0 0
    %604 = vmatpush1.bf16.msra.mxu0 %v454
    %605 = vmatprep.subr.bf16.mxu0 0
    %606 = vmatpush1.bf16.msra.mxu0 %v455
    %607 = vmatprep.subr.bf16.mxu0 0
    %608 = vmatpush1.bf16.msra.mxu0 %v456
    %609 = vmatprep.mubr.bf16.mxu0 %v190
    %610 = vmatmul.mubr.bf16.gmra.mrb[0].mxu0 %v189
    %v611 = vpop.f32.mrb[0].mxu0
    %v612 = vadd.f32 %v572, %v611
    %v613 = vpop.f32.mrb[0].mxu0
    %v614 = vpop.f32.mrb[0].mxu0
    %v615 = vpop.f32.mrb[0].mxu0
    %616 = vdwg.mxu0
    %617 = vmatprep.subr.bf16.mxu0 0
    %618 = vmatpush1.bf16.msra.mxu0 %v457
    %619 = vmatprep.subr.bf16.mxu0 0
    %620 = vmatpush1.bf16.msra.mxu0 %v458
    %621 = vmatprep.subr.bf16.mxu0 0
    %622 = vmatpush1.bf16.msra.mxu0 %v459
    %623 = vmatprep.subr.bf16.mxu0 0
    %624 = vmatpush1.bf16.msra.mxu0 %v460
    %625 = vmatprep.subr.bf16.mxu0 0
    %626 = vmatpush1.bf16.msra.mxu0 %v461
    %627 = vmatprep.subr.bf16.mxu0 0
    %628 = vmatpush1.bf16.msra.mxu0 %v462
    %629 = vmatprep.subr.bf16.mxu0 0
    %630 = vmatpush1.bf16.msra.mxu0 %v463
    %631 = vmatprep.subr.bf16.mxu0 0
    %632 = vmatpush1.bf16.msra.mxu0 %v464
    %633 = vmatprep.subr.bf16.mxu0 0
    %634 = vmatpush1.bf16.msra.mxu0 %v465
    %635 = vmatprep.subr.bf16.mxu0 0
    %636 = vmatpush1.bf16.msra.mxu0 %v466
    %637 = vmatprep.subr.bf16.mxu0 0
    %638 = vmatpush1.bf16.msra.mxu0 %v467
    %639 = vmatprep.subr.bf16.mxu0 0
    %640 = vmatpush1.bf16.msra.mxu0 %v468
    %641 = vmatprep.subr.bf16.mxu0 0
    %642 = vmatpush1.bf16.msra.mxu0 %v469
    %643 = vmatprep.subr.bf16.mxu0 0
    %644 = vmatpush1.bf16.msra.mxu0 %v470
    %645 = vmatprep.subr.bf16.mxu0 0
    %646 = vmatpush1.bf16.msra.mxu0 %v471
    %647 = vmatprep.subr.bf16.mxu0 0
    %648 = vmatpush1.bf16.msra.mxu0 %v472
    %649 = vmatprep.mubr.bf16.mxu0 %v192
    %650 = vmatmul.mubr.bf16.gmra.mrb[0].mxu0 %v191
    %v651 = vpop.f32.mrb[0].mxu0
    %v652 = vadd.f32 %v612, %v651
    %v653 = vpop.f32.mrb[0].mxu0
    %v654 = vpop.f32.mrb[0].mxu0
    %v655 = vpop.f32.mrb[0].mxu0
    %656 = vdwg.mxu0
    %657 = vmatprep.subr.bf16.mxu0 0
    %658 = vmatpush1.bf16.msra.mxu0 %v473
    %659 = vmatprep.subr.bf16.mxu0 0
    %660 = vmatpush1.bf16.msra.mxu0 %v474
    %661 = vmatprep.subr.bf16.mxu0 0
    %662 = vmatpush1.bf16.msra.mxu0 %v475
    %663 = vmatprep.subr.bf16.mxu0 0
    %664 = vmatpush1.bf16.msra.mxu0 %v476
    %665 = vmatprep.subr.bf16.mxu0 0
    %666 = vmatpush1.bf16.msra.mxu0 %v477
    %667 = vmatprep.subr.bf16.mxu0 0
    %668 = vmatpush1.bf16.msra.mxu0 %v478
    %669 = vmatprep.subr.bf16.mxu0 0
    %670 = vmatpush1.bf16.msra.mxu0 %v479
    %671 = vmatprep.subr.bf16.mxu0 0
    %672 = vmatpush1.bf16.msra.mxu0 %v480
    %673 = vmatprep.subr.bf16.mxu0 0
    %674 = vmatpush1.bf16.msra.mxu0 0
    %675 = vmatprep.subr.bf16.mxu0 0
    %676 = vmatpush1.bf16.msra.mxu0 0
    %677 = vmatprep.subr.bf16.mxu0 0
    %678 = vmatpush1.bf16.msra.mxu0 0
    %679 = vmatprep.subr.bf16.mxu0 0
    %680 = vmatpush1.bf16.msra.mxu0 0
    %681 = vmatprep.subr.bf16.mxu0 0
    %682 = vmatpush1.bf16.msra.mxu0 0
    %683 = vmatprep.subr.bf16.mxu0 0
    %684 = vmatpush1.bf16.msra.mxu0 0
    %685 = vmatprep.subr.bf16.mxu0 0
    %686 = vmatpush1.bf16.msra.mxu0 0
    %687 = vmatprep.subr.bf16.mxu0 0
    %688 = vmatpush1.bf16.msra.mxu0 0
    %689 = vmatprep.mubr.bf16.mxu0 0
    %690 = vmatmul.mubr.bf16.gmra.mrb[0].mxu0 %v193
    %v691 = vpop.f32.mrb[0].mxu0
    %v692 = vadd.f32 %v652, %v691
    %v693 = vpop.f32.mrb[0].mxu0
    %v694 = vpop.f32.mrb[0].mxu0
    %v695 = vpop.f32.mrb[0].mxu0
    %696 = vdwg.mxu0
    %v697 = vpack.c.bf16 %v692, %v692
    %698 = vst [vmem:[#allocation8] sm:$0xf] %v697
    // Predicated region
    $region26: #{_lambda_.13} parent=1 // pred_check
      _
    $region27: #{_lambda_.13} parent=1 // pred_check_branch
      %700 = sbr.rel (0) target = $region29
    $region28: #{_lambda_.13} parent=1 // pred_region
      %s702 = ssub.s32 64, 64
      %703 = vsyncadd [#allocation4], %s702
      %s705 = sshll.u32 [#allocation8], 4
      %s706 = int_to_ptr.vmem [resolvable:$true] %s705
      %708 = dma.vmem_to_hbm [thread:$0]  %s706, 64, %s3, [#allocation4]
    $region29: #{_lambda_.13} parent=1 // pred_fallthru
      _
    // Predicated region
    $region30: #{_lambda_.13} parent=1 // pred_check
      _
    $region31: #{_lambda_.13} parent=1 // pred_check_branch
      %710 = sbr.rel (0) target = $region33
    $region32: #{_lambda_.13} parent=1 // pred_region
      %711 = dma.done [#allocation4], 64
    $region33: #{_lambda_.13} parent=1 // pred_fallthru
      _
    %712 = vsyncpa [#allocation3], 1
    %713 = vsyncpa [#allocation6], 1
    %714 = vsyncpa [#allocation4], 1

// kernel: _lambda_.17
$region0: #{_lambda_.17}
  #allocation0 [shape = 'u32[]', space=smem, size = 0x4, offset = 0x4, fixed_abs, tag = 'smem constant byte address 0x4 - core index']
  #allocation1 [shape = 'u32[144,128]{1,0:T(1,128)}', space=vmem, size = 0x12000, scoped, tag = 'internal scratch']
  %s0 = inlined_call_operand.hbm [shape: bf16[8,896], index: 0, kind: input, shape index: {}]
  %s1 = inlined_call_operand.hbm [shape: bf16[896,128], index: 1, kind: input, shape index: {}]
  %s2 = inlined_call_operand.hbm [shape: f32[1,128], index: 2, kind: input, shape index: {}]
  %s3 = inlined_call_operand.hbm [shape: f32[8,128], index: 3, kind: output, shape index: {}]
  %s4 = sld [smem:[#allocation0]]
  $region34: #{_lambda_.17} parent=0
    _
  %s6 = ssub.s32 1, %s4
  %s7 = scalar_select 0, %s6, %s4
  $region1: #{_lambda_.17} parent=0
    #allocation2 [shape = 'u8[14336]{0}', space=vmem, size = 0x3800, scoped, tag = 'input window, operand 0, single buffered']
    #allocation3 [shape = 's32[1]{0}', space=sflag, size = 0x4, scoped, tag = 'scoped memory for _lambda_.17']
    #allocation4 [shape = 's32[1]{0}', space=sflag, size = 0x4, scoped, tag = 'scoped memory for _lambda_.17']
    #allocation5 [shape = 'u8[229376]{0}', space=vmem, size = 0x38000, scoped, tag = 'input window, operand 1, single buffered']
    #allocation6 [shape = 's32[1]{0}', space=sflag, size = 0x4, scoped, tag = 'scoped memory for _lambda_.17']
    #allocation7 [shape = 'u8[512]{0}', space=vmem, size = 0x400, scoped, tag = 'input window, operand 2, single buffered']
    #allocation8 [shape = 'u8[4096]{0}', space=vmem, size = 0x1000, scoped, tag = 'output window, operand 0, single buffered']
    %8 = vsyncpa [#allocation3], 0
    %9 = vsyncpa [#allocation6], 0
    %10 = vsyncpa [#allocation4], 0
    // Predicated region
    $region2: #{_lambda_.17} parent=1 // pred_check
      _
    $region3: #{_lambda_.17} parent=1 // pred_check_branch
      %12 = sbr.rel (0) target = $region5
    $region4: #{_lambda_.17} parent=1 // pred_region
      %s14 = ssub.s32 448, 448
      %15 = vsyncadd [#allocation3], %s14
      %s17 = sshll.u32 [#allocation2], 4
      %s18 = int_to_ptr.vmem [resolvable:$true] %s17
      %20 = dma.hbm_to_vmem [thread:$0]  %s0, 448, %s18, [#allocation3]
    $region5: #{_lambda_.17} parent=1 // pred_fallthru
      _
    // Predicated region
    $region6: #{_lambda_.17} parent=1 // pred_check
      _
    $region7: #{_lambda_.17} parent=1 // pred_check_branch
      %22 = sbr.rel (0) target = $region9
    $region8: #{_lambda_.17} parent=1 // pred_region
      %s24 = ssub.s32 7168, 7168
      %25 = vsyncadd [#allocation6], %s24
      %s26 = sshll.u32 [#allocation5], 4
      %s27 = int_to_ptr.vmem [resolvable:$true] %s26
      %32 = dma.hbm_to_vmem [thread:$0]  %s1, 7168, %s27, [#allocation6], 64, 64, 4
    $region9: #{_lambda_.17} parent=1 // pred_fallthru
      _
    // Predicated region
    $region10: #{_lambda_.17} parent=1 // pred_check
      _
    $region11: #{_lambda_.17} parent=1 // pred_check_branch
      %34 = sbr.rel (0) target = $region13
    $region12: #{_lambda_.17} parent=1 // pred_region
      %s36 = ssub.s32 16, 16
      %37 = vsyncadd [#allocation6], %s36
      %s39 = sshll.u32 [#allocation7], 4
      %s40 = int_to_ptr.vmem [resolvable:$true] %s39
      %42 = dma.hbm_to_vmem [thread:$0]  %s2, 16, %s40, [#allocation6]
    $region13: #{_lambda_.17} parent=1 // pred_fallthru
      _
    // Predicated region
    $region14: #{_lambda_.17} parent=1 // pred_check
      _
    $region15: #{_lambda_.17} parent=1 // pred_check_branch
      %44 = sbr.rel (0) target = $region17
    $region16: #{_lambda_.17} parent=1 // pred_region
      %45 = dma.done [#allocation3], 448
    $region17: #{_lambda_.17} parent=1 // pred_fallthru
      _
    // Predicated region
    $region18: #{_lambda_.17} parent=1 // pred_check
      _
    $region19: #{_lambda_.17} parent=1 // pred_check_branch
      %47 = sbr.rel (0) target = $region21
    $region20: #{_lambda_.17} parent=1 // pred_region
      %48 = dma.done [#allocation6], 7168
    $region21: #{_lambda_.17} parent=1 // pred_fallthru
      _
    // Predicated region
    $region22: #{_lambda_.17} parent=1 // pred_check
      _
    $region23: #{_lambda_.17} parent=1 // pred_check_branch
      %50 = sbr.rel (0) target = $region25
    $region24: #{_lambda_.17} parent=1 // pred_region
      %51 = dma.done [#allocation6], 16
    $region25: #{_lambda_.17} parent=1 // pred_fallthru
      _
    %v53 = vld [vmem:[#allocation2] sm:$0xff]
    %v54 = vld [vmem:[#allocation2 + $0x8] sm:$0xff]
    %v55 = vld [vmem:[#allocation2 + $0x10] sm:$0xff]
    %v56 = vld [vmem:[#allocation2 + $0x18] sm:$0xf]
    %v57 = vld [vmem:[#allocation5] sm:$0xf]
    %v58 = vld [vmem:[#allocation5 + $0x4] sm:$0xf]
    %v59 = vld [vmem:[#allocation5 + $0x8] sm:$0xf]
    %v60 = vld [vmem:[#allocation5 + $0xc] sm:$0xf]
    %v61 = vld [vmem:[#allocation5 + $0x10] sm:$0xf]
    %v62 = vld [vmem:[#allocation5 + $0x14] sm:$0xf]
    %v63 = vld [vmem:[#allocation5 + $0x18] sm:$0xf]
    %v64 = vld [vmem:[#allocation5 + $0x1c] sm:$0xf]
    %v65 = vld [vmem:[#allocation5 + $0x20] sm:$0xf]
    %v66 = vld [vmem:[#allocation5 + $0x24] sm:$0xf]
    %v67 = vld [vmem:[#allocation5 + $0x28] sm:$0xf]
    %v68 = vld [vmem:[#allocation5 + $0x2c] sm:$0xf]
    %v69 = vld [vmem:[#allocation5 + $0x30] sm:$0xf]
    %v70 = vld [vmem:[#allocation5 + $0x34] sm:$0xf]
    %v71 = vld [vmem:[#allocation5 + $0x38] sm:$0xf]
    %v72 = vld [vmem:[#allocation5 + $0x3c] sm:$0xf]
    %v73 = vld [vmem:[#allocation5 + $0x40] sm:$0xf]
    %v74 = vld [vmem:[#allocation5 + $0x44] sm:$0xf]
    %v75 = vld [vmem:[#allocation5 + $0x48] sm:$0xf]
    %v76 = vld [vmem:[#allocation5 + $0x4c] sm:$0xf]
    %v77 = vld [vmem:[#allocation5 + $0x50] sm:$0xf]
    %v78 = vld [vmem:[#allocation5 + $0x54] sm:$0xf]
    %v79 = vld [vmem:[#allocation5 + $0x58] sm:$0xf]
    %v80 = vld [vmem:[#allocation5 + $0x5c] sm:$0xf]
    %v81 = vld [vmem:[#allocation5 + $0x60] sm:$0xf]
    %v82 = vld [vmem:[#allocation5 + $0x64] sm:$0xf]
    %v83 = vld [vmem:[#allocation5 + $0x68] sm:$0xf]
    %v84 = vld [vmem:[#allocation5 + $0x6c] sm:$0xf]
    %v85 = vld [vmem:[#allocation5 + $0x70] sm:$0xf]
    %v86 = vld [vmem:[#allocation5 + $0x74] sm:$0xf]
    %v87 = vld [vmem:[#allocation5 + $0x78] sm:$0xf]
    %v88 = vld [vmem:[#allocation5 + $0x7c] sm:$0xf]
    %v89 = vld [vmem:[#allocation5 + $0x80] sm:$0xf]
    %v90 = vld [vmem:[#allocation5 + $0x84] sm:$0xf]
    %v91 = vld [vmem:[#allocation5 + $0x88] sm:$0xf]
    %v92 = vld [vmem:[#allocation5 + $0x8c] sm:$0xf]
    %v93 = vld [vmem:[#allocation5 + $0x90] sm:$0xf]
    %v94 = vld [vmem:[#allocation5 + $0x94] sm:$0xf]
    %v95 = vld [vmem:[#allocation5 + $0x98] sm:$0xf]
    %v96 = vld [vmem:[#allocation5 + $0x9c] sm:$0xf]
    %v97 = vld [vmem:[#allocation5 + $0xa0] sm:$0xf]
    %v98 = vld [vmem:[#allocation5 + $0xa4] sm:$0xf]
    %v99 = vld [vmem:[#allocation5 + $0xa8] sm:$0xf]
    %v100 = vld [vmem:[#allocation5 + $0xac] sm:$0xf]
    %v101 = vld [vmem:[#allocation5 + $0xb0] sm:$0xf]
    %v102 = vld [vmem:[#allocation5 + $0xb4] sm:$0xf]
    %v103 = vld [vmem:[#allocation5 + $0xb8] sm:$0xf]
    %v104 = vld [vmem:[#allocation5 + $0xbc] sm:$0xf]
    %v105 = vld [vmem:[#allocation5 + $0xc0] sm:$0xf]
    %v106 = vld [vmem:[#allocation5 + $0xc4] sm:$0xf]
    %v107 = vld [vmem:[#allocation5 + $0xc8] sm:$0xf]
    %v108 = vld [vmem:[#allocation5 + $0xcc] sm:$0xf]
    %v109 = vld [vmem:[#allocation5 + $0xd0] sm:$0xf]
    %v110 = vld [vmem:[#allocation5 + $0xd4] sm:$0xf]
    %v111 = vld [vmem:[#allocation5 + $0xd8] sm:$0xf]
    %v112 = vld [vmem:[#allocation5 + $0xdc] sm:$0xf]
    %v113 = vld [vmem:[#allocation5 + $0xe0] sm:$0xf]
    %v114 = vld [vmem:[#allocation5 + $0xe4] sm:$0xf]
    %v115 = vld [vmem:[#allocation5 + $0xe8] sm:$0xf]
    %v116 = vld [vmem:[#allocation5 + $0xec] sm:$0xf]
    %v117 = vld [vmem:[#allocation5 + $0xf0] sm:$0xf]
    %v118 = vld [vmem:[#allocation5 + $0xf4] sm:$0xf]
    %v119 = vld [vmem:[#allocation5 + $0xf8] sm:$0xf]
    %v120 = vld [vmem:[#allocation5 + $0xfc] sm:$0xf]
    %v121 = vld [vmem:[#allocation5 + $0x100] sm:$0xf]
    %v122 = vld [vmem:[#allocation5 + $0x104] sm:$0xf]
    %v123 = vld [vmem:[#allocation5 + $0x108] sm:$0xf]
    %v124 = vld [vmem:[#allocation5 + $0x10c] sm:$0xf]
    %v125 = vld [vmem:[#allocation5 + $0x110] sm:$0xf]
    %v126 = vld [vmem:[#allocation5 + $0x114] sm:$0xf]
    %v127 = vld [vmem:[#allocation5 + $0x118] sm:$0xf]
    %v128 = vld [vmem:[#allocation5 + $0x11c] sm:$0xf]
    %v129 = vld [vmem:[#allocation5 + $0x120] sm:$0xf]
    %v130 = vld [vmem:[#allocation5 + $0x124] sm:$0xf]
    %v131 = vld [vmem:[#allocation5 + $0x128] sm:$0xf]
    %v132 = vld [vmem:[#allocation5 + $0x12c] sm:$0xf]
    %v133 = vld [vmem:[#allocation5 + $0x130] sm:$0xf]
    %v134 = vld [vmem:[#allocation5 + $0x134] sm:$0xf]
    %v135 = vld [vmem:[#allocation5 + $0x138] sm:$0xf]
    %v136 = vld [vmem:[#allocation5 + $0x13c] sm:$0xf]
    %v137 = vld [vmem:[#allocation5 + $0x140] sm:$0xf]
    %v138 = vld [vmem:[#allocation5 + $0x144] sm:$0xf]
    %v139 = vld [vmem:[#allocation5 + $0x148] sm:$0xf]
    %v140 = vld [vmem:[#allocation5 + $0x14c] sm:$0xf]
    %v141 = vld [vmem:[#allocation5 + $0x150] sm:$0xf]
    %v142 = vld [vmem:[#allocation5 + $0x154] sm:$0xf]
    %v143 = vld [vmem:[#allocation5 + $0x158] sm:$0xf]
    %v144 = vld [vmem:[#allocation5 + $0x15c] sm:$0xf]
    %v145 = vld [vmem:[#allocation5 + $0x160] sm:$0xf]
    %v146 = vld [vmem:[#allocation5 + $0x164] sm:$0xf]
    %v147 = vld [vmem:[#allocation5 + $0x168] sm:$0xf]
    %v148 = vld [vmem:[#allocation5 + $0x16c] sm:$0xf]
    %v149 = vld [vmem:[#allocation5 + $0x170] sm:$0xf]
    %v150 = vld [vmem:[#allocation5 + $0x174] sm:$0xf]
    %v151 = vld [vmem:[#allocation5 + $0x178] sm:$0xf]
    %v152 = vld [vmem:[#allocation5 + $0x17c] sm:$0xf]
    %v153 = vld [vmem:[#allocation5 + $0x180] sm:$0xf]
    %v154 = vld [vmem:[#allocation5 + $0x184] sm:$0xf]
    %v155 = vld [vmem:[#allocation5 + $0x188] sm:$0xf]
    %v156 = vld [vmem:[#allocation5 + $0x18c] sm:$0xf]
    %v157 = vld [vmem:[#allocation5 + $0x190] sm:$0xf]
    %v158 = vld [vmem:[#allocation5 + $0x194] sm:$0xf]
    %v159 = vld [vmem:[#allocation5 + $0x198] sm:$0xf]
    %v160 = vld [vmem:[#allocation5 + $0x19c] sm:$0xf]
    %v161 = vld [vmem:[#allocation5 + $0x1a0] sm:$0xf]
    %v162 = vld [vmem:[#allocation5 + $0x1a4] sm:$0xf]
    %v163 = vld [vmem:[#allocation5 + $0x1a8] sm:$0xf]
    %v164 = vld [vmem:[#allocation5 + $0x1ac] sm:$0xf]
    %v165 = vld [vmem:[#allocation5 + $0x1b0] sm:$0xf]
    %v166 = vld [vmem:[#allocation5 + $0x1b4] sm:$0xf]
    %v167 = vld [vmem:[#allocation5 + $0x1b8] sm:$0xf]
    %v168 = vld [vmem:[#allocation5 + $0x1bc] sm:$0xf]
    %v169 = vld [vmem:[#allocation7] sm:$0x1]
    %v171 = vlaneseq
    %v172 = vshrl.u32 %v171, 7
    %v173 = vsub.s32 0, %v172
    %v174 = vrot.slane %v169, %v173
    %v180 = vunpack.c.l.b16 %v53
    %v181 = vunpack.c.h.b16 %v53
    %v182 = vunpack.c.l.b16 %v54
    %v183 = vunpack.c.h.b16 %v54
    %v184 = vunpack.c.l.b16 %v55
    %v185 = vunpack.c.h.b16 %v55
    %v186 = vunpack.c.l.b16 %v56
    %v187 = vpack.c.b16 %v180, %v180
    %v188 = vpack.c.b16 %v181, %v181
    %v189 = vpack.c.b16 %v182, %v182
    %v190 = vpack.c.b16 %v183, %v183
    %v191 = vpack.c.b16 %v184, %v184
    %v192 = vpack.c.b16 %v185, %v185
    %v193 = vpack.c.b16 %v186, %v186
    %v313 = vunpack.c.l.b16 %v57
    %v314 = vunpack.c.l.b16 %v58
    %v315 = vunpack.c.l.b16 %v59
    %v316 = vunpack.c.l.b16 %v60
    %v317 = vunpack.c.l.b16 %v61
    %v318 = vunpack.c.l.b16 %v62
    %v319 = vunpack.c.l.b16 %v63
    %v320 = vunpack.c.l.b16 %v64
    %v321 = vunpack.c.l.b16 %v65
    %v322 = vunpack.c.l.b16 %v66
    %v323 = vunpack.c.l.b16 %v67
    %v324 = vunpack.c.l.b16 %v68
    %v325 = vunpack.c.l.b16 %v69
    %v326 = vunpack.c.l.b16 %v70
    %v327 = vunpack.c.l.b16 %v71
    %v328 = vunpack.c.l.b16 %v72
    %v329 = vunpack.c.l.b16 %v73
    %v330 = vunpack.c.l.b16 %v74
    %v331 = vunpack.c.l.b16 %v75
    %v332 = vunpack.c.l.b16 %v76
    %v333 = vunpack.c.l.b16 %v77
    %v334 = vunpack.c.l.b16 %v78
    %v335 = vunpack.c.l.b16 %v79
    %v336 = vunpack.c.l.b16 %v80
    %v337 = vunpack.c.l.b16 %v81
    %v338 = vunpack.c.l.b16 %v82
    %v339 = vunpack.c.l.b16 %v83
    %v340 = vunpack.c.l.b16 %v84
    %v341 = vunpack.c.l.b16 %v85
    %v342 = vunpack.c.l.b16 %v86
    %v343 = vunpack.c.l.b16 %v87
    %v344 = vunpack.c.l.b16 %v88
    %v345 = vunpack.c.l.b16 %v89
    %v346 = vunpack.c.l.b16 %v90
    %v347 = vunpack.c.l.b16 %v91
    %v348 = vunpack.c.l.b16 %v92
    %v349 = vunpack.c.l.b16 %v93
    %v350 = vunpack.c.l.b16 %v94
    %v351 = vunpack.c.l.b16 %v95
    %v352 = vunpack.c.l.b16 %v96
    %v353 = vunpack.c.l.b16 %v97
    %v354 = vunpack.c.l.b16 %v98
    %v355 = vunpack.c.l.b16 %v99
    %v356 = vunpack.c.l.b16 %v100
    %v357 = vunpack.c.l.b16 %v101
    %v358 = vunpack.c.l.b16 %v102
    %v359 = vunpack.c.l.b16 %v103
    %v360 = vunpack.c.l.b16 %v104
    %v361 = vunpack.c.l.b16 %v105
    %v362 = vunpack.c.l.b16 %v106
    %v363 = vunpack.c.l.b16 %v107
    %v364 = vunpack.c.l.b16 %v108
    %v365 = vunpack.c.l.b16 %v109
    %v366 = vunpack.c.l.b16 %v110
    %v367 = vunpack.c.l.b16 %v111
    %v368 = vunpack.c.l.b16 %v112
    %v369 = vunpack.c.l.b16 %v113
    %v370 = vunpack.c.l.b16 %v114
    %v371 = vunpack.c.l.b16 %v115
    %v372 = vunpack.c.l.b16 %v116
    %v373 = vunpack.c.l.b16 %v117
    %v374 = vunpack.c.l.b16 %v118
    %v375 = vunpack.c.l.b16 %v119
    %v376 = vunpack.c.l.b16 %v120
    %v377 = vunpack.c.l.b16 %v121
    %v378 = vunpack.c.l.b16 %v122
    %v379 = vunpack.c.l.b16 %v123
    %v380 = vunpack.c.l.b16 %v124
    %v381 = vunpack.c.l.b16 %v125
    %v382 = vunpack.c.l.b16 %v126
    %v383 = vunpack.c.l.b16 %v127
    %v384 = vunpack.c.l.b16 %v128
    %v385 = vunpack.c.l.b16 %v129
    %v386 = vunpack.c.l.b16 %v130
    %v387 = vunpack.c.l.b16 %v131
    %v388 = vunpack.c.l.b16 %v132
    %v389 = vunpack.c.l.b16 %v133
    %v390 = vunpack.c.l.b16 %v134
    %v391 = vunpack.c.l.b16 %v135
    %v392 = vunpack.c.l.b16 %v136
    %v393 = vunpack.c.l.b16 %v137
    %v394 = vunpack.c.l.b16 %v138
    %v395 = vunpack.c.l.b16 %v139
    %v396 = vunpack.c.l.b16 %v140
    %v397 = vunpack.c.l.b16 %v141
    %v398 = vunpack.c.l.b16 %v142
    %v399 = vunpack.c.l.b16 %v143
    %v400 = vunpack.c.l.b16 %v144
    %v401 = vunpack.c.l.b16 %v145
    %v402 = vunpack.c.l.b16 %v146
    %v403 = vunpack.c.l.b16 %v147
    %v404 = vunpack.c.l.b16 %v148
    %v405 = vunpack.c.l.b16 %v149
    %v406 = vunpack.c.l.b16 %v150
    %v407 = vunpack.c.l.b16 %v151
    %v408 = vunpack.c.l.b16 %v152
    %v409 = vunpack.c.l.b16 %v153
    %v410 = vunpack.c.l.b16 %v154
    %v411 = vunpack.c.l.b16 %v155
    %v412 = vunpack.c.l.b16 %v156
    %v413 = vunpack.c.l.b16 %v157
    %v414 = vunpack.c.l.b16 %v158
    %v415 = vunpack.c.l.b16 %v159
    %v416 = vunpack.c.l.b16 %v160
    %v417 = vunpack.c.l.b16 %v161
    %v418 = vunpack.c.l.b16 %v162
    %v419 = vunpack.c.l.b16 %v163
    %v420 = vunpack.c.l.b16 %v164
    %v421 = vunpack.c.l.b16 %v165
    %v422 = vunpack.c.l.b16 %v166
    %v423 = vunpack.c.l.b16 %v167
    %v424 = vunpack.c.l.b16 %v168
    %v425 = vpack.c.b16 %v314, %v313
    %v426 = vpack.c.b16 %v316, %v315
    %v427 = vpack.c.b16 %v318, %v317
    %v428 = vpack.c.b16 %v320, %v319
    %v429 = vpack.c.b16 %v322, %v321
    %v430 = vpack.c.b16 %v324, %v323
    %v431 = vpack.c.b16 %v326, %v325
    %v432 = vpack.c.b16 %v328, %v327
    %v433 = vpack.c.b16 %v330, %v329
    %v434 = vpack.c.b16 %v332, %v331
    %v435 = vpack.c.b16 %v334, %v333
    %v436 = vpack.c.b16 %v336, %v335
    %v437 = vpack.c.b16 %v338, %v337
    %v438 = vpack.c.b16 %v340, %v339
    %v439 = vpack.c.b16 %v342, %v341
    %v440 = vpack.c.b16 %v344, %v343
    %v441 = vpack.c.b16 %v346, %v345
    %v442 = vpack.c.b16 %v348, %v347
    %v443 = vpack.c.b16 %v350, %v349
    %v444 = vpack.c.b16 %v352, %v351
    %v445 = vpack.c.b16 %v354, %v353
    %v446 = vpack.c.b16 %v356, %v355
    %v447 = vpack.c.b16 %v358, %v357
    %v448 = vpack.c.b16 %v360, %v359
    %v449 = vpack.c.b16 %v362, %v361
    %v450 = vpack.c.b16 %v364, %v363
    %v451 = vpack.c.b16 %v366, %v365
    %v452 = vpack.c.b16 %v368, %v367
    %v453 = vpack.c.b16 %v370, %v369
    %v454 = vpack.c.b16 %v372, %v371
    %v455 = vpack.c.b16 %v374, %v373
    %v456 = vpack.c.b16 %v376, %v375
    %v457 = vpack.c.b16 %v378, %v377
    %v458 = vpack.c.b16 %v380, %v379
    %v459 = vpack.c.b16 %v382, %v381
    %v460 = vpack.c.b16 %v384, %v383
    %v461 = vpack.c.b16 %v386, %v385
    %v462 = vpack.c.b16 %v388, %v387
    %v463 = vpack.c.b16 %v390, %v389
    %v464 = vpack.c.b16 %v392, %v391
    %v465 = vpack.c.b16 %v394, %v393
    %v466 = vpack.c.b16 %v396, %v395
    %v467 = vpack.c.b16 %v398, %v397
    %v468 = vpack.c.b16 %v400, %v399
    %v469 = vpack.c.b16 %v402, %v401
    %v470 = vpack.c.b16 %v404, %v403
    %v471 = vpack.c.b16 %v406, %v405
    %v472 = vpack.c.b16 %v408, %v407
    %v473 = vpack.c.b16 %v410, %v409
    %v474 = vpack.c.b16 %v412, %v411
    %v475 = vpack.c.b16 %v414, %v413
    %v476 = vpack.c.b16 %v416, %v415
    %v477 = vpack.c.b16 %v418, %v417
    %v478 = vpack.c.b16 %v420, %v419
    %v479 = vpack.c.b16 %v422, %v421
    %v480 = vpack.c.b16 %v424, %v423
    %537 = vmatprep.subr.bf16.mxu0 0
    %538 = vmatpush1.bf16.msra.mxu0 %v425
    %539 = vmatprep.subr.bf16.mxu0 0
    %540 = vmatpush1.bf16.msra.mxu0 %v426
    %541 = vmatprep.subr.bf16.mxu0 0
    %542 = vmatpush1.bf16.msra.mxu0 %v427
    %543 = vmatprep.subr.bf16.mxu0 0
    %544 = vmatpush1.bf16.msra.mxu0 %v428
    %545 = vmatprep.subr.bf16.mxu0 0
    %546 = vmatpush1.bf16.msra.mxu0 %v429
    %547 = vmatprep.subr.bf16.mxu0 0
    %548 = vmatpush1.bf16.msra.mxu0 %v430
    %549 = vmatprep.subr.bf16.mxu0 0
    %550 = vmatpush1.bf16.msra.mxu0 %v431
    %551 = vmatprep.subr.bf16.mxu0 0
    %552 = vmatpush1.bf16.msra.mxu0 %v432
    %553 = vmatprep.subr.bf16.mxu0 0
    %554 = vmatpush1.bf16.msra.mxu0 %v433
    %555 = vmatprep.subr.bf16.mxu0 0
    %556 = vmatpush1.bf16.msra.mxu0 %v434
    %557 = vmatprep.subr.bf16.mxu0 0
    %558 = vmatpush1.bf16.msra.mxu0 %v435
    %559 = vmatprep.subr.bf16.mxu0 0
    %560 = vmatpush1.bf16.msra.mxu0 %v436
    %561 = vmatprep.subr.bf16.mxu0 0
    %562 = vmatpush1.bf16.msra.mxu0 %v437
    %563 = vmatprep.subr.bf16.mxu0 0
    %564 = vmatpush1.bf16.msra.mxu0 %v438
    %565 = vmatprep.subr.bf16.mxu0 0
    %566 = vmatpush1.bf16.msra.mxu0 %v439
    %567 = vmatprep.subr.bf16.mxu0 0
    %568 = vmatpush1.bf16.msra.mxu0 %v440
    %569 = vmatprep.mubr.bf16.mxu0 %v188
    %570 = vmatmul.mubr.bf16.gmra.mrb[0].mxu0 %v187
    %v571 = vpop.f32.mrb[0].mxu0
    %v572 = vadd.f32 %v174, %v571
    %v573 = vpop.f32.mrb[0].mxu0
    %v574 = vpop.f32.mrb[0].mxu0
    %v575 = vpop.f32.mrb[0].mxu0
    %576 = vdwg.mxu0
    %577 = vmatprep.subr.bf16.mxu0 0
    %578 = vmatpush1.bf16.msra.mxu0 %v441
    %579 = vmatprep.subr.bf16.mxu0 0
    %580 = vmatpush1.bf16.msra.mxu0 %v442
    %581 = vmatprep.subr.bf16.mxu0 0
    %582 = vmatpush1.bf16.msra.mxu0 %v443
    %583 = vmatprep.subr.bf16.mxu0 0
    %584 = vmatpush1.bf16.msra.mxu0 %v444
    %585 = vmatprep.subr.bf16.mxu0 0
    %586 = vmatpush1.bf16.msra.mxu0 %v445
    %587 = vmatprep.subr.bf16.mxu0 0
    %588 = vmatpush1.bf16.msra.mxu0 %v446
    %589 = vmatprep.subr.bf16.mxu0 0
    %590 = vmatpush1.bf16.msra.mxu0 %v447
    %591 = vmatprep.subr.bf16.mxu0 0
    %592 = vmatpush1.bf16.msra.mxu0 %v448
    %593 = vmatprep.subr.bf16.mxu0 0
    %594 = vmatpush1.bf16.msra.mxu0 %v449
    %595 = vmatprep.subr.bf16.mxu0 0
    %596 = vmatpush1.bf16.msra.mxu0 %v450
    %597 = vmatprep.subr.bf16.mxu0 0
    %598 = vmatpush1.bf16.msra.mxu0 %v451
    %599 = vmatprep.subr.bf16.mxu0 0
    %600 = vmatpush1.bf16.msra.mxu0 %v452
    %601 = vmatprep.subr.bf16.mxu0 0
    %602 = vmatpush1.bf16.msra.mxu0 %v453
    %603 = vmatprep.subr.bf16.mxu0 0
    %604 = vmatpush1.bf16.msra.mxu0 %v454
    %605 = vmatprep.subr.bf16.mxu0 0
    %606 = vmatpush1.bf16.msra.mxu0 %v455
    %607 = vmatprep.subr.bf16.mxu0 0
    %608 = vmatpush1.bf16.msra.mxu0 %v456
    %609 = vmatprep.mubr.bf16.mxu0 %v190
    %610 = vmatmul.mubr.bf16.gmra.mrb[0].mxu0 %v189
    %v611 = vpop.f32.mrb[0].mxu0
    %v612 = vadd.f32 %v572, %v611
    %v613 = vpop.f32.mrb[0].mxu0
    %v614 = vpop.f32.mrb[0].mxu0
    %v615 = vpop.f32.mrb[0].mxu0
    %616 = vdwg.mxu0
    %617 = vmatprep.subr.bf16.mxu0 0
    %618 = vmatpush1.bf16.msra.mxu0 %v457
    %619 = vmatprep.subr.bf16.mxu0 0
    %620 = vmatpush1.bf16.msra.mxu0 %v458
    %621 = vmatprep.subr.bf16.mxu0 0
    %622 = vmatpush1.bf16.msra.mxu0 %v459
    %623 = vmatprep.subr.bf16.mxu0 0
    %624 = vmatpush1.bf16.msra.mxu0 %v460
    %625 = vmatprep.subr.bf16.mxu0 0
    %626 = vmatpush1.bf16.msra.mxu0 %v461
    %627 = vmatprep.subr.bf16.mxu0 0
    %628 = vmatpush1.bf16.msra.mxu0 %v462
    %629 = vmatprep.subr.bf16.mxu0 0
    %630 = vmatpush1.bf16.msra.mxu0 %v463
    %631 = vmatprep.subr.bf16.mxu0 0
    %632 = vmatpush1.bf16.msra.mxu0 %v464
    %633 = vmatprep.subr.bf16.mxu0 0
    %634 = vmatpush1.bf16.msra.mxu0 %v465
    %635 = vmatprep.subr.bf16.mxu0 0
    %636 = vmatpush1.bf16.msra.mxu0 %v466
    %637 = vmatprep.subr.bf16.mxu0 0
    %638 = vmatpush1.bf16.msra.mxu0 %v467
    %639 = vmatprep.subr.bf16.mxu0 0
    %640 = vmatpush1.bf16.msra.mxu0 %v468
    %641 = vmatprep.subr.bf16.mxu0 0
    %642 = vmatpush1.bf16.msra.mxu0 %v469
    %643 = vmatprep.subr.bf16.mxu0 0
    %644 = vmatpush1.bf16.msra.mxu0 %v470
    %645 = vmatprep.subr.bf16.mxu0 0
    %646 = vmatpush1.bf16.msra.mxu0 %v471
    %647 = vmatprep.subr.bf16.mxu0 0
    %648 = vmatpush1.bf16.msra.mxu0 %v472
    %649 = vmatprep.mubr.bf16.mxu0 %v192
    %650 = vmatmul.mubr.bf16.gmra.mrb[0].mxu0 %v191
    %v651 = vpop.f32.mrb[0].mxu0
    %v652 = vadd.f32 %v612, %v651
    %v653 = vpop.f32.mrb[0].mxu0
    %v654 = vpop.f32.mrb[0].mxu0
    %v655 = vpop.f32.mrb[0].mxu0
    %656 = vdwg.mxu0
    %657 = vmatprep.subr.bf16.mxu0 0
    %658 = vmatpush1.bf16.msra.mxu0 %v473
    %659 = vmatprep.subr.bf16.mxu0 0
    %660 = vmatpush1.bf16.msra.mxu0 %v474
    %661 = vmatprep.subr.bf16.mxu0 0
    %662 = vmatpush1.bf16.msra.mxu0 %v475
    %663 = vmatprep.subr.bf16.mxu0 0
    %664 = vmatpush1.bf16.msra.mxu0 %v476
    %665 = vmatprep.subr.bf16.mxu0 0
    %666 = vmatpush1.bf16.msra.mxu0 %v477
    %667 = vmatprep.subr.bf16.mxu0 0
    %668 = vmatpush1.bf16.msra.mxu0 %v478
    %669 = vmatprep.subr.bf16.mxu0 0
    %670 = vmatpush1.bf16.msra.mxu0 %v479
    %671 = vmatprep.subr.bf16.mxu0 0
    %672 = vmatpush1.bf16.msra.mxu0 %v480
    %673 = vmatprep.subr.bf16.mxu0 0
    %674 = vmatpush1.bf16.msra.mxu0 0
    %675 = vmatprep.subr.bf16.mxu0 0
    %676 = vmatpush1.bf16.msra.mxu0 0
    %677 = vmatprep.subr.bf16.mxu0 0
    %678 = vmatpush1.bf16.msra.mxu0 0
    %679 = vmatprep.subr.bf16.mxu0 0
    %680 = vmatpush1.bf16.msra.mxu0 0
    %681 = vmatprep.subr.bf16.mxu0 0
    %682 = vmatpush1.bf16.msra.mxu0 0
    %683 = vmatprep.subr.bf16.mxu0 0
    %684 = vmatpush1.bf16.msra.mxu0 0
    %685 = vmatprep.subr.bf16.mxu0 0
    %686 = vmatpush1.bf16.msra.mxu0 0
    %687 = vmatprep.subr.bf16.mxu0 0
    %688 = vmatpush1.bf16.msra.mxu0 0
    %689 = vmatprep.mubr.bf16.mxu0 0
    %690 = vmatmul.mubr.bf16.gmra.mrb[0].mxu0 %v193
    %v691 = vpop.f32.mrb[0].mxu0
    %v692 = vadd.f32 %v652, %v691
    %v693 = vpop.f32.mrb[0].mxu0
    %v694 = vpop.f32.mrb[0].mxu0
    %v695 = vpop.f32.mrb[0].mxu0
    %696 = vdwg.mxu0
    %697 = vst [vmem:[#allocation8] sm:$0xff] %v692
    // Predicated region
    $region26: #{_lambda_.17} parent=1 // pred_check
      _
    $region27: #{_lambda_.17} parent=1 // pred_check_branch
      %699 = sbr.rel (0) target = $region29
    $region28: #{_lambda_.17} parent=1 // pred_region
      %s701 = ssub.s32 128, 128
      %702 = vsyncadd [#allocation4], %s701
      %s704 = sshll.u32 [#allocation8], 4
      %s705 = int_to_ptr.vmem [resolvable:$true] %s704
      %707 = dma.vmem_to_hbm [thread:$0]  %s705, 128, %s3, [#allocation4]
    $region29: #{_lambda_.17} parent=1 // pred_fallthru
      _
    // Predicated region
    $region30: #{_lambda_.17} parent=1 // pred_check
      _
    $region31: #{_lambda_.17} parent=1 // pred_check_branch
      %709 = sbr.rel (0) target = $region33
    $region32: #{_lambda_.17} parent=1 // pred_region
      %710 = dma.done [#allocation4], 128
    $region33: #{_lambda_.17} parent=1 // pred_fallthru
      _
    %711 = vsyncpa [#allocation3], 1
    %712 = vsyncpa [#allocation6], 1
    %713 = vsyncpa [#allocation4], 1

</llo_original>
